<compile_context>
chip_gen: v5e
topology: v5e:2x2
jax: 0.10.0
libtpu: 0.0.40
codegen_flags: <defaults>
</compile_context>

<pallas_src>
import functools

import jax
import jax.numpy as jnp
from jax import lax
from jax.experimental import pallas as pl
from jax.experimental.pallas import tpu as pltpu


def _round_up(v, m):
    return ((v + m - 1) // m) * m


def _lstm_fc_kernel(num_layers, Hp, Tt, t_total, needs_mask, unroll, *refs):
    """One (batch_block, time_block) grid step.

    refs = (x_ref,
            Wx_0, Wh_0, b_0, ..., Wx_{L-1}, Wh_{L-1}, b_{L-1},   # gate order [i, f, o, g]
            W_fc, b_fc,
            out_ref,
            h_scr, c_scr,          # (L, TB, Hp) f32 recurrent state (persists across t blocks)
            xproj_scr)             # (Tt, TB, 4Hp) f32 precomputed layer-0 input projection
    """
    x_ref = refs[0]
    layer_refs = refs[1:1 + 3 * num_layers]
    wfc_ref = refs[1 + 3 * num_layers]
    bfc_ref = refs[2 + 3 * num_layers]
    out_ref = refs[3 + 3 * num_layers]
    h_scr = refs[4 + 3 * num_layers]
    c_scr = refs[5 + 3 * num_layers]
    xproj_scr = refs[6 + 3 * num_layers]

    t_pid = pl.program_id(1)
    TB = x_ref.shape[1]
    Dp = x_ref.shape[2]
    wdtype = layer_refs[0].dtype

    # Recurrent state persists across time blocks in VMEM scratch; init at first block.
    @pl.when(t_pid == 0)
    def _init_state():
        h_scr[...] = jnp.zeros_like(h_scr)
        c_scr[...] = jnp.zeros_like(c_scr)

    # Layer-0 input projection for the WHOLE time block as one big, pipelineable MXU pass
    # (bias folded in) — takes the x-part of layer 0 off the serial recurrence chain.
    x_blk = x_ref[...].reshape(Tt * TB, Dp)
    xproj_scr[...] = (
        jnp.dot(x_blk, layer_refs[0][...], preferred_element_type=jnp.float32)
        + layer_refs[2][...]                       # (1, 4Hp) sublane-broadcast add
    ).reshape(Tt, TB, 4 * Hp)

    carry0 = (tuple(h_scr[l] for l in range(num_layers)),
              tuple(c_scr[l] for l in range(num_layers)))

    def _gates_to_state(gates, c_prev):
        # sigmoid(z) = 0.5*tanh(0.5*z) + 0.5 : one EUP push per element instead of exp+recip.
        ifo = 0.5 * jnp.tanh(0.5 * gates[:, :3 * Hp]) + 0.5
        g_g = jnp.tanh(gates[:, 3 * Hp:])
        i_g = ifo[:, 0 * Hp:1 * Hp]
        f_g = ifo[:, 1 * Hp:2 * Hp]
        o_g = ifo[:, 2 * Hp:3 * Hp]
        c_n = f_g * c_prev + i_g * g_g
        h_n = o_g * jnp.tanh(c_n)
        return h_n, c_n

    def step(t_loc, carry):
        hs, cs = carry
        new_h, new_c = [], []
        inp = None
        for l in range(num_layers):
            wh_ref = layer_refs[3 * l + 1]
            if l == 0:
                # Only the recurrent (TB,Hp)x(Hp,4Hp) dot remains on the dependent chain.
                gates = xproj_scr[t_loc] + jnp.dot(
                    hs[0].astype(wdtype), wh_ref[...],
                    preferred_element_type=jnp.float32)
            else:
                wx_ref = layer_refs[3 * l]
                b_ref = layer_refs[3 * l + 2]
                gates = (jnp.dot(inp.astype(wdtype), wx_ref[...],
                                 preferred_element_type=jnp.float32)
                         + jnp.dot(hs[l].astype(wdtype), wh_ref[...],
                                   preferred_element_type=jnp.float32)
                         + b_ref[...])            # (1, 4Hp) broadcast add, no materialisation
            h_n, c_n = _gates_to_state(gates, cs[l])
            if needs_mask:                        # only traced when Tt does not divide T
                valid = (t_pid * Tt + t_loc) < t_total
                c_n = jnp.where(valid, c_n, cs[l])
                h_n = jnp.where(valid, h_n, hs[l])
            new_c.append(c_n)
            new_h.append(h_n)
            inp = h_n
        return (tuple(new_h), tuple(new_c))

    hs, cs = lax.fori_loop(0, Tt, step, carry0, unroll=unroll)

    for l in range(num_layers):
        h_scr[l] = hs[l]
        c_scr[l] = cs[l]

    # out[:, -1, :] of the top layer == its final hidden state -> FC head (lane-dense output).
    # Correct ONLY because out_spec's index is constant over the t axis and t is "arbitrary".
    @pl.when(t_pid == pl.num_programs(1) - 1)
    def _write_out():
        h_top = hs[num_layers - 1].astype(wfc_ref.dtype)
        out_ref[...] = (jnp.dot(h_top, wfc_ref[...],
                                preferred_element_type=jnp.float32)
                        + bfc_ref[...]).astype(out_ref.dtype)


def _pack_lstm_layer(w_ih, w_hh, b_ih, b_hh, d_in_p, Hp, weight_dtype):
    """Split + reorder one PyTorch LSTM layer.

    PyTorch stacks gates as [i, f, g, o] along the 4H axis.  We emit Wx (d_in_p, 4Hp) and
    Wh (Hp, 4Hp) with gate columns reordered to [i, f, o, g], plus the summed bias (1, 4Hp)
    kept in f32.  Zero padding is exact: padded gate columns get weight 0 and bias 0, so the
    padded h/c lanes stay exactly 0 (i=f=o=0.5 on zero pre-activation, g=tanh(0)=0).
    """
    H = w_hh.shape[1]
    d_in = w_ih.shape[1]
    src = {"i": 0, "f": 1, "g": 2, "o": 3}
    dst_order = ("i", "f", "o", "g")
    b_sum = b_ih + b_hh
    Wx = jnp.zeros((d_in_p, 4 * Hp), jnp.float32)
    Wh = jnp.zeros((Hp, 4 * Hp), jnp.float32)
    b = jnp.zeros((1, 4 * Hp), jnp.float32)
    for k, name in enumerate(dst_order):
        s = src[name]
        Wx = Wx.at[:d_in, k * Hp:k * Hp + H].set(w_ih[s * H:(s + 1) * H, :].T)
        Wh = Wh.at[:H, k * Hp:k * Hp + H].set(w_hh[s * H:(s + 1) * H, :].T)
        b = b.at[0, k * Hp:k * Hp + H].set(b_sum[s * H:(s + 1) * H])
    return Wx.astype(weight_dtype), Wh.astype(weight_dtype), b


def _pack_fc(w_fc, b_fc, Hp, Cp, weight_dtype):
    C, H = w_fc.shape
    W = jnp.zeros((Hp, Cp), jnp.float32).at[:H, :C].set(w_fc.T)
    b = jnp.zeros((1, Cp), jnp.float32).at[0, :C].set(b_fc)
    return W.astype(weight_dtype), b


def lstm_forward(x, params, *, num_layers, hidden_size, num_classes,
                 weight_dtype=jnp.bfloat16, time_block=16,
                 single_buffer_weights=False):
    """x: (B, T, input_size) float32 (batch_first, like the PyTorch module)."""
    B, T, input_size = x.shape

    Hp = _round_up(hidden_size, 128)       # lane-aligned gate blocks
    Dp = _round_up(input_size, 128)        # lane-aligned layer-0 input
    Cp = _round_up(num_classes, 128)       # lane-dense FC output

    # Batch blocking: sublane-aligned; give the "parallel" axis >= 2 blocks when the batch
    # allows it so v7x's second TensorCore gets work.  (On v6e/v7x, TB=256 would feed the
    # 256-wide MXU better for very large batches; 128 is kept as the v5e-safe cap.)
    Bp = _round_up(B, 8)
    if Bp <= 8:
        TB, NB = Bp, 1
    elif Bp <= 256:
        TB = _round_up(pl.cdiv(Bp, 2), 8)
        NB = 2
        Bp = NB * TB
    else:
        TB = 128
        NB = pl.cdiv(Bp, TB)
        Bp = NB * TB

    # Time blocking: prefer a Tt that divides T (no per-step state-freeze selects); fall back
    # to padding + mask only when T has no usable divisor <= time_block.
    tb_req = max(1, min(time_block, T))
    Tt = next((c for c in range(tb_req, 0, -1) if T % c == 0), 1)
    if Tt < max(1, tb_req // 2):
        Tt = tb_req
    Nt = pl.cdiv(T, Tt)
    Tpad = Nt * Tt
    needs_mask = (Tpad != T)

    # Time-major, zero-padded input; bf16 cast folded into the same transpose+pad pass
    # (halves x HBM traffic and the double-buffered x VMEM block when weights are bf16).
    x_dtype = weight_dtype
    x_tm = jnp.transpose(x, (1, 0, 2)).astype(x_dtype)
    x_pad = jnp.zeros((Tpad, Bp, Dp), x_dtype).at[:T, :B, :input_size].set(x_tm)

    # Loop-invariant weights: optionally single-buffer them (v7x 64 MiB / v5e 16 MiB knob).
    wspec_kwargs = {}
    if single_buffer_weights:
        wspec_kwargs = dict(pipeline_mode=pl.Buffered(1))

    def wspec(shape):
        return pl.BlockSpec(shape, lambda b, t: (0,) * len(shape), **wspec_kwargs)

    flat_args = [x_pad]
    in_specs = [pl.BlockSpec((Tt, TB, Dp), lambda b, t: (t, b, 0))]
    for l in range(num_layers):
        w_ih, w_hh, b_ih, b_hh = params["lstm"][l]
        d_in_p = Dp if l == 0 else Hp
        Wx, Wh, bias = _pack_lstm_layer(w_ih, w_hh, b_ih, b_hh, d_in_p, Hp, weight_dtype)
        flat_args += [Wx, Wh, bias]
        in_specs += [wspec(Wx.shape), wspec(Wh.shape), wspec(bias.shape)]
    W_fc, b_fc_p = _pack_fc(params["fc"][0], params["fc"][1], Hp, Cp, weight_dtype)
    flat_args += [W_fc, b_fc_p]
    in_specs += [wspec(W_fc.shape), wspec(b_fc_p.shape)]

    # Unroll fully only when the per-step live set is modest; otherwise cap to avoid spills.
    gates_bytes = TB * 4 * Hp * 4
    unroll = Tt if gates_bytes <= (64 * 1024) else 2

    # Size the scoped-VMEM limit from actual usage (resident weights, double-buffered x block,
    # output block, state + x-projection scratch) with headroom; clamp below physical limits.
    weight_bufs = 1 if single_buffer_weights else 2
    weight_bytes = sum(int(a.size) * a.dtype.itemsize for a in flat_args[1:])
    x_block_bytes = 2 * Tt * TB * Dp * jnp.dtype(x_dtype).itemsize
    out_bytes = 2 * TB * Cp * 4
    scratch_bytes = (2 * num_layers * TB * Hp + Tt * TB * 4 * Hp) * 4
    est = weight_bytes * weight_bufs + x_block_bytes + out_bytes + scratch_bytes
    vmem_limit = int(min(max(est * 1.4 + (4 << 20), 32 << 20), 100 << 20))

    kernel = functools.partial(_lstm_fc_kernel, num_layers, Hp, Tt, T, needs_mask, unroll)

    out_padded = pl.pallas_call(
        kernel,
        out_shape=jax.ShapeDtypeStruct((Bp, Cp), jnp.float32),
        grid_spec=pltpu.PrefetchScalarGridSpec(
            num_scalar_prefetch=0,
            grid=(NB, Nt),
            in_specs=in_specs,
            out_specs=pl.BlockSpec((TB, Cp), lambda b, t: (b, 0)),
            scratch_shapes=[pltpu.VMEM((num_layers, TB, Hp), jnp.float32),
                            pltpu.VMEM((num_layers, TB, Hp), jnp.float32),
                            pltpu.VMEM((Tt, TB, 4 * Hp), jnp.float32)]),
        compiler_params=pltpu.CompilerParams(
            dimension_semantics=("parallel", "arbitrary"),
            vmem_limit_bytes=vmem_limit),
    )(*flat_args)

    return out_padded[:B, :num_classes]


def _init_params(key, input_size, hidden_size, num_layers, num_classes):
    """Deterministic init mimicking PyTorch's U(-1/sqrt(H), 1/sqrt(H))."""
    k = 1.0 / (hidden_size ** 0.5)
    params = {"lstm": [], "fc": None}
    for l in range(num_layers):
        d_in = input_size if l == 0 else hidden_size
        key, k1, k2, k3, k4 = jax.random.split(key, 5)
        w_ih = jax.random.uniform(k1, (4 * hidden_size, d_in), jnp.float32, -k, k)
        w_hh = jax.random.uniform(k2, (4 * hidden_size, hidden_size), jnp.float32, -k, k)
        b_ih = jax.random.uniform(k3, (4 * hidden_size,), jnp.float32, -k, k)
        b_hh = jax.random.uniform(k4, (4 * hidden_size,), jnp.float32, -k, k)
        params["lstm"].append((w_ih, w_hh, b_ih, b_hh))
    key, k1, k2 = jax.random.split(key, 3)
    w_fc = jax.random.uniform(k1, (num_classes, hidden_size), jnp.float32, -k, k)
    b_fc = jax.random.uniform(k2, (num_classes,), jnp.float32, -k, k)
    params["fc"] = (w_fc, b_fc)
    return params


def _reference_forward(x, params, num_layers, hidden_size, num_classes):
    """Pure-JAX reference replicating nn.LSTM(batch_first=True) + nn.Linear."""
    B, T, _ = x.shape
    h = [jnp.zeros((B, hidden_size), jnp.float32) for _ in range(num_layers)]
    c = [jnp.zeros((B, hidden_size), jnp.float32) for _ in range(num_layers)]
    H = hidden_size
    for t in range(T):
        inp = x[:, t, :]
        for l in range(num_layers):
            w_ih, w_hh, b_ih, b_hh = params["lstm"][l]
            gates = inp @ w_ih.T + h[l] @ w_hh.T + b_ih + b_hh
            i_g = jax.nn.sigmoid(gates[:, 0 * H:1 * H])
            f_g = jax.nn.sigmoid(gates[:, 1 * H:2 * H])
            g_g = jnp.tanh(gates[:, 2 * H:3 * H])
            o_g = jax.nn.sigmoid(gates[:, 3 * H:4 * H])
            c[l] = f_g * c[l] + i_g * g_g
            h[l] = o_g * jnp.tanh(c[l])
            inp = h[l]
    w_fc, b_fc = params["fc"]
    return h[-1] @ w_fc.T + b_fc


if __name__ == "__main__":
    # Small shapes consistent with the module's forward (x: (batch, seq, input_size)).
    # TODO(synk): the torch try/except reshape fallback to (B, T, 1) for malformed inputs
    # is not replicated; the kernel assumes a well-formed 3-D (B, T, input_size) tensor.
    B, T = 2, 8
    input_size, hidden_size, num_layers, num_classes = 4, 32, 2, 5

    key = jax.random.PRNGKey(0)
    key, xkey = jax.random.split(key)
    x = jax.random.normal(xkey, (B, T, input_size), dtype=jnp.float32)
    params = _init_params(key, input_size, hidden_size, num_layers, num_classes)

    ref = _reference_forward(x, params, num_layers, hidden_size, num_classes)

    # f32-weight path: matches the PyTorch-style reference to tight tolerance.
    out_f32 = lstm_forward(x, params, num_layers=num_layers, hidden_size=hidden_size,
                           num_classes=num_classes, weight_dtype=jnp.float32)
    out_f32 = jax.block_until_ready(out_f32)
    assert out_f32.shape == (B, num_classes)
    assert jnp.allclose(out_f32, ref, atol=1e-4, rtol=1e-4), (
        f"f32 max abs err = {jnp.max(jnp.abs(out_f32 - ref))}")

    # bf16 weights + bf16 x (default fast path on all gens); f32 MXU accumulation + f32 state.
    out_bf16 = lstm_forward(x, params, num_layers=num_layers, hidden_size=hidden_size,
                            num_classes=num_classes, weight_dtype=jnp.bfloat16)
    out_bf16 = jax.block_until_ready(out_bf16)
    assert out_bf16.shape == (B, num_classes)
    assert jnp.allclose(out_bf16, ref, atol=5e-2, rtol=5e-2), (
        f"bf16 max abs err = {jnp.max(jnp.abs(out_bf16 - ref))}")

    print("KERNEL_OK")
</pallas_src>

<mosaic_0001>
module attributes {stable_mosaic.version = 11 : i64} {
  func.func @_lstm_fc_kernel(%arg0: i32, %arg1: i32, %arg2: memref<8x8x128xf32, #tpu.memory_space<vmem>>, %arg3: memref<128x512xf32, #tpu.memory_space<vmem>>, %arg4: memref<128x512xf32, #tpu.memory_space<vmem>>, %arg5: memref<1x512xf32, #tpu.memory_space<vmem>>, %arg6: memref<128x512xf32, #tpu.memory_space<vmem>>, %arg7: memref<128x512xf32, #tpu.memory_space<vmem>>, %arg8: memref<1x512xf32, #tpu.memory_space<vmem>>, %arg9: memref<128x128xf32, #tpu.memory_space<vmem>>, %arg10: memref<1x128xf32, #tpu.memory_space<vmem>>, %arg11: memref<8x128xf32, #tpu.memory_space<vmem>>, %arg12: memref<2x8x128xf32, #tpu.memory_space<vmem>>, %arg13: memref<2x8x128xf32, #tpu.memory_space<vmem>>, %arg14: memref<8x8x512xf32, #tpu.memory_space<vmem>>) attributes {dimension_semantics = [#tpu.dimension_semantics<parallel>, #tpu.dimension_semantics<arbitrary>], iteration_bounds = array<i64: 1, 1>, scalar_prefetch = 0 : i64, scratch_operands = 3 : i64, tpu.core_type = #tpu.core_type<tc>, window_params = [{transform_indices = @transform_0, window_bounds = array<i64: 8, 8, 128>}, {pipeline_mode = #tpu.pipeline_mode<synchronous>, transform_indices = @transform_1, window_bounds = array<i64: 128, 512>}, {pipeline_mode = #tpu.pipeline_mode<synchronous>, transform_indices = @transform_2, window_bounds = array<i64: 128, 512>}, {pipeline_mode = #tpu.pipeline_mode<synchronous>, transform_indices = @transform_3, window_bounds = array<i64: 1, 512>}, {pipeline_mode = #tpu.pipeline_mode<synchronous>, transform_indices = @transform_4, window_bounds = array<i64: 128, 512>}, {pipeline_mode = #tpu.pipeline_mode<synchronous>, transform_indices = @transform_5, window_bounds = array<i64: 128, 512>}, {pipeline_mode = #tpu.pipeline_mode<synchronous>, transform_indices = @transform_6, window_bounds = array<i64: 1, 512>}, {pipeline_mode = #tpu.pipeline_mode<synchronous>, transform_indices = @transform_7, window_bounds = array<i64: 128, 128>}, {pipeline_mode = #tpu.pipeline_mode<synchronous>, transform_indices = @transform_8, window_bounds = array<i64: 1, 128>}, {transform_indices = @transform_9, window_bounds = array<i64: 8, 128>}]} {
    %c0_i32 = arith.constant 0 : i32
    %0 = arith.cmpi eq, %arg1, %c0_i32 : i32
    %1 = arith.extui %0 : i1 to i32
    %c0_i32_0 = arith.constant 0 : i32
    %2 = arith.cmpi ne, %1, %c0_i32_0 : i32
    scf.if %2 {
      %cst_188 = arith.constant 0.000000e+00 : f32
      %435 = vector.broadcast %cst_188 : f32 to vector<2x8x128xf32>
      %c0_189 = arith.constant 0 : index
      %c0_190 = arith.constant 0 : index
      %c0_191 = arith.constant 0 : index
      %436 = vector.load %arg12[%c0_189, %c0_190, %c0_191] : memref<2x8x128xf32, #tpu.memory_space<vmem>>, vector<2x8x128xf32>
      tpu.vector_store %arg12[%c0_189, %c0_190, %c0_191], %435 {strides = array<i32>} : memref<2x8x128xf32, #tpu.memory_space<vmem>>, vector<2x8x128xf32>,
      %cst_192 = arith.constant 0.000000e+00 : f32
      %437 = vector.broadcast %cst_192 : f32 to vector<2x8x128xf32>
      %c0_193 = arith.constant 0 : index
      %c0_194 = arith.constant 0 : index
      %c0_195 = arith.constant 0 : index
      %438 = vector.load %arg13[%c0_193, %c0_194, %c0_195] : memref<2x8x128xf32, #tpu.memory_space<vmem>>, vector<2x8x128xf32>
      tpu.vector_store %arg13[%c0_193, %c0_194, %c0_195], %437 {strides = array<i32>} : memref<2x8x128xf32, #tpu.memory_space<vmem>>, vector<2x8x128xf32>,
    } else {
    }
    %c0 = arith.constant 0 : index
    %c0_1 = arith.constant 0 : index
    %c0_2 = arith.constant 0 : index
    %3 = vector.load %arg2[%c0, %c0_1, %c0_2] : memref<8x8x128xf32, #tpu.memory_space<vmem>>, vector<8x8x128xf32>
    %4 = vector.shape_cast %3 : vector<8x8x128xf32> to vector<64x128xf32>
    %c0_3 = arith.constant 0 : index
    %c0_4 = arith.constant 0 : index
    %5 = vector.load %arg3[%c0_3, %c0_4] : memref<128x512xf32, #tpu.memory_space<vmem>>, vector<128x512xf32>
    %cst = arith.constant dense<0.000000e+00> : vector<64x512xf32>
    %6 = tpu.matmul %4, %5, %cst {dimension_numbers = #tpu.dot_dimension_numbers<[1], [0], [0], [1], [0, 0, 1, 1], [], []>} : vector<64x128xf32>, vector<128x512xf32>, vector<64x512xf32> -> vector<64x512xf32>
    %c0_5 = arith.constant 0 : index
    %c0_6 = arith.constant 0 : index
    %7 = vector.load %arg5[%c0_5, %c0_6] : memref<1x512xf32, #tpu.memory_space<vmem>>, vector<1x512xf32>
    %8 = vector.broadcast %7 : vector<1x512xf32> to vector<64x512xf32>
    %9 = arith.addf %6, %8 : vector<64x512xf32>
    %10 = vector.shape_cast %9 : vector<64x512xf32> to vector<8x8x512xf32>
    %c0_7 = arith.constant 0 : index
    %c0_8 = arith.constant 0 : index
    %c0_9 = arith.constant 0 : index
    %11 = vector.load %arg14[%c0_7, %c0_8, %c0_9] : memref<8x8x512xf32, #tpu.memory_space<vmem>>, vector<8x8x512xf32>
    tpu.vector_store %arg14[%c0_7, %c0_8, %c0_9], %10 {strides = array<i32>} : memref<8x8x512xf32, #tpu.memory_space<vmem>>, vector<8x8x512xf32>,
    %c0_10 = arith.constant 0 : index
    %c0_11 = arith.constant 0 : index
    %c0_12 = arith.constant 0 : index
    %12 = vector.load %arg12[%c0_10, %c0_11, %c0_12] : memref<2x8x128xf32, #tpu.memory_space<vmem>>, vector<1x8x128xf32>
    %13 = vector.shape_cast %12 : vector<1x8x128xf32> to vector<8x128xf32>
    %c1 = arith.constant 1 : index
    %c0_13 = arith.constant 0 : index
    %c0_14 = arith.constant 0 : index
    %14 = vector.load %arg12[%c1, %c0_13, %c0_14] : memref<2x8x128xf32, #tpu.memory_space<vmem>>, vector<1x8x128xf32>
    %15 = vector.shape_cast %14 : vector<1x8x128xf32> to vector<8x128xf32>
    %c0_15 = arith.constant 0 : index
    %c0_16 = arith.constant 0 : index
    %c0_17 = arith.constant 0 : index
    %16 = vector.load %arg13[%c0_15, %c0_16, %c0_17] : memref<2x8x128xf32, #tpu.memory_space<vmem>>, vector<1x8x128xf32>
    %17 = vector.shape_cast %16 : vector<1x8x128xf32> to vector<8x128xf32>
    %c1_18 = arith.constant 1 : index
    %c0_19 = arith.constant 0 : index
    %c0_20 = arith.constant 0 : index
    %18 = vector.load %arg13[%c1_18, %c0_19, %c0_20] : memref<2x8x128xf32, #tpu.memory_space<vmem>>, vector<1x8x128xf32>
    %19 = vector.shape_cast %18 : vector<1x8x128xf32> to vector<8x128xf32>
    %c0_i32_21 = arith.constant 0 : i32
    %20 = arith.index_cast %c0_i32_21 : i32 to index
    %c0_22 = arith.constant 0 : index
    %c0_23 = arith.constant 0 : index
    %21 = vector.load %arg14[%20, %c0_22, %c0_23] : memref<8x8x512xf32, #tpu.memory_space<vmem>>, vector<1x8x512xf32>
    %22 = vector.shape_cast %21 : vector<1x8x512xf32> to vector<8x512xf32>
    %c0_24 = arith.constant 0 : index
    %c0_25 = arith.constant 0 : index
    %23 = vector.load %arg4[%c0_24, %c0_25] : memref<128x512xf32, #tpu.memory_space<vmem>>, vector<128x512xf32>
    %cst_26 = arith.constant dense<0.000000e+00> : vector<8x512xf32>
    %24 = tpu.matmul %13, %23, %cst_26 {dimension_numbers = #tpu.dot_dimension_numbers<[1], [0], [0], [1], [0, 0, 1, 1], [], []>} : vector<8x128xf32>, vector<128x512xf32>, vector<8x512xf32> -> vector<8x512xf32>
    %25 = arith.addf %22, %24 : vector<8x512xf32>
    %26 = vector.extract_strided_slice %25 {offsets = [0, 0], sizes = [8, 384], strides = [1, 1]} : vector<8x512xf32> to vector<8x384xf32>
    %cst_27 = arith.constant 5.000000e-01 : f32
    %27 = vector.broadcast %cst_27 : f32 to vector<8x384xf32>
    %28 = arith.mulf %27, %26 : vector<8x384xf32>
    %29 = math.tanh %28 : vector<8x384xf32>
    %cst_28 = arith.constant 5.000000e-01 : f32
    %30 = vector.broadcast %cst_28 : f32 to vector<8x384xf32>
    %31 = arith.mulf %30, %29 : vector<8x384xf32>
    %cst_29 = arith.constant 5.000000e-01 : f32
    %32 = vector.broadcast %cst_29 : f32 to vector<8x384xf32>
    %33 = arith.addf %31, %32 : vector<8x384xf32>
    %34 = vector.extract_strided_slice %25 {offsets = [0, 384], sizes = [8, 128], strides = [1, 1]} : vector<8x512xf32> to vector<8x128xf32>
    %35 = math.tanh %34 : vector<8x128xf32>
    %36 = vector.extract_strided_slice %33 {offsets = [0, 0], sizes = [8, 128], strides = [1, 1]} : vector<8x384xf32> to vector<8x128xf32>
    %37 = vector.extract_strided_slice %33 {offsets = [0, 128], sizes = [8, 128], strides = [1, 1]} : vector<8x384xf32> to vector<8x128xf32>
    %38 = vector.extract_strided_slice %33 {offsets = [0, 256], sizes = [8, 128], strides = [1, 1]} : vector<8x384xf32> to vector<8x128xf32>
    %39 = arith.mulf %37, %17 : vector<8x128xf32>
    %40 = arith.mulf %36, %35 : vector<8x128xf32>
    %41 = arith.addf %39, %40 : vector<8x128xf32>
    %42 = math.tanh %41 : vector<8x128xf32>
    %43 = arith.mulf %38, %42 : vector<8x128xf32>
    %c0_30 = arith.constant 0 : index
    %c0_31 = arith.constant 0 : index
    %44 = vector.load %arg6[%c0_30, %c0_31] : memref<128x512xf32, #tpu.memory_space<vmem>>, vector<128x512xf32>
    %cst_32 = arith.constant dense<0.000000e+00> : vector<8x512xf32>
    %45 = tpu.matmul %43, %44, %cst_32 {dimension_numbers = #tpu.dot_dimension_numbers<[1], [0], [0], [1], [0, 0, 1, 1], [], []>} : vector<8x128xf32>, vector<128x512xf32>, vector<8x512xf32> -> vector<8x512xf32>
    %c0_33 = arith.constant 0 : index
    %c0_34 = arith.constant 0 : index
    %46 = vector.load %arg7[%c0_33, %c0_34] : memref<128x512xf32, #tpu.memory_space<vmem>>, vector<128x512xf32>
    %cst_35 = arith.constant dense<0.000000e+00> : vector<8x512xf32>
    %47 = tpu.matmul %15, %46, %cst_35 {dimension_numbers = #tpu.dot_dimension_numbers<[1], [0], [0], [1], [0, 0, 1, 1], [], []>} : vector<8x128xf32>, vector<128x512xf32>, vector<8x512xf32> -> vector<8x512xf32>
    %48 = arith.addf %45, %47 : vector<8x512xf32>
    %c0_36 = arith.constant 0 : index
    %c0_37 = arith.constant 0 : index
    %49 = vector.load %arg8[%c0_36, %c0_37] : memref<1x512xf32, #tpu.memory_space<vmem>>, vector<1x512xf32>
    %50 = vector.broadcast %49 : vector<1x512xf32> to vector<8x512xf32>
    %51 = arith.addf %48, %50 : vector<8x512xf32>
    %52 = vector.extract_strided_slice %51 {offsets = [0, 0], sizes = [8, 384], strides = [1, 1]} : vector<8x512xf32> to vector<8x384xf32>
    %cst_38 = arith.constant 5.000000e-01 : f32
    %53 = vector.broadcast %cst_38 : f32 to vector<8x384xf32>
    %54 = arith.mulf %53, %52 : vector<8x384xf32>
    %55 = math.tanh %54 : vector<8x384xf32>
    %cst_39 = arith.constant 5.000000e-01 : f32
    %56 = vector.broadcast %cst_39 : f32 to vector<8x384xf32>
    %57 = arith.mulf %56, %55 : vector<8x384xf32>
    %cst_40 = arith.constant 5.000000e-01 : f32
    %58 = vector.broadcast %cst_40 : f32 to vector<8x384xf32>
    %59 = arith.addf %57, %58 : vector<8x384xf32>
    %60 = vector.extract_strided_slice %51 {offsets = [0, 384], sizes = [8, 128], strides = [1, 1]} : vector<8x512xf32> to vector<8x128xf32>
    %61 = math.tanh %60 : vector<8x128xf32>
    %62 = vector.extract_strided_slice %59 {offsets = [0, 0], sizes = [8, 128], strides = [1, 1]} : vector<8x384xf32> to vector<8x128xf32>
    %63 = vector.extract_strided_slice %59 {offsets = [0, 128], sizes = [8, 128], strides = [1, 1]} : vector<8x384xf32> to vector<8x128xf32>
    %64 = vector.extract_strided_slice %59 {offsets = [0, 256], sizes = [8, 128], strides = [1, 1]} : vector<8x384xf32> to vector<8x128xf32>
    %65 = arith.mulf %63, %19 : vector<8x128xf32>
    %66 = arith.mulf %62, %61 : vector<8x128xf32>
    %67 = arith.addf %65, %66 : vector<8x128xf32>
    %68 = math.tanh %67 : vector<8x128xf32>
    %69 = arith.mulf %64, %68 : vector<8x128xf32>
    %c1_i32 = arith.constant 1 : i32
    %70 = arith.index_cast %c1_i32 : i32 to index
    %c0_41 = arith.constant 0 : index
    %c0_42 = arith.constant 0 : index
    %71 = vector.load %arg14[%70, %c0_41, %c0_42] : memref<8x8x512xf32, #tpu.memory_space<vmem>>, vector<1x8x512xf32>
    %72 = vector.shape_cast %71 : vector<1x8x512xf32> to vector<8x512xf32>
    %c0_43 = arith.constant 0 : index
    %c0_44 = arith.constant 0 : index
    %73 = vector.load %arg4[%c0_43, %c0_44] : memref<128x512xf32, #tpu.memory_space<vmem>>, vector<128x512xf32>
    %cst_45 = arith.constant dense<0.000000e+00> : vector<8x512xf32>
    %74 = tpu.matmul %43, %73, %cst_45 {dimension_numbers = #tpu.dot_dimension_numbers<[1], [0], [0], [1], [0, 0, 1, 1], [], []>} : vector<8x128xf32>, vector<128x512xf32>, vector<8x512xf32> -> vector<8x512xf32>
    %75 = arith.addf %72, %74 : vector<8x512xf32>
    %76 = vector.extract_strided_slice %75 {offsets = [0, 0], sizes = [8, 384], strides = [1, 1]} : vector<8x512xf32> to vector<8x384xf32>
    %cst_46 = arith.constant 5.000000e-01 : f32
    %77 = vector.broadcast %cst_46 : f32 to vector<8x384xf32>
    %78 = arith.mulf %77, %76 : vector<8x384xf32>
    %79 = math.tanh %78 : vector<8x384xf32>
    %cst_47 = arith.constant 5.000000e-01 : f32
    %80 = vector.broadcast %cst_47 : f32 to vector<8x384xf32>
    %81 = arith.mulf %80, %79 : vector<8x384xf32>
    %cst_48 = arith.constant 5.000000e-01 : f32
    %82 = vector.broadcast %cst_48 : f32 to vector<8x384xf32>
    %83 = arith.addf %81, %82 : vector<8x384xf32>
    %84 = vector.extract_strided_slice %75 {offsets = [0, 384], sizes = [8, 128], strides = [1, 1]} : vector<8x512xf32> to vector<8x128xf32>
    %85 = math.tanh %84 : vector<8x128xf32>
    %86 = vector.extract_strided_slice %83 {offsets = [0, 0], sizes = [8, 128], strides = [1, 1]} : vector<8x384xf32> to vector<8x128xf32>
    %87 = vector.extract_strided_slice %83 {offsets = [0, 128], sizes = [8, 128], strides = [1, 1]} : vector<8x384xf32> to vector<8x128xf32>
    %88 = vector.extract_strided_slice %83 {offsets = [0, 256], sizes = [8, 128], strides = [1, 1]} : vector<8x384xf32> to vector<8x128xf32>
    %89 = arith.mulf %87, %41 : vector<8x128xf32>
    %90 = arith.mulf %86, %85 : vector<8x128xf32>
    %91 = arith.addf %89, %90 : vector<8x128xf32>
    %92 = math.tanh %91 : vector<8x128xf32>
    %93 = arith.mulf %88, %92 : vector<8x128xf32>
    %c0_49 = arith.constant 0 : index
    %c0_50 = arith.constant 0 : index
    %94 = vector.load %arg6[%c0_49, %c0_50] : memref<128x512xf32, #tpu.memory_space<vmem>>, vector<128x512xf32>
    %cst_51 = arith.constant dense<0.000000e+00> : vector<8x512xf32>
    %95 = tpu.matmul %93, %94, %cst_51 {dimension_numbers = #tpu.dot_dimension_numbers<[1], [0], [0], [1], [0, 0, 1, 1], [], []>} : vector<8x128xf32>, vector<128x512xf32>, vector<8x512xf32> -> vector<8x512xf32>
    %c0_52 = arith.constant 0 : index
    %c0_53 = arith.constant 0 : index
    %96 = vector.load %arg7[%c0_52, %c0_53] : memref<128x512xf32, #tpu.memory_space<vmem>>, vector<128x512xf32>
    %cst_54 = arith.constant dense<0.000000e+00> : vector<8x512xf32>
    %97 = tpu.matmul %69, %96, %cst_54 {dimension_numbers = #tpu.dot_dimension_numbers<[1], [0], [0], [1], [0, 0, 1, 1], [], []>} : vector<8x128xf32>, vector<128x512xf32>, vector<8x512xf32> -> vector<8x512xf32>
    %98 = arith.addf %95, %97 : vector<8x512xf32>
    %c0_55 = arith.constant 0 : index
    %c0_56 = arith.constant 0 : index
    %99 = vector.load %arg8[%c0_55, %c0_56] : memref<1x512xf32, #tpu.memory_space<vmem>>, vector<1x512xf32>
    %100 = vector.broadcast %99 : vector<1x512xf32> to vector<8x512xf32>
    %101 = arith.addf %98, %100 : vector<8x512xf32>
    %102 = vector.extract_strided_slice %101 {offsets = [0, 0], sizes = [8, 384], strides = [1, 1]} : vector<8x512xf32> to vector<8x384xf32>
    %cst_57 = arith.constant 5.000000e-01 : f32
    %103 = vector.broadcast %cst_57 : f32 to vector<8x384xf32>
    %104 = arith.mulf %103, %102 : vector<8x384xf32>
    %105 = math.tanh %104 : vector<8x384xf32>
    %cst_58 = arith.constant 5.000000e-01 : f32
    %106 = vector.broadcast %cst_58 : f32 to vector<8x384xf32>
    %107 = arith.mulf %106, %105 : vector<8x384xf32>
    %cst_59 = arith.constant 5.000000e-01 : f32
    %108 = vector.broadcast %cst_59 : f32 to vector<8x384xf32>
    %109 = arith.addf %107, %108 : vector<8x384xf32>
    %110 = vector.extract_strided_slice %101 {offsets = [0, 384], sizes = [8, 128], strides = [1, 1]} : vector<8x512xf32> to vector<8x128xf32>
    %111 = math.tanh %110 : vector<8x128xf32>
    %112 = vector.extract_strided_slice %109 {offsets = [0, 0], sizes = [8, 128], strides = [1, 1]} : vector<8x384xf32> to vector<8x128xf32>
    %113 = vector.extract_strided_slice %109 {offsets = [0, 128], sizes = [8, 128], strides = [1, 1]} : vector<8x384xf32> to vector<8x128xf32>
    %114 = vector.extract_strided_slice %109 {offsets = [0, 256], sizes = [8, 128], strides = [1, 1]} : vector<8x384xf32> to vector<8x128xf32>
    %115 = arith.mulf %113, %67 : vector<8x128xf32>
    %116 = arith.mulf %112, %111 : vector<8x128xf32>
    %117 = arith.addf %115, %116 : vector<8x128xf32>
    %118 = math.tanh %117 : vector<8x128xf32>
    %119 = arith.mulf %114, %118 : vector<8x128xf32>
    %c2_i32 = arith.constant 2 : i32
    %120 = arith.index_cast %c2_i32 : i32 to index
    %c0_60 = arith.constant 0 : index
    %c0_61 = arith.constant 0 : index
    %121 = vector.load %arg14[%120, %c0_60, %c0_61] : memref<8x8x512xf32, #tpu.memory_space<vmem>>, vector<1x8x512xf32>
    %122 = vector.shape_cast %121 : vector<1x8x512xf32> to vector<8x512xf32>
    %c0_62 = arith.constant 0 : index
    %c0_63 = arith.constant 0 : index
    %123 = vector.load %arg4[%c0_62, %c0_63] : memref<128x512xf32, #tpu.memory_space<vmem>>, vector<128x512xf32>
    %cst_64 = arith.constant dense<0.000000e+00> : vector<8x512xf32>
    %124 = tpu.matmul %93, %123, %cst_64 {dimension_numbers = #tpu.dot_dimension_numbers<[1], [0], [0], [1], [0, 0, 1, 1], [], []>} : vector<8x128xf32>, vector<128x512xf32>, vector<8x512xf32> -> vector<8x512xf32>
    %125 = arith.addf %122, %124 : vector<8x512xf32>
    %126 = vector.extract_strided_slice %125 {offsets = [0, 0], sizes = [8, 384], strides = [1, 1]} : vector<8x512xf32> to vector<8x384xf32>
    %cst_65 = arith.constant 5.000000e-01 : f32
    %127 = vector.broadcast %cst_65 : f32 to vector<8x384xf32>
    %128 = arith.mulf %127, %126 : vector<8x384xf32>
    %129 = math.tanh %128 : vector<8x384xf32>
    %cst_66 = arith.constant 5.000000e-01 : f32
    %130 = vector.broadcast %cst_66 : f32 to vector<8x384xf32>
    %131 = arith.mulf %130, %129 : vector<8x384xf32>
    %cst_67 = arith.constant 5.000000e-01 : f32
    %132 = vector.broadcast %cst_67 : f32 to vector<8x384xf32>
    %133 = arith.addf %131, %132 : vector<8x384xf32>
    %134 = vector.extract_strided_slice %125 {offsets = [0, 384], sizes = [8, 128], strides = [1, 1]} : vector<8x512xf32> to vector<8x128xf32>
    %135 = math.tanh %134 : vector<8x128xf32>
    %136 = vector.extract_strided_slice %133 {offsets = [0, 0], sizes = [8, 128], strides = [1, 1]} : vector<8x384xf32> to vector<8x128xf32>
    %137 = vector.extract_strided_slice %133 {offsets = [0, 128], sizes = [8, 128], strides = [1, 1]} : vector<8x384xf32> to vector<8x128xf32>
    %138 = vector.extract_strided_slice %133 {offsets = [0, 256], sizes = [8, 128], strides = [1, 1]} : vector<8x384xf32> to vector<8x128xf32>
    %139 = arith.mulf %137, %91 : vector<8x128xf32>
    %140 = arith.mulf %136, %135 : vector<8x128xf32>
    %141 = arith.addf %139, %140 : vector<8x128xf32>
    %142 = math.tanh %141 : vector<8x128xf32>
    %143 = arith.mulf %138, %142 : vector<8x128xf32>
    %c0_68 = arith.constant 0 : index
    %c0_69 = arith.constant 0 : index
    %144 = vector.load %arg6[%c0_68, %c0_69] : memref<128x512xf32, #tpu.memory_space<vmem>>, vector<128x512xf32>
    %cst_70 = arith.constant dense<0.000000e+00> : vector<8x512xf32>
    %145 = tpu.matmul %143, %144, %cst_70 {dimension_numbers = #tpu.dot_dimension_numbers<[1], [0], [0], [1], [0, 0, 1, 1], [], []>} : vector<8x128xf32>, vector<128x512xf32>, vector<8x512xf32> -> vector<8x512xf32>
    %c0_71 = arith.constant 0 : index
    %c0_72 = arith.constant 0 : index
    %146 = vector.load %arg7[%c0_71, %c0_72] : memref<128x512xf32, #tpu.memory_space<vmem>>, vector<128x512xf32>
    %cst_73 = arith.constant dense<0.000000e+00> : vector<8x512xf32>
    %147 = tpu.matmul %119, %146, %cst_73 {dimension_numbers = #tpu.dot_dimension_numbers<[1], [0], [0], [1], [0, 0, 1, 1], [], []>} : vector<8x128xf32>, vector<128x512xf32>, vector<8x512xf32> -> vector<8x512xf32>
    %148 = arith.addf %145, %147 : vector<8x512xf32>
    %c0_74 = arith.constant 0 : index
    %c0_75 = arith.constant 0 : index
    %149 = vector.load %arg8[%c0_74, %c0_75] : memref<1x512xf32, #tpu.memory_space<vmem>>, vector<1x512xf32>
    %150 = vector.broadcast %149 : vector<1x512xf32> to vector<8x512xf32>
    %151 = arith.addf %148, %150 : vector<8x512xf32>
    %152 = vector.extract_strided_slice %151 {offsets = [0, 0], sizes = [8, 384], strides = [1, 1]} : vector<8x512xf32> to vector<8x384xf32>
    %cst_76 = arith.constant 5.000000e-01 : f32
    %153 = vector.broadcast %cst_76 : f32 to vector<8x384xf32>
    %154 = arith.mulf %153, %152 : vector<8x384xf32>
    %155 = math.tanh %154 : vector<8x384xf32>
    %cst_77 = arith.constant 5.000000e-01 : f32
    %156 = vector.broadcast %cst_77 : f32 to vector<8x384xf32>
    %157 = arith.mulf %156, %155 : vector<8x384xf32>
    %cst_78 = arith.constant 5.000000e-01 : f32
    %158 = vector.broadcast %cst_78 : f32 to vector<8x384xf32>
    %159 = arith.addf %157, %158 : vector<8x384xf32>
    %160 = vector.extract_strided_slice %151 {offsets = [0, 384], sizes = [8, 128], strides = [1, 1]} : vector<8x512xf32> to vector<8x128xf32>
    %161 = math.tanh %160 : vector<8x128xf32>
    %162 = vector.extract_strided_slice %159 {offsets = [0, 0], sizes = [8, 128], strides = [1, 1]} : vector<8x384xf32> to vector<8x128xf32>
    %163 = vector.extract_strided_slice %159 {offsets = [0, 128], sizes = [8, 128], strides = [1, 1]} : vector<8x384xf32> to vector<8x128xf32>
    %164 = vector.extract_strided_slice %159 {offsets = [0, 256], sizes = [8, 128], strides = [1, 1]} : vector<8x384xf32> to vector<8x128xf32>
    %165 = arith.mulf %163, %117 : vector<8x128xf32>
    %166 = arith.mulf %162, %161 : vector<8x128xf32>
    %167 = arith.addf %165, %166 : vector<8x128xf32>
    %168 = math.tanh %167 : vector<8x128xf32>
    %169 = arith.mulf %164, %168 : vector<8x128xf32>
    %c3_i32 = arith.constant 3 : i32
    %170 = arith.index_cast %c3_i32 : i32 to index
    %c0_79 = arith.constant 0 : index
    %c0_80 = arith.constant 0 : index
    %171 = vector.load %arg14[%170, %c0_79, %c0_80] : memref<8x8x512xf32, #tpu.memory_space<vmem>>, vector<1x8x512xf32>
    %172 = vector.shape_cast %171 : vector<1x8x512xf32> to vector<8x512xf32>
    %c0_81 = arith.constant 0 : index
    %c0_82 = arith.constant 0 : index
    %173 = vector.load %arg4[%c0_81, %c0_82] : memref<128x512xf32, #tpu.memory_space<vmem>>, vector<128x512xf32>
    %cst_83 = arith.constant dense<0.000000e+00> : vector<8x512xf32>
    %174 = tpu.matmul %143, %173, %cst_83 {dimension_numbers = #tpu.dot_dimension_numbers<[1], [0], [0], [1], [0, 0, 1, 1], [], []>} : vector<8x128xf32>, vector<128x512xf32>, vector<8x512xf32> -> vector<8x512xf32>
    %175 = arith.addf %172, %174 : vector<8x512xf32>
    %176 = vector.extract_strided_slice %175 {offsets = [0, 0], sizes = [8, 384], strides = [1, 1]} : vector<8x512xf32> to vector<8x384xf32>
    %cst_84 = arith.constant 5.000000e-01 : f32
    %177 = vector.broadcast %cst_84 : f32 to vector<8x384xf32>
    %178 = arith.mulf %177, %176 : vector<8x384xf32>
    %179 = math.tanh %178 : vector<8x384xf32>
    %cst_85 = arith.constant 5.000000e-01 : f32
    %180 = vector.broadcast %cst_85 : f32 to vector<8x384xf32>
    %181 = arith.mulf %180, %179 : vector<8x384xf32>
    %cst_86 = arith.constant 5.000000e-01 : f32
    %182 = vector.broadcast %cst_86 : f32 to vector<8x384xf32>
    %183 = arith.addf %181, %182 : vector<8x384xf32>
    %184 = vector.extract_strided_slice %175 {offsets = [0, 384], sizes = [8, 128], strides = [1, 1]} : vector<8x512xf32> to vector<8x128xf32>
    %185 = math.tanh %184 : vector<8x128xf32>
    %186 = vector.extract_strided_slice %183 {offsets = [0, 0], sizes = [8, 128], strides = [1, 1]} : vector<8x384xf32> to vector<8x128xf32>
    %187 = vector.extract_strided_slice %183 {offsets = [0, 128], sizes = [8, 128], strides = [1, 1]} : vector<8x384xf32> to vector<8x128xf32>
    %188 = vector.extract_strided_slice %183 {offsets = [0, 256], sizes = [8, 128], strides = [1, 1]} : vector<8x384xf32> to vector<8x128xf32>
    %189 = arith.mulf %187, %141 : vector<8x128xf32>
    %190 = arith.mulf %186, %185 : vector<8x128xf32>
    %191 = arith.addf %189, %190 : vector<8x128xf32>
    %192 = math.tanh %191 : vector<8x128xf32>
    %193 = arith.mulf %188, %192 : vector<8x128xf32>
    %c0_87 = arith.constant 0 : index
    %c0_88 = arith.constant 0 : index
    %194 = vector.load %arg6[%c0_87, %c0_88] : memref<128x512xf32, #tpu.memory_space<vmem>>, vector<128x512xf32>
    %cst_89 = arith.constant dense<0.000000e+00> : vector<8x512xf32>
    %195 = tpu.matmul %193, %194, %cst_89 {dimension_numbers = #tpu.dot_dimension_numbers<[1], [0], [0], [1], [0, 0, 1, 1], [], []>} : vector<8x128xf32>, vector<128x512xf32>, vector<8x512xf32> -> vector<8x512xf32>
    %c0_90 = arith.constant 0 : index
    %c0_91 = arith.constant 0 : index
    %196 = vector.load %arg7[%c0_90, %c0_91] : memref<128x512xf32, #tpu.memory_space<vmem>>, vector<128x512xf32>
    %cst_92 = arith.constant dense<0.000000e+00> : vector<8x512xf32>
    %197 = tpu.matmul %169, %196, %cst_92 {dimension_numbers = #tpu.dot_dimension_numbers<[1], [0], [0], [1], [0, 0, 1, 1], [], []>} : vector<8x128xf32>, vector<128x512xf32>, vector<8x512xf32> -> vector<8x512xf32>
    %198 = arith.addf %195, %197 : vector<8x512xf32>
    %c0_93 = arith.constant 0 : index
    %c0_94 = arith.constant 0 : index
    %199 = vector.load %arg8[%c0_93, %c0_94] : memref<1x512xf32, #tpu.memory_space<vmem>>, vector<1x512xf32>
    %200 = vector.broadcast %199 : vector<1x512xf32> to vector<8x512xf32>
    %201 = arith.addf %198, %200 : vector<8x512xf32>
    %202 = vector.extract_strided_slice %201 {offsets = [0, 0], sizes = [8, 384], strides = [1, 1]} : vector<8x512xf32> to vector<8x384xf32>
    %cst_95 = arith.constant 5.000000e-01 : f32
    %203 = vector.broadcast %cst_95 : f32 to vector<8x384xf32>
    %204 = arith.mulf %203, %202 : vector<8x384xf32>
    %205 = math.tanh %204 : vector<8x384xf32>
    %cst_96 = arith.constant 5.000000e-01 : f32
    %206 = vector.broadcast %cst_96 : f32 to vector<8x384xf32>
    %207 = arith.mulf %206, %205 : vector<8x384xf32>
    %cst_97 = arith.constant 5.000000e-01 : f32
    %208 = vector.broadcast %cst_97 : f32 to vector<8x384xf32>
    %209 = arith.addf %207, %208 : vector<8x384xf32>
    %210 = vector.extract_strided_slice %201 {offsets = [0, 384], sizes = [8, 128], strides = [1, 1]} : vector<8x512xf32> to vector<8x128xf32>
    %211 = math.tanh %210 : vector<8x128xf32>
    %212 = vector.extract_strided_slice %209 {offsets = [0, 0], sizes = [8, 128], strides = [1, 1]} : vector<8x384xf32> to vector<8x128xf32>
    %213 = vector.extract_strided_slice %209 {offsets = [0, 128], sizes = [8, 128], strides = [1, 1]} : vector<8x384xf32> to vector<8x128xf32>
    %214 = vector.extract_strided_slice %209 {offsets = [0, 256], sizes = [8, 128], strides = [1, 1]} : vector<8x384xf32> to vector<8x128xf32>
    %215 = arith.mulf %213, %167 : vector<8x128xf32>
    %216 = arith.mulf %212, %211 : vector<8x128xf32>
    %217 = arith.addf %215, %216 : vector<8x128xf32>
    %218 = math.tanh %217 : vector<8x128xf32>
    %219 = arith.mulf %214, %218 : vector<8x128xf32>
    %c4_i32 = arith.constant 4 : i32
    %220 = arith.index_cast %c4_i32 : i32 to index
    %c0_98 = arith.constant 0 : index
    %c0_99 = arith.constant 0 : index
    %221 = vector.load %arg14[%220, %c0_98, %c0_99] : memref<8x8x512xf32, #tpu.memory_space<vmem>>, vector<1x8x512xf32>
    %222 = vector.shape_cast %221 : vector<1x8x512xf32> to vector<8x512xf32>
    %c0_100 = arith.constant 0 : index
    %c0_101 = arith.constant 0 : index
    %223 = vector.load %arg4[%c0_100, %c0_101] : memref<128x512xf32, #tpu.memory_space<vmem>>, vector<128x512xf32>
    %cst_102 = arith.constant dense<0.000000e+00> : vector<8x512xf32>
    %224 = tpu.matmul %193, %223, %cst_102 {dimension_numbers = #tpu.dot_dimension_numbers<[1], [0], [0], [1], [0, 0, 1, 1], [], []>} : vector<8x128xf32>, vector<128x512xf32>, vector<8x512xf32> -> vector<8x512xf32>
    %225 = arith.addf %222, %224 : vector<8x512xf32>
    %226 = vector.extract_strided_slice %225 {offsets = [0, 0], sizes = [8, 384], strides = [1, 1]} : vector<8x512xf32> to vector<8x384xf32>
    %cst_103 = arith.constant 5.000000e-01 : f32
    %227 = vector.broadcast %cst_103 : f32 to vector<8x384xf32>
    %228 = arith.mulf %227, %226 : vector<8x384xf32>
    %229 = math.tanh %228 : vector<8x384xf32>
    %cst_104 = arith.constant 5.000000e-01 : f32
    %230 = vector.broadcast %cst_104 : f32 to vector<8x384xf32>
    %231 = arith.mulf %230, %229 : vector<8x384xf32>
    %cst_105 = arith.constant 5.000000e-01 : f32
    %232 = vector.broadcast %cst_105 : f32 to vector<8x384xf32>
    %233 = arith.addf %231, %232 : vector<8x384xf32>
    %234 = vector.extract_strided_slice %225 {offsets = [0, 384], sizes = [8, 128], strides = [1, 1]} : vector<8x512xf32> to vector<8x128xf32>
    %235 = math.tanh %234 : vector<8x128xf32>
    %236 = vector.extract_strided_slice %233 {offsets = [0, 0], sizes = [8, 128], strides = [1, 1]} : vector<8x384xf32> to vector<8x128xf32>
    %237 = vector.extract_strided_slice %233 {offsets = [0, 128], sizes = [8, 128], strides = [1, 1]} : vector<8x384xf32> to vector<8x128xf32>
    %238 = vector.extract_strided_slice %233 {offsets = [0, 256], sizes = [8, 128], strides = [1, 1]} : vector<8x384xf32> to vector<8x128xf32>
    %239 = arith.mulf %237, %191 : vector<8x128xf32>
    %240 = arith.mulf %236, %235 : vector<8x128xf32>
    %241 = arith.addf %239, %240 : vector<8x128xf32>
    %242 = math.tanh %241 : vector<8x128xf32>
    %243 = arith.mulf %238, %242 : vector<8x128xf32>
    %c0_106 = arith.constant 0 : index
    %c0_107 = arith.constant 0 : index
    %244 = vector.load %arg6[%c0_106, %c0_107] : memref<128x512xf32, #tpu.memory_space<vmem>>, vector<128x512xf32>
    %cst_108 = arith.constant dense<0.000000e+00> : vector<8x512xf32>
    %245 = tpu.matmul %243, %244, %cst_108 {dimension_numbers = #tpu.dot_dimension_numbers<[1], [0], [0], [1], [0, 0, 1, 1], [], []>} : vector<8x128xf32>, vector<128x512xf32>, vector<8x512xf32> -> vector<8x512xf32>
    %c0_109 = arith.constant 0 : index
    %c0_110 = arith.constant 0 : index
    %246 = vector.load %arg7[%c0_109, %c0_110] : memref<128x512xf32, #tpu.memory_space<vmem>>, vector<128x512xf32>
    %cst_111 = arith.constant dense<0.000000e+00> : vector<8x512xf32>
    %247 = tpu.matmul %219, %246, %cst_111 {dimension_numbers = #tpu.dot_dimension_numbers<[1], [0], [0], [1], [0, 0, 1, 1], [], []>} : vector<8x128xf32>, vector<128x512xf32>, vector<8x512xf32> -> vector<8x512xf32>
    %248 = arith.addf %245, %247 : vector<8x512xf32>
    %c0_112 = arith.constant 0 : index
    %c0_113 = arith.constant 0 : index
    %249 = vector.load %arg8[%c0_112, %c0_113] : memref<1x512xf32, #tpu.memory_space<vmem>>, vector<1x512xf32>
    %250 = vector.broadcast %249 : vector<1x512xf32> to vector<8x512xf32>
    %251 = arith.addf %248, %250 : vector<8x512xf32>
    %252 = vector.extract_strided_slice %251 {offsets = [0, 0], sizes = [8, 384], strides = [1, 1]} : vector<8x512xf32> to vector<8x384xf32>
    %cst_114 = arith.constant 5.000000e-01 : f32
    %253 = vector.broadcast %cst_114 : f32 to vector<8x384xf32>
    %254 = arith.mulf %253, %252 : vector<8x384xf32>
    %255 = math.tanh %254 : vector<8x384xf32>
    %cst_115 = arith.constant 5.000000e-01 : f32
    %256 = vector.broadcast %cst_115 : f32 to vector<8x384xf32>
    %257 = arith.mulf %256, %255 : vector<8x384xf32>
    %cst_116 = arith.constant 5.000000e-01 : f32
    %258 = vector.broadcast %cst_116 : f32 to vector<8x384xf32>
    %259 = arith.addf %257, %258 : vector<8x384xf32>
    %260 = vector.extract_strided_slice %251 {offsets = [0, 384], sizes = [8, 128], strides = [1, 1]} : vector<8x512xf32> to vector<8x128xf32>
    %261 = math.tanh %260 : vector<8x128xf32>
    %262 = vector.extract_strided_slice %259 {offsets = [0, 0], sizes = [8, 128], strides = [1, 1]} : vector<8x384xf32> to vector<8x128xf32>
    %263 = vector.extract_strided_slice %259 {offsets = [0, 128], sizes = [8, 128], strides = [1, 1]} : vector<8x384xf32> to vector<8x128xf32>
    %264 = vector.extract_strided_slice %259 {offsets = [0, 256], sizes = [8, 128], strides = [1, 1]} : vector<8x384xf32> to vector<8x128xf32>
    %265 = arith.mulf %263, %217 : vector<8x128xf32>
    %266 = arith.mulf %262, %261 : vector<8x128xf32>
    %267 = arith.addf %265, %266 : vector<8x128xf32>
    %268 = math.tanh %267 : vector<8x128xf32>
    %269 = arith.mulf %264, %268 : vector<8x128xf32>
    %c5_i32 = arith.constant 5 : i32
    %270 = arith.index_cast %c5_i32 : i32 to index
    %c0_117 = arith.constant 0 : index
    %c0_118 = arith.constant 0 : index
    %271 = vector.load %arg14[%270, %c0_117, %c0_118] : memref<8x8x512xf32, #tpu.memory_space<vmem>>, vector<1x8x512xf32>
    %272 = vector.shape_cast %271 : vector<1x8x512xf32> to vector<8x512xf32>
    %c0_119 = arith.constant 0 : index
    %c0_120 = arith.constant 0 : index
    %273 = vector.load %arg4[%c0_119, %c0_120] : memref<128x512xf32, #tpu.memory_space<vmem>>, vector<128x512xf32>
    %cst_121 = arith.constant dense<0.000000e+00> : vector<8x512xf32>
    %274 = tpu.matmul %243, %273, %cst_121 {dimension_numbers = #tpu.dot_dimension_numbers<[1], [0], [0], [1], [0, 0, 1, 1], [], []>} : vector<8x128xf32>, vector<128x512xf32>, vector<8x512xf32> -> vector<8x512xf32>
    %275 = arith.addf %272, %274 : vector<8x512xf32>
    %276 = vector.extract_strided_slice %275 {offsets = [0, 0], sizes = [8, 384], strides = [1, 1]} : vector<8x512xf32> to vector<8x384xf32>
    %cst_122 = arith.constant 5.000000e-01 : f32
    %277 = vector.broadcast %cst_122 : f32 to vector<8x384xf32>
    %278 = arith.mulf %277, %276 : vector<8x384xf32>
    %279 = math.tanh %278 : vector<8x384xf32>
    %cst_123 = arith.constant 5.000000e-01 : f32
    %280 = vector.broadcast %cst_123 : f32 to vector<8x384xf32>
    %281 = arith.mulf %280, %279 : vector<8x384xf32>
    %cst_124 = arith.constant 5.000000e-01 : f32
    %282 = vector.broadcast %cst_124 : f32 to vector<8x384xf32>
    %283 = arith.addf %281, %282 : vector<8x384xf32>
    %284 = vector.extract_strided_slice %275 {offsets = [0, 384], sizes = [8, 128], strides = [1, 1]} : vector<8x512xf32> to vector<8x128xf32>
    %285 = math.tanh %284 : vector<8x128xf32>
    %286 = vector.extract_strided_slice %283 {offsets = [0, 0], sizes = [8, 128], strides = [1, 1]} : vector<8x384xf32> to vector<8x128xf32>
    %287 = vector.extract_strided_slice %283 {offsets = [0, 128], sizes = [8, 128], strides = [1, 1]} : vector<8x384xf32> to vector<8x128xf32>
    %288 = vector.extract_strided_slice %283 {offsets = [0, 256], sizes = [8, 128], strides = [1, 1]} : vector<8x384xf32> to vector<8x128xf32>
    %289 = arith.mulf %287, %241 : vector<8x128xf32>
    %290 = arith.mulf %286, %285 : vector<8x128xf32>
    %291 = arith.addf %289, %290 : vector<8x128xf32>
    %292 = math.tanh %291 : vector<8x128xf32>
    %293 = arith.mulf %288, %292 : vector<8x128xf32>
    %c0_125 = arith.constant 0 : index
    %c0_126 = arith.constant 0 : index
    %294 = vector.load %arg6[%c0_125, %c0_126] : memref<128x512xf32, #tpu.memory_space<vmem>>, vector<128x512xf32>
    %cst_127 = arith.constant dense<0.000000e+00> : vector<8x512xf32>
    %295 = tpu.matmul %293, %294, %cst_127 {dimension_numbers = #tpu.dot_dimension_numbers<[1], [0], [0], [1], [0, 0, 1, 1], [], []>} : vector<8x128xf32>, vector<128x512xf32>, vector<8x512xf32> -> vector<8x512xf32>
    %c0_128 = arith.constant 0 : index
    %c0_129 = arith.constant 0 : index
    %296 = vector.load %arg7[%c0_128, %c0_129] : memref<128x512xf32, #tpu.memory_space<vmem>>, vector<128x512xf32>
    %cst_130 = arith.constant dense<0.000000e+00> : vector<8x512xf32>
    %297 = tpu.matmul %269, %296, %cst_130 {dimension_numbers = #tpu.dot_dimension_numbers<[1], [0], [0], [1], [0, 0, 1, 1], [], []>} : vector<8x128xf32>, vector<128x512xf32>, vector<8x512xf32> -> vector<8x512xf32>
    %298 = arith.addf %295, %297 : vector<8x512xf32>
    %c0_131 = arith.constant 0 : index
    %c0_132 = arith.constant 0 : index
    %299 = vector.load %arg8[%c0_131, %c0_132] : memref<1x512xf32, #tpu.memory_space<vmem>>, vector<1x512xf32>
    %300 = vector.broadcast %299 : vector<1x512xf32> to vector<8x512xf32>
    %301 = arith.addf %298, %300 : vector<8x512xf32>
    %302 = vector.extract_strided_slice %301 {offsets = [0, 0], sizes = [8, 384], strides = [1, 1]} : vector<8x512xf32> to vector<8x384xf32>
    %cst_133 = arith.constant 5.000000e-01 : f32
    %303 = vector.broadcast %cst_133 : f32 to vector<8x384xf32>
    %304 = arith.mulf %303, %302 : vector<8x384xf32>
    %305 = math.tanh %304 : vector<8x384xf32>
    %cst_134 = arith.constant 5.000000e-01 : f32
    %306 = vector.broadcast %cst_134 : f32 to vector<8x384xf32>
    %307 = arith.mulf %306, %305 : vector<8x384xf32>
    %cst_135 = arith.constant 5.000000e-01 : f32
    %308 = vector.broadcast %cst_135 : f32 to vector<8x384xf32>
    %309 = arith.addf %307, %308 : vector<8x384xf32>
    %310 = vector.extract_strided_slice %301 {offsets = [0, 384], sizes = [8, 128], strides = [1, 1]} : vector<8x512xf32> to vector<8x128xf32>
    %311 = math.tanh %310 : vector<8x128xf32>
    %312 = vector.extract_strided_slice %309 {offsets = [0, 0], sizes = [8, 128], strides = [1, 1]} : vector<8x384xf32> to vector<8x128xf32>
    %313 = vector.extract_strided_slice %309 {offsets = [0, 128], sizes = [8, 128], strides = [1, 1]} : vector<8x384xf32> to vector<8x128xf32>
    %314 = vector.extract_strided_slice %309 {offsets = [0, 256], sizes = [8, 128], strides = [1, 1]} : vector<8x384xf32> to vector<8x128xf32>
    %315 = arith.mulf %313, %267 : vector<8x128xf32>
    %316 = arith.mulf %312, %311 : vector<8x128xf32>
    %317 = arith.addf %315, %316 : vector<8x128xf32>
    %318 = math.tanh %317 : vector<8x128xf32>
    %319 = arith.mulf %314, %318 : vector<8x128xf32>
    %c6_i32 = arith.constant 6 : i32
    %320 = arith.index_cast %c6_i32 : i32 to index
    %c0_136 = arith.constant 0 : index
    %c0_137 = arith.constant 0 : index
    %321 = vector.load %arg14[%320, %c0_136, %c0_137] : memref<8x8x512xf32, #tpu.memory_space<vmem>>, vector<1x8x512xf32>
    %322 = vector.shape_cast %321 : vector<1x8x512xf32> to vector<8x512xf32>
    %c0_138 = arith.constant 0 : index
    %c0_139 = arith.constant 0 : index
    %323 = vector.load %arg4[%c0_138, %c0_139] : memref<128x512xf32, #tpu.memory_space<vmem>>, vector<128x512xf32>
    %cst_140 = arith.constant dense<0.000000e+00> : vector<8x512xf32>
    %324 = tpu.matmul %293, %323, %cst_140 {dimension_numbers = #tpu.dot_dimension_numbers<[1], [0], [0], [1], [0, 0, 1, 1], [], []>} : vector<8x128xf32>, vector<128x512xf32>, vector<8x512xf32> -> vector<8x512xf32>
    %325 = arith.addf %322, %324 : vector<8x512xf32>
    %326 = vector.extract_strided_slice %325 {offsets = [0, 0], sizes = [8, 384], strides = [1, 1]} : vector<8x512xf32> to vector<8x384xf32>
    %cst_141 = arith.constant 5.000000e-01 : f32
    %327 = vector.broadcast %cst_141 : f32 to vector<8x384xf32>
    %328 = arith.mulf %327, %326 : vector<8x384xf32>
    %329 = math.tanh %328 : vector<8x384xf32>
    %cst_142 = arith.constant 5.000000e-01 : f32
    %330 = vector.broadcast %cst_142 : f32 to vector<8x384xf32>
    %331 = arith.mulf %330, %329 : vector<8x384xf32>
    %cst_143 = arith.constant 5.000000e-01 : f32
    %332 = vector.broadcast %cst_143 : f32 to vector<8x384xf32>
    %333 = arith.addf %331, %332 : vector<8x384xf32>
    %334 = vector.extract_strided_slice %325 {offsets = [0, 384], sizes = [8, 128], strides = [1, 1]} : vector<8x512xf32> to vector<8x128xf32>
    %335 = math.tanh %334 : vector<8x128xf32>
    %336 = vector.extract_strided_slice %333 {offsets = [0, 0], sizes = [8, 128], strides = [1, 1]} : vector<8x384xf32> to vector<8x128xf32>
    %337 = vector.extract_strided_slice %333 {offsets = [0, 128], sizes = [8, 128], strides = [1, 1]} : vector<8x384xf32> to vector<8x128xf32>
    %338 = vector.extract_strided_slice %333 {offsets = [0, 256], sizes = [8, 128], strides = [1, 1]} : vector<8x384xf32> to vector<8x128xf32>
    %339 = arith.mulf %337, %291 : vector<8x128xf32>
    %340 = arith.mulf %336, %335 : vector<8x128xf32>
    %341 = arith.addf %339, %340 : vector<8x128xf32>
    %342 = math.tanh %341 : vector<8x128xf32>
    %343 = arith.mulf %338, %342 : vector<8x128xf32>
    %c0_144 = arith.constant 0 : index
    %c0_145 = arith.constant 0 : index
    %344 = vector.load %arg6[%c0_144, %c0_145] : memref<128x512xf32, #tpu.memory_space<vmem>>, vector<128x512xf32>
    %cst_146 = arith.constant dense<0.000000e+00> : vector<8x512xf32>
    %345 = tpu.matmul %343, %344, %cst_146 {dimension_numbers = #tpu.dot_dimension_numbers<[1], [0], [0], [1], [0, 0, 1, 1], [], []>} : vector<8x128xf32>, vector<128x512xf32>, vector<8x512xf32> -> vector<8x512xf32>
    %c0_147 = arith.constant 0 : index
    %c0_148 = arith.constant 0 : index
    %346 = vector.load %arg7[%c0_147, %c0_148] : memref<128x512xf32, #tpu.memory_space<vmem>>, vector<128x512xf32>
    %cst_149 = arith.constant dense<0.000000e+00> : vector<8x512xf32>
    %347 = tpu.matmul %319, %346, %cst_149 {dimension_numbers = #tpu.dot_dimension_numbers<[1], [0], [0], [1], [0, 0, 1, 1], [], []>} : vector<8x128xf32>, vector<128x512xf32>, vector<8x512xf32> -> vector<8x512xf32>
    %348 = arith.addf %345, %347 : vector<8x512xf32>
    %c0_150 = arith.constant 0 : index
    %c0_151 = arith.constant 0 : index
    %349 = vector.load %arg8[%c0_150, %c0_151] : memref<1x512xf32, #tpu.memory_space<vmem>>, vector<1x512xf32>
    %350 = vector.broadcast %349 : vector<1x512xf32> to vector<8x512xf32>
    %351 = arith.addf %348, %350 : vector<8x512xf32>
    %352 = vector.extract_strided_slice %351 {offsets = [0, 0], sizes = [8, 384], strides = [1, 1]} : vector<8x512xf32> to vector<8x384xf32>
    %cst_152 = arith.constant 5.000000e-01 : f32
    %353 = vector.broadcast %cst_152 : f32 to vector<8x384xf32>
    %354 = arith.mulf %353, %352 : vector<8x384xf32>
    %355 = math.tanh %354 : vector<8x384xf32>
    %cst_153 = arith.constant 5.000000e-01 : f32
    %356 = vector.broadcast %cst_153 : f32 to vector<8x384xf32>
    %357 = arith.mulf %356, %355 : vector<8x384xf32>
    %cst_154 = arith.constant 5.000000e-01 : f32
    %358 = vector.broadcast %cst_154 : f32 to vector<8x384xf32>
    %359 = arith.addf %357, %358 : vector<8x384xf32>
    %360 = vector.extract_strided_slice %351 {offsets = [0, 384], sizes = [8, 128], strides = [1, 1]} : vector<8x512xf32> to vector<8x128xf32>
    %361 = math.tanh %360 : vector<8x128xf32>
    %362 = vector.extract_strided_slice %359 {offsets = [0, 0], sizes = [8, 128], strides = [1, 1]} : vector<8x384xf32> to vector<8x128xf32>
    %363 = vector.extract_strided_slice %359 {offsets = [0, 128], sizes = [8, 128], strides = [1, 1]} : vector<8x384xf32> to vector<8x128xf32>
    %364 = vector.extract_strided_slice %359 {offsets = [0, 256], sizes = [8, 128], strides = [1, 1]} : vector<8x384xf32> to vector<8x128xf32>
    %365 = arith.mulf %363, %317 : vector<8x128xf32>
    %366 = arith.mulf %362, %361 : vector<8x128xf32>
    %367 = arith.addf %365, %366 : vector<8x128xf32>
    %368 = math.tanh %367 : vector<8x128xf32>
    %369 = arith.mulf %364, %368 : vector<8x128xf32>
    %c7_i32 = arith.constant 7 : i32
    %370 = arith.index_cast %c7_i32 : i32 to index
    %c0_155 = arith.constant 0 : index
    %c0_156 = arith.constant 0 : index
    %371 = vector.load %arg14[%370, %c0_155, %c0_156] : memref<8x8x512xf32, #tpu.memory_space<vmem>>, vector<1x8x512xf32>
    %372 = vector.shape_cast %371 : vector<1x8x512xf32> to vector<8x512xf32>
    %c0_157 = arith.constant 0 : index
    %c0_158 = arith.constant 0 : index
    %373 = vector.load %arg4[%c0_157, %c0_158] : memref<128x512xf32, #tpu.memory_space<vmem>>, vector<128x512xf32>
    %cst_159 = arith.constant dense<0.000000e+00> : vector<8x512xf32>
    %374 = tpu.matmul %343, %373, %cst_159 {dimension_numbers = #tpu.dot_dimension_numbers<[1], [0], [0], [1], [0, 0, 1, 1], [], []>} : vector<8x128xf32>, vector<128x512xf32>, vector<8x512xf32> -> vector<8x512xf32>
    %375 = arith.addf %372, %374 : vector<8x512xf32>
    %376 = vector.extract_strided_slice %375 {offsets = [0, 0], sizes = [8, 384], strides = [1, 1]} : vector<8x512xf32> to vector<8x384xf32>
    %cst_160 = arith.constant 5.000000e-01 : f32
    %377 = vector.broadcast %cst_160 : f32 to vector<8x384xf32>
    %378 = arith.mulf %377, %376 : vector<8x384xf32>
    %379 = math.tanh %378 : vector<8x384xf32>
    %cst_161 = arith.constant 5.000000e-01 : f32
    %380 = vector.broadcast %cst_161 : f32 to vector<8x384xf32>
    %381 = arith.mulf %380, %379 : vector<8x384xf32>
    %cst_162 = arith.constant 5.000000e-01 : f32
    %382 = vector.broadcast %cst_162 : f32 to vector<8x384xf32>
    %383 = arith.addf %381, %382 : vector<8x384xf32>
    %384 = vector.extract_strided_slice %375 {offsets = [0, 384], sizes = [8, 128], strides = [1, 1]} : vector<8x512xf32> to vector<8x128xf32>
    %385 = math.tanh %384 : vector<8x128xf32>
    %386 = vector.extract_strided_slice %383 {offsets = [0, 0], sizes = [8, 128], strides = [1, 1]} : vector<8x384xf32> to vector<8x128xf32>
    %387 = vector.extract_strided_slice %383 {offsets = [0, 128], sizes = [8, 128], strides = [1, 1]} : vector<8x384xf32> to vector<8x128xf32>
    %388 = vector.extract_strided_slice %383 {offsets = [0, 256], sizes = [8, 128], strides = [1, 1]} : vector<8x384xf32> to vector<8x128xf32>
    %389 = arith.mulf %387, %341 : vector<8x128xf32>
    %390 = arith.mulf %386, %385 : vector<8x128xf32>
    %391 = arith.addf %389, %390 : vector<8x128xf32>
    %392 = math.tanh %391 : vector<8x128xf32>
    %393 = arith.mulf %388, %392 : vector<8x128xf32>
    %c0_163 = arith.constant 0 : index
    %c0_164 = arith.constant 0 : index
    %394 = vector.load %arg6[%c0_163, %c0_164] : memref<128x512xf32, #tpu.memory_space<vmem>>, vector<128x512xf32>
    %cst_165 = arith.constant dense<0.000000e+00> : vector<8x512xf32>
    %395 = tpu.matmul %393, %394, %cst_165 {dimension_numbers = #tpu.dot_dimension_numbers<[1], [0], [0], [1], [0, 0, 1, 1], [], []>} : vector<8x128xf32>, vector<128x512xf32>, vector<8x512xf32> -> vector<8x512xf32>
    %c0_166 = arith.constant 0 : index
    %c0_167 = arith.constant 0 : index
    %396 = vector.load %arg7[%c0_166, %c0_167] : memref<128x512xf32, #tpu.memory_space<vmem>>, vector<128x512xf32>
    %cst_168 = arith.constant dense<0.000000e+00> : vector<8x512xf32>
    %397 = tpu.matmul %369, %396, %cst_168 {dimension_numbers = #tpu.dot_dimension_numbers<[1], [0], [0], [1], [0, 0, 1, 1], [], []>} : vector<8x128xf32>, vector<128x512xf32>, vector<8x512xf32> -> vector<8x512xf32>
    %398 = arith.addf %395, %397 : vector<8x512xf32>
    %c0_169 = arith.constant 0 : index
    %c0_170 = arith.constant 0 : index
    %399 = vector.load %arg8[%c0_169, %c0_170] : memref<1x512xf32, #tpu.memory_space<vmem>>, vector<1x512xf32>
    %400 = vector.broadcast %399 : vector<1x512xf32> to vector<8x512xf32>
    %401 = arith.addf %398, %400 : vector<8x512xf32>
    %402 = vector.extract_strided_slice %401 {offsets = [0, 0], sizes = [8, 384], strides = [1, 1]} : vector<8x512xf32> to vector<8x384xf32>
    %cst_171 = arith.constant 5.000000e-01 : f32
    %403 = vector.broadcast %cst_171 : f32 to vector<8x384xf32>
    %404 = arith.mulf %403, %402 : vector<8x384xf32>
    %405 = math.tanh %404 : vector<8x384xf32>
    %cst_172 = arith.constant 5.000000e-01 : f32
    %406 = vector.broadcast %cst_172 : f32 to vector<8x384xf32>
    %407 = arith.mulf %406, %405 : vector<8x384xf32>
    %cst_173 = arith.constant 5.000000e-01 : f32
    %408 = vector.broadcast %cst_173 : f32 to vector<8x384xf32>
    %409 = arith.addf %407, %408 : vector<8x384xf32>
    %410 = vector.extract_strided_slice %401 {offsets = [0, 384], sizes = [8, 128], strides = [1, 1]} : vector<8x512xf32> to vector<8x128xf32>
    %411 = math.tanh %410 : vector<8x128xf32>
    %412 = vector.extract_strided_slice %409 {offsets = [0, 0], sizes = [8, 128], strides = [1, 1]} : vector<8x384xf32> to vector<8x128xf32>
    %413 = vector.extract_strided_slice %409 {offsets = [0, 128], sizes = [8, 128], strides = [1, 1]} : vector<8x384xf32> to vector<8x128xf32>
    %414 = vector.extract_strided_slice %409 {offsets = [0, 256], sizes = [8, 128], strides = [1, 1]} : vector<8x384xf32> to vector<8x128xf32>
    %415 = arith.mulf %413, %367 : vector<8x128xf32>
    %416 = arith.mulf %412, %411 : vector<8x128xf32>
    %417 = arith.addf %415, %416 : vector<8x128xf32>
    %418 = math.tanh %417 : vector<8x128xf32>
    %419 = arith.mulf %414, %418 : vector<8x128xf32>
    %c8_i32 = arith.constant 8 : i32
    %c0_174 = arith.constant 0 : index
    %c0_175 = arith.constant 0 : index
    %c0_176 = arith.constant 0 : index
    %420 = vector.load %arg12[%c0_174, %c0_175, %c0_176] : memref<2x8x128xf32, #tpu.memory_space<vmem>>, vector<1x8x128xf32>
    %421 = vector.shape_cast %420 : vector<1x8x128xf32> to vector<8x128xf32>
    %422 = vector.shape_cast %393 : vector<8x128xf32> to vector<1x8x128xf32>
    tpu.vector_store %arg12[%c0_174, %c0_175, %c0_176], %422 {strides = array<i32>} : memref<2x8x128xf32, #tpu.memory_space<vmem>>, vector<1x8x128xf32>,
    %c0_177 = arith.constant 0 : index
    %c0_178 = arith.constant 0 : index
    %c0_179 = arith.constant 0 : index
    %423 = vector.load %arg13[%c0_177, %c0_178, %c0_179] : memref<2x8x128xf32, #tpu.memory_space<vmem>>, vector<1x8x128xf32>
    %424 = vector.shape_cast %423 : vector<1x8x128xf32> to vector<8x128xf32>
    %425 = vector.shape_cast %391 : vector<8x128xf32> to vector<1x8x128xf32>
    tpu.vector_store %arg13[%c0_177, %c0_178, %c0_179], %425 {strides = array<i32>} : memref<2x8x128xf32, #tpu.memory_space<vmem>>, vector<1x8x128xf32>,
    %c1_180 = arith.constant 1 : index
    %c0_181 = arith.constant 0 : index
    %c0_182 = arith.constant 0 : index
    %426 = vector.load %arg12[%c1_180, %c0_181, %c0_182] : memref<2x8x128xf32, #tpu.memory_space<vmem>>, vector<1x8x128xf32>
    %427 = vector.shape_cast %426 : vector<1x8x128xf32> to vector<8x128xf32>
    %428 = vector.shape_cast %419 : vector<8x128xf32> to vector<1x8x128xf32>
    tpu.vector_store %arg12[%c1_180, %c0_181, %c0_182], %428 {strides = array<i32>} : memref<2x8x128xf32, #tpu.memory_space<vmem>>, vector<1x8x128xf32>,
    %c1_183 = arith.constant 1 : index
    %c0_184 = arith.constant 0 : index
    %c0_185 = arith.constant 0 : index
    %429 = vector.load %arg13[%c1_183, %c0_184, %c0_185] : memref<2x8x128xf32, #tpu.memory_space<vmem>>, vector<1x8x128xf32>
    %430 = vector.shape_cast %429 : vector<1x8x128xf32> to vector<8x128xf32>
    %431 = vector.shape_cast %417 : vector<8x128xf32> to vector<1x8x128xf32>
    tpu.vector_store %arg13[%c1_183, %c0_184, %c0_185], %431 {strides = array<i32>} : memref<2x8x128xf32, #tpu.memory_space<vmem>>, vector<1x8x128xf32>,
    %c0_i32_186 = arith.constant 0 : i32
    %432 = arith.cmpi eq, %arg1, %c0_i32_186 : i32
    %433 = arith.extui %432 : i1 to i32
    %c0_i32_187 = arith.constant 0 : i32
    %434 = arith.cmpi ne, %433, %c0_i32_187 : i32
    scf.if %434 {
      %c0_188 = arith.constant 0 : index
      %c0_189 = arith.constant 0 : index
      %435 = vector.load %arg9[%c0_188, %c0_189] : memref<128x128xf32, #tpu.memory_space<vmem>>, vector<128x128xf32>
      %cst_190 = arith.constant dense<0.000000e+00> : vector<8x128xf32>
      %436 = tpu.matmul %419, %435, %cst_190 {dimension_numbers = #tpu.dot_dimension_numbers<[1], [0], [0], [1], [0, 0, 1, 1], [], []>} : vector<8x128xf32>, vector<128x128xf32>, vector<8x128xf32> -> vector<8x128xf32>
      %c0_191 = arith.constant 0 : index
      %c0_192 = arith.constant 0 : index
      %437 = vector.load %arg10[%c0_191, %c0_192] : memref<1x128xf32, #tpu.memory_space<vmem>>, vector<1x128xf32>
      %438 = vector.broadcast %437 : vector<1x128xf32> to vector<8x128xf32>
      %439 = arith.addf %436, %438 : vector<8x128xf32>
      %c0_193 = arith.constant 0 : index
      %c0_194 = arith.constant 0 : index
      %440 = vector.load %arg11[%c0_193, %c0_194] : memref<8x128xf32, #tpu.memory_space<vmem>>, vector<8x128xf32>
      tpu.vector_store %arg11[%c0_193, %c0_194], %439 {strides = array<i32>} : memref<8x128xf32, #tpu.memory_space<vmem>>, vector<8x128xf32>,
    } else {
    }
    return
  }
  func.func @transform_0(%arg0: i32, %arg1: i32) -> (i32, i32, i32) {
    %c0_i32 = arith.constant 0 : i32
    %c0_i32_0 = arith.constant 0 : i32
    return %arg1, %arg0, %c0_i32 : i32, i32, i32
  }
  func.func @transform_1(%arg0: i32, %arg1: i32) -> (i32, i32) {
    %c0_i32 = arith.constant 0 : i32
    %c0_i32_0 = arith.constant 0 : i32
    %c0_i32_1 = arith.constant 0 : i32
    return %c0_i32, %c0_i32_0 : i32, i32
  }
  func.func @transform_2(%arg0: i32, %arg1: i32) -> (i32, i32) {
    %c0_i32 = arith.constant 0 : i32
    %c0_i32_0 = arith.constant 0 : i32
    %c0_i32_1 = arith.constant 0 : i32
    return %c0_i32, %c0_i32_0 : i32, i32
  }
  func.func @transform_3(%arg0: i32, %arg1: i32) -> (i32, i32) {
    %c0_i32 = arith.constant 0 : i32
    %c0_i32_0 = arith.constant 0 : i32
    %c0_i32_1 = arith.constant 0 : i32
    return %c0_i32, %c0_i32_0 : i32, i32
  }
  func.func @transform_4(%arg0: i32, %arg1: i32) -> (i32, i32) {
    %c0_i32 = arith.constant 0 : i32
    %c0_i32_0 = arith.constant 0 : i32
    %c0_i32_1 = arith.constant 0 : i32
    return %c0_i32, %c0_i32_0 : i32, i32
  }
  func.func @transform_5(%arg0: i32, %arg1: i32) -> (i32, i32) {
    %c0_i32 = arith.constant 0 : i32
    %c0_i32_0 = arith.constant 0 : i32
    %c0_i32_1 = arith.constant 0 : i32
    return %c0_i32, %c0_i32_0 : i32, i32
  }
  func.func @transform_6(%arg0: i32, %arg1: i32) -> (i32, i32) {
    %c0_i32 = arith.constant 0 : i32
    %c0_i32_0 = arith.constant 0 : i32
    %c0_i32_1 = arith.constant 0 : i32
    return %c0_i32, %c0_i32_0 : i32, i32
  }
  func.func @transform_7(%arg0: i32, %arg1: i32) -> (i32, i32) {
    %c0_i32 = arith.constant 0 : i32
    %c0_i32_0 = arith.constant 0 : i32
    %c0_i32_1 = arith.constant 0 : i32
    return %c0_i32, %c0_i32_0 : i32, i32
  }
  func.func @transform_8(%arg0: i32, %arg1: i32) -> (i32, i32) {
    %c0_i32 = arith.constant 0 : i32
    %c0_i32_0 = arith.constant 0 : i32
    %c0_i32_1 = arith.constant 0 : i32
    return %c0_i32, %c0_i32_0 : i32, i32
  }
  func.func @transform_9(%arg0: i32, %arg1: i32) -> (i32, i32) {
    %c0_i32 = arith.constant 0 : i32
    %c0_i32_0 = arith.constant 0 : i32
    return %arg0, %c0_i32 : i32, i32
  }
}

</mosaic_0001>

<llo_original>
// kernel: tpu_custom_call.1
$region0: #{tpu_custom_call.1}
  #allocation0 [shape = 'u32[]', space=smem, size = 0x4, offset = 0x4, fixed_abs, tag = 'smem constant byte address 0x4 - core index']
  #allocation1 [shape = 'u32[72,128]{1,0:T(1,128)}', space=vmem, size = 0x9000, scoped, tag = 'internal scratch']
  #allocation2 [shape = 'f32[2,8,128]{2,1,0:T(8,128)}', space=vmem, size = 0x2000, scoped, tag = 'scratch operand']
  #allocation3 [shape = 'f32[2,8,128]{2,1,0:T(8,128)}', space=vmem, size = 0x2000, scoped, tag = 'scratch operand']
  #allocation4 [shape = 'f32[8,8,512]{2,1,0:T(8,128)}', space=vmem, size = 0x20000, scoped, tag = 'scratch operand']
  %s0 = inlined_call_operand.hbm [shape: f32[8,8,128], index: 0, kind: input, shape index: {}]
  %s1 = inlined_call_operand.hbm [shape: f32[128,512], index: 1, kind: input, shape index: {}]
  %s2 = inlined_call_operand.hbm [shape: f32[128,512], index: 2, kind: input, shape index: {}]
  %s3 = inlined_call_operand.hbm [shape: f32[1,512], index: 3, kind: input, shape index: {}]
  %s4 = inlined_call_operand.hbm [shape: f32[128,512], index: 4, kind: input, shape index: {}]
  %s5 = inlined_call_operand.hbm [shape: f32[128,512], index: 5, kind: input, shape index: {}]
  %s6 = inlined_call_operand.vmem [shape: f32[1,512], index: 6, kind: input, shape index: {}]
  %s7 = inlined_call_operand.hbm [shape: f32[128,128], index: 7, kind: input, shape index: {}]
  %s8 = inlined_call_operand.vmem [shape: f32[1,128], index: 8, kind: input, shape index: {}]
  %s9 = inlined_call_operand.hbm [shape: f32[8,128], index: 9, kind: output, shape index: {}]
  %s10 = sld [smem:[#allocation0]]
  $region82: #{tpu_custom_call.1} parent=0
    _
  %s12 = ssub.s32 1, %s10
  %s13 = scalar_select 0, %s12, %s10
  $region1: #{tpu_custom_call.1} parent=0
    #allocation5 [shape = 'u8[32768]{0}', space=vmem, size = 0x8000, scoped, tag = 'input window, operand 0, single buffered']
    #allocation6 [shape = 's32[1]{0}', space=sflag, size = 0x4, scoped, tag = 'scoped memory for tpu_custom_call.1']
    #allocation7 [shape = 's32[1]{0}', space=sflag, size = 0x4, scoped, tag = 'scoped memory for tpu_custom_call.1']
    #allocation8 [shape = 'u8[262144]{0}', space=vmem, size = 0x40000, scoped, tag = 'input window, operand 1, single buffered']
    #allocation9 [shape = 's32[1]{0}', space=sflag, size = 0x4, scoped, tag = 'scoped memory for tpu_custom_call.1']
    #allocation10 [shape = 'u8[262144]{0}', space=vmem, size = 0x40000, scoped, tag = 'input window, operand 2, single buffered']
    #allocation11 [shape = 'u8[2048]{0}', space=vmem, size = 0x800, scoped, tag = 'input window, operand 3, single buffered']
    #allocation12 [shape = 's32[1]{0}', space=sflag, size = 0x4, scoped, tag = 'scoped memory for tpu_custom_call.1']
    #allocation13 [shape = 'u8[262144]{0}', space=vmem, size = 0x40000, scoped, tag = 'input window, operand 4, single buffered']
    #allocation14 [shape = 'u8[262144]{0}', space=vmem, size = 0x40000, scoped, tag = 'input window, operand 5, single buffered']
    #allocation15 [shape = 's32[1]{0}', space=sflag, size = 0x4, scoped, tag = 'scoped memory for tpu_custom_call.1']
    #allocation16 [shape = 'u8[65536]{0}', space=vmem, size = 0x10000, scoped, tag = 'input window, operand 7, single buffered']
    #allocation17 [shape = 'u8[4096]{0}', space=vmem, size = 0x1000, scoped, tag = 'output window, operand 0, single buffered']
    %14 = vsyncpa [#allocation6], 0
    %15 = vsyncpa [#allocation9], 0
    %16 = vsyncpa [#allocation12], 0
    %17 = vsyncpa [#allocation15], 0
    %18 = vsyncpa [#allocation7], 0
    // Predicated region
    $region2: #{tpu_custom_call.1} parent=1 // pred_check
      _
    $region3: #{tpu_custom_call.1} parent=1 // pred_check_branch
      %20 = sbr.rel (0) target = $region5
    $region4: #{tpu_custom_call.1} parent=1 // pred_region
      %22 = vsyncadd [#allocation6], 0
      %s23 = sshll.u32 %s0, 4
      %s24 = int_to_ptr.hbm [resolvable:$true] %s23
      %s25 = sshll.u32 [#allocation5], 4
      %s26 = int_to_ptr.vmem [resolvable:$true] %s25
      %31 = dma.hbm_to_vmem [thread:$0]  %s24, 1024, %s26, [#allocation6], 128, 128, 8
    $region5: #{tpu_custom_call.1} parent=1 // pred_fallthru
      _
    // Predicated region
    $region6: #{tpu_custom_call.1} parent=1 // pred_check
      _
    $region7: #{tpu_custom_call.1} parent=1 // pred_check_branch
      %33 = sbr.rel (0) target = $region9
    $region8: #{tpu_custom_call.1} parent=1 // pred_region
      %35 = vsyncadd [#allocation9], 0
      %s36 = sshll.u32 %s1, 4
      %s37 = int_to_ptr.hbm [resolvable:$true] %s36
      %s38 = sshll.u32 [#allocation8], 4
      %s39 = int_to_ptr.vmem [resolvable:$true] %s38
      %44 = dma.hbm_to_vmem [thread:$0]  %s37, 8192, %s39, [#allocation9], 512, 512, 32
    $region9: #{tpu_custom_call.1} parent=1 // pred_fallthru
      _
    // Predicated region
    $region10: #{tpu_custom_call.1} parent=1 // pred_check
      _
    $region11: #{tpu_custom_call.1} parent=1 // pred_check_branch
      %46 = sbr.rel (0) target = $region13
    $region12: #{tpu_custom_call.1} parent=1 // pred_region
      %48 = vsyncadd [#allocation9], 0
      %s49 = sshll.u32 %s2, 4
      %s50 = int_to_ptr.hbm [resolvable:$true] %s49
      %s51 = sshll.u32 [#allocation10], 4
      %s52 = int_to_ptr.vmem [resolvable:$true] %s51
      %57 = dma.hbm_to_vmem [thread:$0]  %s50, 8192, %s52, [#allocation9], 512, 512, 32
    $region13: #{tpu_custom_call.1} parent=1 // pred_fallthru
      _
    // Predicated region
    $region14: #{tpu_custom_call.1} parent=1 // pred_check
      _
    $region15: #{tpu_custom_call.1} parent=1 // pred_check_branch
      %59 = sbr.rel (0) target = $region17
    $region16: #{tpu_custom_call.1} parent=1 // pred_region
      %61 = vsyncadd [#allocation12], 0
      %s63 = sshll.u32 %s3, 4
      %s64 = int_to_ptr.hbm [resolvable:$true] %s63
      %s65 = sshll.u32 [#allocation11], 4
      %s66 = int_to_ptr.vmem [resolvable:$true] %s65
      %68 = dma.hbm_to_vmem [thread:$0]  %s64, 64, %s66, [#allocation12]
    $region17: #{tpu_custom_call.1} parent=1 // pred_fallthru
      _
    // Predicated region
    $region18: #{tpu_custom_call.1} parent=1 // pred_check
      _
    $region19: #{tpu_custom_call.1} parent=1 // pred_check_branch
      %70 = sbr.rel (0) target = $region21
    $region20: #{tpu_custom_call.1} parent=1 // pred_region
      %72 = vsyncadd [#allocation12], 0
      %s73 = sshll.u32 %s4, 4
      %s74 = int_to_ptr.hbm [resolvable:$true] %s73
      %s75 = sshll.u32 [#allocation13], 4
      %s76 = int_to_ptr.vmem [resolvable:$true] %s75
      %81 = dma.hbm_to_vmem [thread:$0]  %s74, 8192, %s76, [#allocation12], 512, 512, 32
    $region21: #{tpu_custom_call.1} parent=1 // pred_fallthru
      _
    // Predicated region
    $region22: #{tpu_custom_call.1} parent=1 // pred_check
      _
    $region23: #{tpu_custom_call.1} parent=1 // pred_check_branch
      %83 = sbr.rel (0) target = $region25
    $region24: #{tpu_custom_call.1} parent=1 // pred_region
      %85 = vsyncadd [#allocation15], 0
      %s86 = sshll.u32 %s5, 4
      %s87 = int_to_ptr.hbm [resolvable:$true] %s86
      %s88 = sshll.u32 [#allocation14], 4
      %s89 = int_to_ptr.vmem [resolvable:$true] %s88
      %94 = dma.hbm_to_vmem [thread:$0]  %s87, 8192, %s89, [#allocation15], 512, 512, 32
    $region25: #{tpu_custom_call.1} parent=1 // pred_fallthru
      _
    // Predicated region
    $region26: #{tpu_custom_call.1} parent=1 // pred_check
      _
    $region27: #{tpu_custom_call.1} parent=1 // pred_check_branch
      %96 = sbr.rel (0) target = $region29
    $region28: #{tpu_custom_call.1} parent=1 // pred_region
      _
    $region29: #{tpu_custom_call.1} parent=1 // pred_fallthru
      _
    // Predicated region
    $region30: #{tpu_custom_call.1} parent=1 // pred_check
      _
    $region31: #{tpu_custom_call.1} parent=1 // pred_check_branch
      %98 = sbr.rel (0) target = $region33
    $region32: #{tpu_custom_call.1} parent=1 // pred_region
      %100 = vsyncadd [#allocation15], 0
      %s101 = sshll.u32 %s7, 4
      %s102 = int_to_ptr.hbm [resolvable:$true] %s101
      %s103 = sshll.u32 [#allocation16], 4
      %s104 = int_to_ptr.vmem [resolvable:$true] %s103
      %109 = dma.hbm_to_vmem [thread:$0]  %s102, 2048, %s104, [#allocation15], 128, 128, 8
    $region33: #{tpu_custom_call.1} parent=1 // pred_fallthru
      _
    // Predicated region
    $region34: #{tpu_custom_call.1} parent=1 // pred_check
      _
    $region35: #{tpu_custom_call.1} parent=1 // pred_check_branch
      %111 = sbr.rel (0) target = $region37
    $region36: #{tpu_custom_call.1} parent=1 // pred_region
      _
    $region37: #{tpu_custom_call.1} parent=1 // pred_fallthru
      _
    // Predicated region
    $region38: #{tpu_custom_call.1} parent=1 // pred_check
      _
    $region39: #{tpu_custom_call.1} parent=1 // pred_check_branch
      %113 = sbr.rel (0) target = $region41
    $region40: #{tpu_custom_call.1} parent=1 // pred_region
      %115 = dma.done [#allocation6], 1024
    $region41: #{tpu_custom_call.1} parent=1 // pred_fallthru
      _
    // Predicated region
    $region42: #{tpu_custom_call.1} parent=1 // pred_check
      _
    $region43: #{tpu_custom_call.1} parent=1 // pred_check_branch
      %117 = sbr.rel (0) target = $region45
    $region44: #{tpu_custom_call.1} parent=1 // pred_region
      %119 = dma.done [#allocation9], 8192
    $region45: #{tpu_custom_call.1} parent=1 // pred_fallthru
      _
    // Predicated region
    $region46: #{tpu_custom_call.1} parent=1 // pred_check
      _
    $region47: #{tpu_custom_call.1} parent=1 // pred_check_branch
      %121 = sbr.rel (0) target = $region49
    $region48: #{tpu_custom_call.1} parent=1 // pred_region
      %123 = dma.done [#allocation9], 8192
    $region49: #{tpu_custom_call.1} parent=1 // pred_fallthru
      _
    // Predicated region
    $region50: #{tpu_custom_call.1} parent=1 // pred_check
      _
    $region51: #{tpu_custom_call.1} parent=1 // pred_check_branch
      %125 = sbr.rel (0) target = $region53
    $region52: #{tpu_custom_call.1} parent=1 // pred_region
      %127 = dma.done [#allocation12], 64
    $region53: #{tpu_custom_call.1} parent=1 // pred_fallthru
      _
    // Predicated region
    $region54: #{tpu_custom_call.1} parent=1 // pred_check
      _
    $region55: #{tpu_custom_call.1} parent=1 // pred_check_branch
      %129 = sbr.rel (0) target = $region57
    $region56: #{tpu_custom_call.1} parent=1 // pred_region
      %131 = dma.done [#allocation12], 8192
    $region57: #{tpu_custom_call.1} parent=1 // pred_fallthru
      _
    // Predicated region
    $region58: #{tpu_custom_call.1} parent=1 // pred_check
      _
    $region59: #{tpu_custom_call.1} parent=1 // pred_check_branch
      %133 = sbr.rel (0) target = $region61
    $region60: #{tpu_custom_call.1} parent=1 // pred_region
      %135 = dma.done [#allocation15], 8192
    $region61: #{tpu_custom_call.1} parent=1 // pred_fallthru
      _
    // Predicated region
    $region62: #{tpu_custom_call.1} parent=1 // pred_check
      _
    $region63: #{tpu_custom_call.1} parent=1 // pred_check_branch
      %137 = sbr.rel (0) target = $region65
    $region64: #{tpu_custom_call.1} parent=1 // pred_region
      %139 = dma.done [#allocation15], 2048
    $region65: #{tpu_custom_call.1} parent=1 // pred_fallthru
      _
    %p140 = scmp.eq.s32.totalorder 0, 0
    // Predicated region
    $region66: #{tpu_custom_call.1} parent=1 // pred_check
      %p141 = pneg %p140
    $region67: #{tpu_custom_call.1} parent=1 // pred_check_branch
      %143 = sbr.rel (%p141) target = $region69
    $region68: #{tpu_custom_call.1} parent=1 // pred_region
      %144 = vst [vmem:[#allocation2] sm:$0xff] 0.0
      %145 = vst [vmem:[#allocation2 + $0x8] sm:$0xff] 0.0
      %146 = vst [vmem:[#allocation3] sm:$0xff] 0.0
      %147 = vst [vmem:[#allocation3 + $0x8] sm:$0xff] 0.0
    $region69: #{tpu_custom_call.1} parent=1 // pred_fallthru
      _
    %v148 = vld [vmem:[#allocation5] sm:$0xff]
    %v149 = vld [vmem:[#allocation5 + $0x8] sm:$0xff]
    %v150 = vld [vmem:[#allocation5 + $0x10] sm:$0xff]
    %v151 = vld [vmem:[#allocation5 + $0x18] sm:$0xff]
    %v152 = vld [vmem:[#allocation5 + $0x20] sm:$0xff]
    %v153 = vld [vmem:[#allocation5 + $0x28] sm:$0xff]
    %v154 = vld [vmem:[#allocation5 + $0x30] sm:$0xff]
    %v155 = vld [vmem:[#allocation5 + $0x38] sm:$0xff]
    %v156 = vld [vmem:[#allocation8] sm:$0xff]
    %v157 = vld [vmem:[#allocation8 + $0x8] sm:$0xff]
    %v158 = vld [vmem:[#allocation8 + $0x10] sm:$0xff]
    %v159 = vld [vmem:[#allocation8 + $0x18] sm:$0xff]
    %v160 = vld [vmem:[#allocation8 + $0x20] sm:$0xff]
    %v161 = vld [vmem:[#allocation8 + $0x28] sm:$0xff]
    %v162 = vld [vmem:[#allocation8 + $0x30] sm:$0xff]
    %v163 = vld [vmem:[#allocation8 + $0x38] sm:$0xff]
    %v164 = vld [vmem:[#allocation8 + $0x40] sm:$0xff]
    %v165 = vld [vmem:[#allocation8 + $0x48] sm:$0xff]
    %v166 = vld [vmem:[#allocation8 + $0x50] sm:$0xff]
    %v167 = vld [vmem:[#allocation8 + $0x58] sm:$0xff]
    %v168 = vld [vmem:[#allocation8 + $0x60] sm:$0xff]
    %v169 = vld [vmem:[#allocation8 + $0x68] sm:$0xff]
    %v170 = vld [vmem:[#allocation8 + $0x70] sm:$0xff]
    %v171 = vld [vmem:[#allocation8 + $0x78] sm:$0xff]
    %v172 = vld [vmem:[#allocation8 + $0x80] sm:$0xff]
    %v173 = vld [vmem:[#allocation8 + $0x88] sm:$0xff]
    %v174 = vld [vmem:[#allocation8 + $0x90] sm:$0xff]
    %v175 = vld [vmem:[#allocation8 + $0x98] sm:$0xff]
    %v176 = vld [vmem:[#allocation8 + $0xa0] sm:$0xff]
    %v177 = vld [vmem:[#allocation8 + $0xa8] sm:$0xff]
    %v178 = vld [vmem:[#allocation8 + $0xb0] sm:$0xff]
    %v179 = vld [vmem:[#allocation8 + $0xb8] sm:$0xff]
    %v180 = vld [vmem:[#allocation8 + $0xc0] sm:$0xff]
    %v181 = vld [vmem:[#allocation8 + $0xc8] sm:$0xff]
    %v182 = vld [vmem:[#allocation8 + $0xd0] sm:$0xff]
    %v183 = vld [vmem:[#allocation8 + $0xd8] sm:$0xff]
    %v184 = vld [vmem:[#allocation8 + $0xe0] sm:$0xff]
    %v185 = vld [vmem:[#allocation8 + $0xe8] sm:$0xff]
    %v186 = vld [vmem:[#allocation8 + $0xf0] sm:$0xff]
    %v187 = vld [vmem:[#allocation8 + $0xf8] sm:$0xff]
    %v188 = vld [vmem:[#allocation8 + $0x100] sm:$0xff]
    %v189 = vld [vmem:[#allocation8 + $0x108] sm:$0xff]
    %v190 = vld [vmem:[#allocation8 + $0x110] sm:$0xff]
    %v191 = vld [vmem:[#allocation8 + $0x118] sm:$0xff]
    %v192 = vld [vmem:[#allocation8 + $0x120] sm:$0xff]
    %v193 = vld [vmem:[#allocation8 + $0x128] sm:$0xff]
    %v194 = vld [vmem:[#allocation8 + $0x130] sm:$0xff]
    %v195 = vld [vmem:[#allocation8 + $0x138] sm:$0xff]
    %v196 = vld [vmem:[#allocation8 + $0x140] sm:$0xff]
    %v197 = vld [vmem:[#allocation8 + $0x148] sm:$0xff]
    %v198 = vld [vmem:[#allocation8 + $0x150] sm:$0xff]
    %v199 = vld [vmem:[#allocation8 + $0x158] sm:$0xff]
    %v200 = vld [vmem:[#allocation8 + $0x160] sm:$0xff]
    %v201 = vld [vmem:[#allocation8 + $0x168] sm:$0xff]
    %v202 = vld [vmem:[#allocation8 + $0x170] sm:$0xff]
    %v203 = vld [vmem:[#allocation8 + $0x178] sm:$0xff]
    %v204 = vld [vmem:[#allocation8 + $0x180] sm:$0xff]
    %v205 = vld [vmem:[#allocation8 + $0x188] sm:$0xff]
    %v206 = vld [vmem:[#allocation8 + $0x190] sm:$0xff]
    %v207 = vld [vmem:[#allocation8 + $0x198] sm:$0xff]
    %v208 = vld [vmem:[#allocation8 + $0x1a0] sm:$0xff]
    %v209 = vld [vmem:[#allocation8 + $0x1a8] sm:$0xff]
    %v210 = vld [vmem:[#allocation8 + $0x1b0] sm:$0xff]
    %v211 = vld [vmem:[#allocation8 + $0x1b8] sm:$0xff]
    %v212 = vld [vmem:[#allocation8 + $0x1c0] sm:$0xff]
    %v213 = vld [vmem:[#allocation8 + $0x1c8] sm:$0xff]
    %v214 = vld [vmem:[#allocation8 + $0x1d0] sm:$0xff]
    %v215 = vld [vmem:[#allocation8 + $0x1d8] sm:$0xff]
    %v216 = vld [vmem:[#allocation8 + $0x1e0] sm:$0xff]
    %v217 = vld [vmem:[#allocation8 + $0x1e8] sm:$0xff]
    %v218 = vld [vmem:[#allocation8 + $0x1f0] sm:$0xff]
    %v219 = vld [vmem:[#allocation8 + $0x1f8] sm:$0xff]
    %v220 = vld [vmem:[#allocation11] sm:$0xf]
    %v222 = vperm.slane %v220, 0
    %v223 = vperm.slane %v220, 1
    %v224 = vperm.slane %v220, 2
    %v225 = vperm.slane %v220, 3
    %230 = vmatpush.msra.mxu0 %v216
    %231 = vmatpush.msra.mxu0 %v212
    %232 = vmatpush.msra.mxu0 %v208
    %233 = vmatpush.msra.mxu0 %v204
    %234 = vmatpush.msra.mxu0 %v200
    %235 = vmatpush.msra.mxu0 %v196
    %236 = vmatpush.msra.mxu0 %v192
    %237 = vmatpush.msra.mxu0 %v188
    %238 = vmatpush.msra.mxu0 %v184
    %239 = vmatpush.msra.mxu0 %v180
    %240 = vmatpush.msra.mxu0 %v176
    %241 = vmatpush.msra.mxu0 %v172
    %242 = vmatpush.msra.mxu0 %v168
    %243 = vmatpush.msra.mxu0 %v164
    %244 = vmatpush.msra.mxu0 %v160
    %245 = vmatpush.msra.mxu0 %v156
    %246 = vmatmul.f32.gmra.mxu0 %v148
    %v247 = vpop.f32.mrf.mxu0
    %v248 = vadd.f32 %v222, %v247
    %249 = vmatmul.f32.gmra.mxu0 %v149
    %v250 = vpop.f32.mrf.mxu0
    %v251 = vadd.f32 %v222, %v250
    %252 = vmatmul.f32.gmra.mxu0 %v150
    %v253 = vpop.f32.mrf.mxu0
    %v254 = vadd.f32 %v222, %v253
    %255 = vmatmul.f32.gmra.mxu0 %v151
    %v256 = vpop.f32.mrf.mxu0
    %v257 = vadd.f32 %v222, %v256
    %258 = vmatmul.f32.gmra.mxu0 %v152
    %v259 = vpop.f32.mrf.mxu0
    %v260 = vadd.f32 %v222, %v259
    %261 = vmatmul.f32.gmra.mxu0 %v153
    %v262 = vpop.f32.mrf.mxu0
    %v263 = vadd.f32 %v222, %v262
    %264 = vmatmul.f32.gmra.mxu0 %v154
    %v265 = vpop.f32.mrf.mxu0
    %v266 = vadd.f32 %v222, %v265
    %267 = vmatmul.f32.gmra.mxu0 %v155
    %v268 = vpop.f32.mrf.mxu0
    %v269 = vadd.f32 %v222, %v268
    %270 = vdwg.mxu0
    %271 = vmatpush.msra.mxu0 %v217
    %272 = vmatpush.msra.mxu0 %v213
    %273 = vmatpush.msra.mxu0 %v209
    %274 = vmatpush.msra.mxu0 %v205
    %275 = vmatpush.msra.mxu0 %v201
    %276 = vmatpush.msra.mxu0 %v197
    %277 = vmatpush.msra.mxu0 %v193
    %278 = vmatpush.msra.mxu0 %v189
    %279 = vmatpush.msra.mxu0 %v185
    %280 = vmatpush.msra.mxu0 %v181
    %281 = vmatpush.msra.mxu0 %v177
    %282 = vmatpush.msra.mxu0 %v173
    %283 = vmatpush.msra.mxu0 %v169
    %284 = vmatpush.msra.mxu0 %v165
    %285 = vmatpush.msra.mxu0 %v161
    %286 = vmatpush.msra.mxu0 %v157
    %287 = vmatmul.f32.gmra.mxu0 %v148
    %v288 = vpop.f32.mrf.mxu0
    %v289 = vadd.f32 %v223, %v288
    %290 = vmatmul.f32.gmra.mxu0 %v149
    %v291 = vpop.f32.mrf.mxu0
    %v292 = vadd.f32 %v223, %v291
    %293 = vmatmul.f32.gmra.mxu0 %v150
    %v294 = vpop.f32.mrf.mxu0
    %v295 = vadd.f32 %v223, %v294
    %296 = vmatmul.f32.gmra.mxu0 %v151
    %v297 = vpop.f32.mrf.mxu0
    %v298 = vadd.f32 %v223, %v297
    %299 = vmatmul.f32.gmra.mxu0 %v152
    %v300 = vpop.f32.mrf.mxu0
    %v301 = vadd.f32 %v223, %v300
    %302 = vmatmul.f32.gmra.mxu0 %v153
    %v303 = vpop.f32.mrf.mxu0
    %v304 = vadd.f32 %v223, %v303
    %305 = vmatmul.f32.gmra.mxu0 %v154
    %v306 = vpop.f32.mrf.mxu0
    %v307 = vadd.f32 %v223, %v306
    %308 = vmatmul.f32.gmra.mxu0 %v155
    %v309 = vpop.f32.mrf.mxu0
    %v310 = vadd.f32 %v223, %v309
    %311 = vdwg.mxu0
    %312 = vmatpush.msra.mxu0 %v218
    %313 = vmatpush.msra.mxu0 %v214
    %314 = vmatpush.msra.mxu0 %v210
    %315 = vmatpush.msra.mxu0 %v206
    %316 = vmatpush.msra.mxu0 %v202
    %317 = vmatpush.msra.mxu0 %v198
    %318 = vmatpush.msra.mxu0 %v194
    %319 = vmatpush.msra.mxu0 %v190
    %320 = vmatpush.msra.mxu0 %v186
    %321 = vmatpush.msra.mxu0 %v182
    %322 = vmatpush.msra.mxu0 %v178
    %323 = vmatpush.msra.mxu0 %v174
    %324 = vmatpush.msra.mxu0 %v170
    %325 = vmatpush.msra.mxu0 %v166
    %326 = vmatpush.msra.mxu0 %v162
    %327 = vmatpush.msra.mxu0 %v158
    %328 = vmatmul.f32.gmra.mxu0 %v148
    %v329 = vpop.f32.mrf.mxu0
    %v330 = vadd.f32 %v224, %v329
    %331 = vmatmul.f32.gmra.mxu0 %v149
    %v332 = vpop.f32.mrf.mxu0
    %v333 = vadd.f32 %v224, %v332
    %334 = vmatmul.f32.gmra.mxu0 %v150
    %v335 = vpop.f32.mrf.mxu0
    %v336 = vadd.f32 %v224, %v335
    %337 = vmatmul.f32.gmra.mxu0 %v151
    %v338 = vpop.f32.mrf.mxu0
    %v339 = vadd.f32 %v224, %v338
    %340 = vmatmul.f32.gmra.mxu0 %v152
    %v341 = vpop.f32.mrf.mxu0
    %v342 = vadd.f32 %v224, %v341
    %343 = vmatmul.f32.gmra.mxu0 %v153
    %v344 = vpop.f32.mrf.mxu0
    %v345 = vadd.f32 %v224, %v344
    %346 = vmatmul.f32.gmra.mxu0 %v154
    %v347 = vpop.f32.mrf.mxu0
    %v348 = vadd.f32 %v224, %v347
    %349 = vmatmul.f32.gmra.mxu0 %v155
    %v350 = vpop.f32.mrf.mxu0
    %v351 = vadd.f32 %v224, %v350
    %352 = vdwg.mxu0
    %353 = vmatpush.msra.mxu0 %v219
    %354 = vmatpush.msra.mxu0 %v215
    %355 = vmatpush.msra.mxu0 %v211
    %356 = vmatpush.msra.mxu0 %v207
    %357 = vmatpush.msra.mxu0 %v203
    %358 = vmatpush.msra.mxu0 %v199
    %359 = vmatpush.msra.mxu0 %v195
    %360 = vmatpush.msra.mxu0 %v191
    %361 = vmatpush.msra.mxu0 %v187
    %362 = vmatpush.msra.mxu0 %v183
    %363 = vmatpush.msra.mxu0 %v179
    %364 = vmatpush.msra.mxu0 %v175
    %365 = vmatpush.msra.mxu0 %v171
    %366 = vmatpush.msra.mxu0 %v167
    %367 = vmatpush.msra.mxu0 %v163
    %368 = vmatpush.msra.mxu0 %v159
    %369 = vmatmul.f32.gmra.mxu0 %v148
    %v370 = vpop.f32.mrf.mxu0
    %v371 = vadd.f32 %v225, %v370
    %372 = vmatmul.f32.gmra.mxu0 %v149
    %v373 = vpop.f32.mrf.mxu0
    %v374 = vadd.f32 %v225, %v373
    %375 = vmatmul.f32.gmra.mxu0 %v150
    %v376 = vpop.f32.mrf.mxu0
    %v377 = vadd.f32 %v225, %v376
    %378 = vmatmul.f32.gmra.mxu0 %v151
    %v379 = vpop.f32.mrf.mxu0
    %v380 = vadd.f32 %v225, %v379
    %381 = vmatmul.f32.gmra.mxu0 %v152
    %v382 = vpop.f32.mrf.mxu0
    %v383 = vadd.f32 %v225, %v382
    %384 = vmatmul.f32.gmra.mxu0 %v153
    %v385 = vpop.f32.mrf.mxu0
    %v386 = vadd.f32 %v225, %v385
    %387 = vmatmul.f32.gmra.mxu0 %v154
    %v388 = vpop.f32.mrf.mxu0
    %v389 = vadd.f32 %v225, %v388
    %390 = vmatmul.f32.gmra.mxu0 %v155
    %v391 = vpop.f32.mrf.mxu0
    %v392 = vadd.f32 %v225, %v391
    %393 = vdwg.mxu0
    %394 = vst [vmem:[#allocation4] sm:$0xff] %v248
    %395 = vst [vmem:[#allocation4 + $0x8] sm:$0xff] %v289
    %396 = vst [vmem:[#allocation4 + $0x10] sm:$0xff] %v330
    %397 = vst [vmem:[#allocation4 + $0x18] sm:$0xff] %v371
    %398 = vst [vmem:[#allocation4 + $0x20] sm:$0xff] %v251
    %399 = vst [vmem:[#allocation4 + $0x28] sm:$0xff] %v292
    %400 = vst [vmem:[#allocation4 + $0x30] sm:$0xff] %v333
    %401 = vst [vmem:[#allocation4 + $0x38] sm:$0xff] %v374
    %402 = vst [vmem:[#allocation4 + $0x40] sm:$0xff] %v254
    %403 = vst [vmem:[#allocation4 + $0x48] sm:$0xff] %v295
    %404 = vst [vmem:[#allocation4 + $0x50] sm:$0xff] %v336
    %405 = vst [vmem:[#allocation4 + $0x58] sm:$0xff] %v377
    %406 = vst [vmem:[#allocation4 + $0x60] sm:$0xff] %v257
    %407 = vst [vmem:[#allocation4 + $0x68] sm:$0xff] %v298
    %408 = vst [vmem:[#allocation4 + $0x70] sm:$0xff] %v339
    %409 = vst [vmem:[#allocation4 + $0x78] sm:$0xff] %v380
    %410 = vst [vmem:[#allocation4 + $0x80] sm:$0xff] %v260
    %411 = vst [vmem:[#allocation4 + $0x88] sm:$0xff] %v301
    %412 = vst [vmem:[#allocation4 + $0x90] sm:$0xff] %v342
    %413 = vst [vmem:[#allocation4 + $0x98] sm:$0xff] %v383
    %414 = vst [vmem:[#allocation4 + $0xa0] sm:$0xff] %v263
    %415 = vst [vmem:[#allocation4 + $0xa8] sm:$0xff] %v304
    %416 = vst [vmem:[#allocation4 + $0xb0] sm:$0xff] %v345
    %417 = vst [vmem:[#allocation4 + $0xb8] sm:$0xff] %v386
    %418 = vst [vmem:[#allocation4 + $0xc0] sm:$0xff] %v266
    %419 = vst [vmem:[#allocation4 + $0xc8] sm:$0xff] %v307
    %420 = vst [vmem:[#allocation4 + $0xd0] sm:$0xff] %v348
    %421 = vst [vmem:[#allocation4 + $0xd8] sm:$0xff] %v389
    %422 = vst [vmem:[#allocation4 + $0xe0] sm:$0xff] %v269
    %423 = vst [vmem:[#allocation4 + $0xe8] sm:$0xff] %v310
    %424 = vst [vmem:[#allocation4 + $0xf0] sm:$0xff] %v351
    %425 = vst [vmem:[#allocation4 + $0xf8] sm:$0xff] %v392
    %v426 = vld [vmem:[#allocation2] sm:$0xff]
    %s427 = scalar_lea.vmem [#allocation2], 8
    %v428 = vld [vmem:[%s427] sm:$0xff]
    %v429 = vld [vmem:[#allocation3] sm:$0xff]
    %s430 = scalar_lea.vmem [#allocation3], 8
    %v431 = vld [vmem:[%s430] sm:$0xff]
    %v432 = vld [vmem:[#allocation4] sm:$0xff]
    %v433 = vld [vmem:[#allocation4 + $0x8] sm:$0xff]
    %v434 = vld [vmem:[#allocation4 + $0x10] sm:$0xff]
    %v435 = vld [vmem:[#allocation4 + $0x18] sm:$0xff]
    %v436 = vld [vmem:[#allocation10] sm:$0xff]
    %v437 = vld [vmem:[#allocation10 + $0x8] sm:$0xff]
    %v438 = vld [vmem:[#allocation10 + $0x10] sm:$0xff]
    %v439 = vld [vmem:[#allocation10 + $0x18] sm:$0xff]
    %v440 = vld [vmem:[#allocation10 + $0x20] sm:$0xff]
    %v441 = vld [vmem:[#allocation10 + $0x28] sm:$0xff]
    %v442 = vld [vmem:[#allocation10 + $0x30] sm:$0xff]
    %v443 = vld [vmem:[#allocation10 + $0x38] sm:$0xff]
    %v444 = vld [vmem:[#allocation10 + $0x40] sm:$0xff]
    %v445 = vld [vmem:[#allocation10 + $0x48] sm:$0xff]
    %v446 = vld [vmem:[#allocation10 + $0x50] sm:$0xff]
    %v447 = vld [vmem:[#allocation10 + $0x58] sm:$0xff]
    %v448 = vld [vmem:[#allocation10 + $0x60] sm:$0xff]
    %v449 = vld [vmem:[#allocation10 + $0x68] sm:$0xff]
    %v450 = vld [vmem:[#allocation10 + $0x70] sm:$0xff]
    %v451 = vld [vmem:[#allocation10 + $0x78] sm:$0xff]
    %v452 = vld [vmem:[#allocation10 + $0x80] sm:$0xff]
    %v453 = vld [vmem:[#allocation10 + $0x88] sm:$0xff]
    %v454 = vld [vmem:[#allocation10 + $0x90] sm:$0xff]
    %v455 = vld [vmem:[#allocation10 + $0x98] sm:$0xff]
    %v456 = vld [vmem:[#allocation10 + $0xa0] sm:$0xff]
    %v457 = vld [vmem:[#allocation10 + $0xa8] sm:$0xff]
    %v458 = vld [vmem:[#allocation10 + $0xb0] sm:$0xff]
    %v459 = vld [vmem:[#allocation10 + $0xb8] sm:$0xff]
    %v460 = vld [vmem:[#allocation10 + $0xc0] sm:$0xff]
    %v461 = vld [vmem:[#allocation10 + $0xc8] sm:$0xff]
    %v462 = vld [vmem:[#allocation10 + $0xd0] sm:$0xff]
    %v463 = vld [vmem:[#allocation10 + $0xd8] sm:$0xff]
    %v464 = vld [vmem:[#allocation10 + $0xe0] sm:$0xff]
    %v465 = vld [vmem:[#allocation10 + $0xe8] sm:$0xff]
    %v466 = vld [vmem:[#allocation10 + $0xf0] sm:$0xff]
    %v467 = vld [vmem:[#allocation10 + $0xf8] sm:$0xff]
    %v468 = vld [vmem:[#allocation10 + $0x100] sm:$0xff]
    %v469 = vld [vmem:[#allocation10 + $0x108] sm:$0xff]
    %v470 = vld [vmem:[#allocation10 + $0x110] sm:$0xff]
    %v471 = vld [vmem:[#allocation10 + $0x118] sm:$0xff]
    %v472 = vld [vmem:[#allocation10 + $0x120] sm:$0xff]
    %v473 = vld [vmem:[#allocation10 + $0x128] sm:$0xff]
    %v474 = vld [vmem:[#allocation10 + $0x130] sm:$0xff]
    %v475 = vld [vmem:[#allocation10 + $0x138] sm:$0xff]
    %v476 = vld [vmem:[#allocation10 + $0x140] sm:$0xff]
    %v477 = vld [vmem:[#allocation10 + $0x148] sm:$0xff]
    %v478 = vld [vmem:[#allocation10 + $0x150] sm:$0xff]
    %v479 = vld [vmem:[#allocation10 + $0x158] sm:$0xff]
    %v480 = vld [vmem:[#allocation10 + $0x160] sm:$0xff]
    %v481 = vld [vmem:[#allocation10 + $0x168] sm:$0xff]
    %v482 = vld [vmem:[#allocation10 + $0x170] sm:$0xff]
    %v483 = vld [vmem:[#allocation10 + $0x178] sm:$0xff]
    %v484 = vld [vmem:[#allocation10 + $0x180] sm:$0xff]
    %v485 = vld [vmem:[#allocation10 + $0x188] sm:$0xff]
    %v486 = vld [vmem:[#allocation10 + $0x190] sm:$0xff]
    %v487 = vld [vmem:[#allocation10 + $0x198] sm:$0xff]
    %v488 = vld [vmem:[#allocation10 + $0x1a0] sm:$0xff]
    %v489 = vld [vmem:[#allocation10 + $0x1a8] sm:$0xff]
    %v490 = vld [vmem:[#allocation10 + $0x1b0] sm:$0xff]
    %v491 = vld [vmem:[#allocation10 + $0x1b8] sm:$0xff]
    %v492 = vld [vmem:[#allocation10 + $0x1c0] sm:$0xff]
    %v493 = vld [vmem:[#allocation10 + $0x1c8] sm:$0xff]
    %v494 = vld [vmem:[#allocation10 + $0x1d0] sm:$0xff]
    %v495 = vld [vmem:[#allocation10 + $0x1d8] sm:$0xff]
    %v496 = vld [vmem:[#allocation10 + $0x1e0] sm:$0xff]
    %v497 = vld [vmem:[#allocation10 + $0x1e8] sm:$0xff]
    %v498 = vld [vmem:[#allocation10 + $0x1f0] sm:$0xff]
    %v499 = vld [vmem:[#allocation10 + $0x1f8] sm:$0xff]
    %500 = vmatpush.msra.mxu0 %v496
    %501 = vmatpush.msra.mxu0 %v492
    %502 = vmatpush.msra.mxu0 %v488
    %503 = vmatpush.msra.mxu0 %v484
    %504 = vmatpush.msra.mxu0 %v480
    %505 = vmatpush.msra.mxu0 %v476
    %506 = vmatpush.msra.mxu0 %v472
    %507 = vmatpush.msra.mxu0 %v468
    %508 = vmatpush.msra.mxu0 %v464
    %509 = vmatpush.msra.mxu0 %v460
    %510 = vmatpush.msra.mxu0 %v456
    %511 = vmatpush.msra.mxu0 %v452
    %512 = vmatpush.msra.mxu0 %v448
    %513 = vmatpush.msra.mxu0 %v444
    %514 = vmatpush.msra.mxu0 %v440
    %515 = vmatpush.msra.mxu0 %v436
    %516 = vmatmul.f32.gmra.mxu0 %v426
    %v517 = vpop.f32.mrf.mxu0
    %v518 = vadd.f32 0.0, %v517
    %519 = vdwg.mxu0
    %520 = vmatpush.msra.mxu0 %v497
    %521 = vmatpush.msra.mxu0 %v493
    %522 = vmatpush.msra.mxu0 %v489
    %523 = vmatpush.msra.mxu0 %v485
    %524 = vmatpush.msra.mxu0 %v481
    %525 = vmatpush.msra.mxu0 %v477
    %526 = vmatpush.msra.mxu0 %v473
    %527 = vmatpush.msra.mxu0 %v469
    %528 = vmatpush.msra.mxu0 %v465
    %529 = vmatpush.msra.mxu0 %v461
    %530 = vmatpush.msra.mxu0 %v457
    %531 = vmatpush.msra.mxu0 %v453
    %532 = vmatpush.msra.mxu0 %v449
    %533 = vmatpush.msra.mxu0 %v445
    %534 = vmatpush.msra.mxu0 %v441
    %535 = vmatpush.msra.mxu0 %v437
    %536 = vmatmul.f32.gmra.mxu0 %v426
    %v537 = vpop.f32.mrf.mxu0
    %v538 = vadd.f32 0.0, %v537
    %539 = vdwg.mxu0
    %540 = vmatpush.msra.mxu0 %v498
    %541 = vmatpush.msra.mxu0 %v494
    %542 = vmatpush.msra.mxu0 %v490
    %543 = vmatpush.msra.mxu0 %v486
    %544 = vmatpush.msra.mxu0 %v482
    %545 = vmatpush.msra.mxu0 %v478
    %546 = vmatpush.msra.mxu0 %v474
    %547 = vmatpush.msra.mxu0 %v470
    %548 = vmatpush.msra.mxu0 %v466
    %549 = vmatpush.msra.mxu0 %v462
    %550 = vmatpush.msra.mxu0 %v458
    %551 = vmatpush.msra.mxu0 %v454
    %552 = vmatpush.msra.mxu0 %v450
    %553 = vmatpush.msra.mxu0 %v446
    %554 = vmatpush.msra.mxu0 %v442
    %555 = vmatpush.msra.mxu0 %v438
    %556 = vmatmul.f32.gmra.mxu0 %v426
    %v557 = vpop.f32.mrf.mxu0
    %v558 = vadd.f32 0.0, %v557
    %559 = vdwg.mxu0
    %560 = vmatpush.msra.mxu0 %v499
    %561 = vmatpush.msra.mxu0 %v495
    %562 = vmatpush.msra.mxu0 %v491
    %563 = vmatpush.msra.mxu0 %v487
    %564 = vmatpush.msra.mxu0 %v483
    %565 = vmatpush.msra.mxu0 %v479
    %566 = vmatpush.msra.mxu0 %v475
    %567 = vmatpush.msra.mxu0 %v471
    %568 = vmatpush.msra.mxu0 %v467
    %569 = vmatpush.msra.mxu0 %v463
    %570 = vmatpush.msra.mxu0 %v459
    %571 = vmatpush.msra.mxu0 %v455
    %572 = vmatpush.msra.mxu0 %v451
    %573 = vmatpush.msra.mxu0 %v447
    %574 = vmatpush.msra.mxu0 %v443
    %575 = vmatpush.msra.mxu0 %v439
    %576 = vmatmul.f32.gmra.mxu0 %v426
    %v577 = vpop.f32.mrf.mxu0
    %v578 = vadd.f32 0.0, %v577
    %579 = vdwg.mxu0
    %v580 = vadd.f32 %v432, %v518
    %v581 = vadd.f32 %v433, %v538
    %v582 = vadd.f32 %v434, %v558
    %v583 = vadd.f32 %v435, %v578
    %v584 = vmul.f32 %v580, 0.5
    %v585 = vmul.f32 %v581, 0.5
    %v586 = vmul.f32 %v582, 0.5
    %v587 = vtanh.pop %v584
    %v588 = vtanh.pop %v585
    %v589 = vtanh.pop %v586
    %v590 = vmul.f32 %v587, 0.5
    %v591 = vmul.f32 %v588, 0.5
    %v592 = vmul.f32 %v589, 0.5
    %v593 = vadd.f32 %v590, 0.5
    %v594 = vadd.f32 %v591, 0.5
    %v595 = vadd.f32 %v592, 0.5
    %v596 = vtanh.pop %v583
    %v597 = vmul.f32 %v594, %v429
    %v598 = vmul.f32 %v593, %v596
    %v599 = vadd.f32 %v597, %v598
    %v600 = vtanh.pop %v599
    %v601 = vmul.f32 %v595, %v600
    %v602 = vld [vmem:[#allocation13] sm:$0xff]
    %v603 = vld [vmem:[#allocation13 + $0x8] sm:$0xff]
    %v604 = vld [vmem:[#allocation13 + $0x10] sm:$0xff]
    %v605 = vld [vmem:[#allocation13 + $0x18] sm:$0xff]
    %v606 = vld [vmem:[#allocation13 + $0x20] sm:$0xff]
    %v607 = vld [vmem:[#allocation13 + $0x28] sm:$0xff]
    %v608 = vld [vmem:[#allocation13 + $0x30] sm:$0xff]
    %v609 = vld [vmem:[#allocation13 + $0x38] sm:$0xff]
    %v610 = vld [vmem:[#allocation13 + $0x40] sm:$0xff]
    %v611 = vld [vmem:[#allocation13 + $0x48] sm:$0xff]
    %v612 = vld [vmem:[#allocation13 + $0x50] sm:$0xff]
    %v613 = vld [vmem:[#allocation13 + $0x58] sm:$0xff]
    %v614 = vld [vmem:[#allocation13 + $0x60] sm:$0xff]
    %v615 = vld [vmem:[#allocation13 + $0x68] sm:$0xff]
    %v616 = vld [vmem:[#allocation13 + $0x70] sm:$0xff]
    %v617 = vld [vmem:[#allocation13 + $0x78] sm:$0xff]
    %v618 = vld [vmem:[#allocation13 + $0x80] sm:$0xff]
    %v619 = vld [vmem:[#allocation13 + $0x88] sm:$0xff]
    %v620 = vld [vmem:[#allocation13 + $0x90] sm:$0xff]
    %v621 = vld [vmem:[#allocation13 + $0x98] sm:$0xff]
    %v622 = vld [vmem:[#allocation13 + $0xa0] sm:$0xff]
    %v623 = vld [vmem:[#allocation13 + $0xa8] sm:$0xff]
    %v624 = vld [vmem:[#allocation13 + $0xb0] sm:$0xff]
    %v625 = vld [vmem:[#allocation13 + $0xb8] sm:$0xff]
    %v626 = vld [vmem:[#allocation13 + $0xc0] sm:$0xff]
    %v627 = vld [vmem:[#allocation13 + $0xc8] sm:$0xff]
    %v628 = vld [vmem:[#allocation13 + $0xd0] sm:$0xff]
    %v629 = vld [vmem:[#allocation13 + $0xd8] sm:$0xff]
    %v630 = vld [vmem:[#allocation13 + $0xe0] sm:$0xff]
    %v631 = vld [vmem:[#allocation13 + $0xe8] sm:$0xff]
    %v632 = vld [vmem:[#allocation13 + $0xf0] sm:$0xff]
    %v633 = vld [vmem:[#allocation13 + $0xf8] sm:$0xff]
    %v634 = vld [vmem:[#allocation13 + $0x100] sm:$0xff]
    %v635 = vld [vmem:[#allocation13 + $0x108] sm:$0xff]
    %v636 = vld [vmem:[#allocation13 + $0x110] sm:$0xff]
    %v637 = vld [vmem:[#allocation13 + $0x118] sm:$0xff]
    %v638 = vld [vmem:[#allocation13 + $0x120] sm:$0xff]
    %v639 = vld [vmem:[#allocation13 + $0x128] sm:$0xff]
    %v640 = vld [vmem:[#allocation13 + $0x130] sm:$0xff]
    %v641 = vld [vmem:[#allocation13 + $0x138] sm:$0xff]
    %v642 = vld [vmem:[#allocation13 + $0x140] sm:$0xff]
    %v643 = vld [vmem:[#allocation13 + $0x148] sm:$0xff]
    %v644 = vld [vmem:[#allocation13 + $0x150] sm:$0xff]
    %v645 = vld [vmem:[#allocation13 + $0x158] sm:$0xff]
    %v646 = vld [vmem:[#allocation13 + $0x160] sm:$0xff]
    %v647 = vld [vmem:[#allocation13 + $0x168] sm:$0xff]
    %v648 = vld [vmem:[#allocation13 + $0x170] sm:$0xff]
    %v649 = vld [vmem:[#allocation13 + $0x178] sm:$0xff]
    %v650 = vld [vmem:[#allocation13 + $0x180] sm:$0xff]
    %v651 = vld [vmem:[#allocation13 + $0x188] sm:$0xff]
    %v652 = vld [vmem:[#allocation13 + $0x190] sm:$0xff]
    %v653 = vld [vmem:[#allocation13 + $0x198] sm:$0xff]
    %v654 = vld [vmem:[#allocation13 + $0x1a0] sm:$0xff]
    %v655 = vld [vmem:[#allocation13 + $0x1a8] sm:$0xff]
    %v656 = vld [vmem:[#allocation13 + $0x1b0] sm:$0xff]
    %v657 = vld [vmem:[#allocation13 + $0x1b8] sm:$0xff]
    %v658 = vld [vmem:[#allocation13 + $0x1c0] sm:$0xff]
    %v659 = vld [vmem:[#allocation13 + $0x1c8] sm:$0xff]
    %v660 = vld [vmem:[#allocation13 + $0x1d0] sm:$0xff]
    %v661 = vld [vmem:[#allocation13 + $0x1d8] sm:$0xff]
    %v662 = vld [vmem:[#allocation13 + $0x1e0] sm:$0xff]
    %v663 = vld [vmem:[#allocation13 + $0x1e8] sm:$0xff]
    %v664 = vld [vmem:[#allocation13 + $0x1f0] sm:$0xff]
    %v665 = vld [vmem:[#allocation13 + $0x1f8] sm:$0xff]
    %v666 = vld [vmem:[#allocation14] sm:$0xff]
    %v667 = vld [vmem:[#allocation14 + $0x8] sm:$0xff]
    %v668 = vld [vmem:[#allocation14 + $0x10] sm:$0xff]
    %v669 = vld [vmem:[#allocation14 + $0x18] sm:$0xff]
    %v670 = vld [vmem:[#allocation14 + $0x20] sm:$0xff]
    %v671 = vld [vmem:[#allocation14 + $0x28] sm:$0xff]
    %v672 = vld [vmem:[#allocation14 + $0x30] sm:$0xff]
    %v673 = vld [vmem:[#allocation14 + $0x38] sm:$0xff]
    %v674 = vld [vmem:[#allocation14 + $0x40] sm:$0xff]
    %v675 = vld [vmem:[#allocation14 + $0x48] sm:$0xff]
    %v676 = vld [vmem:[#allocation14 + $0x50] sm:$0xff]
    %v677 = vld [vmem:[#allocation14 + $0x58] sm:$0xff]
    %v678 = vld [vmem:[#allocation14 + $0x60] sm:$0xff]
    %v679 = vld [vmem:[#allocation14 + $0x68] sm:$0xff]
    %v680 = vld [vmem:[#allocation14 + $0x70] sm:$0xff]
    %v681 = vld [vmem:[#allocation14 + $0x78] sm:$0xff]
    %v682 = vld [vmem:[#allocation14 + $0x80] sm:$0xff]
    %v683 = vld [vmem:[#allocation14 + $0x88] sm:$0xff]
    %v684 = vld [vmem:[#allocation14 + $0x90] sm:$0xff]
    %v685 = vld [vmem:[#allocation14 + $0x98] sm:$0xff]
    %v686 = vld [vmem:[#allocation14 + $0xa0] sm:$0xff]
    %v687 = vld [vmem:[#allocation14 + $0xa8] sm:$0xff]
    %v688 = vld [vmem:[#allocation14 + $0xb0] sm:$0xff]
    %v689 = vld [vmem:[#allocation14 + $0xb8] sm:$0xff]
    %v690 = vld [vmem:[#allocation14 + $0xc0] sm:$0xff]
    %v691 = vld [vmem:[#allocation14 + $0xc8] sm:$0xff]
    %v692 = vld [vmem:[#allocation14 + $0xd0] sm:$0xff]
    %v693 = vld [vmem:[#allocation14 + $0xd8] sm:$0xff]
    %v694 = vld [vmem:[#allocation14 + $0xe0] sm:$0xff]
    %v695 = vld [vmem:[#allocation14 + $0xe8] sm:$0xff]
    %v696 = vld [vmem:[#allocation14 + $0xf0] sm:$0xff]
    %v697 = vld [vmem:[#allocation14 + $0xf8] sm:$0xff]
    %v698 = vld [vmem:[#allocation14 + $0x100] sm:$0xff]
    %v699 = vld [vmem:[#allocation14 + $0x108] sm:$0xff]
    %v700 = vld [vmem:[#allocation14 + $0x110] sm:$0xff]
    %v701 = vld [vmem:[#allocation14 + $0x118] sm:$0xff]
    %v702 = vld [vmem:[#allocation14 + $0x120] sm:$0xff]
    %v703 = vld [vmem:[#allocation14 + $0x128] sm:$0xff]
    %v704 = vld [vmem:[#allocation14 + $0x130] sm:$0xff]
    %v705 = vld [vmem:[#allocation14 + $0x138] sm:$0xff]
    %v706 = vld [vmem:[#allocation14 + $0x140] sm:$0xff]
    %v707 = vld [vmem:[#allocation14 + $0x148] sm:$0xff]
    %v708 = vld [vmem:[#allocation14 + $0x150] sm:$0xff]
    %v709 = vld [vmem:[#allocation14 + $0x158] sm:$0xff]
    %v710 = vld [vmem:[#allocation14 + $0x160] sm:$0xff]
    %v711 = vld [vmem:[#allocation14 + $0x168] sm:$0xff]
    %v712 = vld [vmem:[#allocation14 + $0x170] sm:$0xff]
    %v713 = vld [vmem:[#allocation14 + $0x178] sm:$0xff]
    %v714 = vld [vmem:[#allocation14 + $0x180] sm:$0xff]
    %v715 = vld [vmem:[#allocation14 + $0x188] sm:$0xff]
    %v716 = vld [vmem:[#allocation14 + $0x190] sm:$0xff]
    %v717 = vld [vmem:[#allocation14 + $0x198] sm:$0xff]
    %v718 = vld [vmem:[#allocation14 + $0x1a0] sm:$0xff]
    %v719 = vld [vmem:[#allocation14 + $0x1a8] sm:$0xff]
    %v720 = vld [vmem:[#allocation14 + $0x1b0] sm:$0xff]
    %v721 = vld [vmem:[#allocation14 + $0x1b8] sm:$0xff]
    %v722 = vld [vmem:[#allocation14 + $0x1c0] sm:$0xff]
    %v723 = vld [vmem:[#allocation14 + $0x1c8] sm:$0xff]
    %v724 = vld [vmem:[#allocation14 + $0x1d0] sm:$0xff]
    %v725 = vld [vmem:[#allocation14 + $0x1d8] sm:$0xff]
    %v726 = vld [vmem:[#allocation14 + $0x1e0] sm:$0xff]
    %v727 = vld [vmem:[#allocation14 + $0x1e8] sm:$0xff]
    %v728 = vld [vmem:[#allocation14 + $0x1f0] sm:$0xff]
    %v729 = vld [vmem:[#allocation14 + $0x1f8] sm:$0xff]
    %730 = vmatpush.msra.mxu0 %v726
    %731 = vmatpush.msra.mxu0 %v722
    %732 = vmatpush.msra.mxu0 %v718
    %733 = vmatpush.msra.mxu0 %v714
    %734 = vmatpush.msra.mxu0 %v710
    %735 = vmatpush.msra.mxu0 %v706
    %736 = vmatpush.msra.mxu0 %v702
    %737 = vmatpush.msra.mxu0 %v698
    %738 = vmatpush.msra.mxu0 %v694
    %739 = vmatpush.msra.mxu0 %v690
    %740 = vmatpush.msra.mxu0 %v686
    %741 = vmatpush.msra.mxu0 %v682
    %742 = vmatpush.msra.mxu0 %v678
    %743 = vmatpush.msra.mxu0 %v674
    %744 = vmatpush.msra.mxu0 %v670
    %745 = vmatpush.msra.mxu0 %v666
    %746 = vmatmul.f32.gmra.mxu0 %v428
    %v747 = vpop.f32.mrf.mxu0
    %v748 = vadd.f32 0.0, %v747
    %749 = vdwg.mxu0
    %750 = vmatpush.msra.mxu0 %v727
    %751 = vmatpush.msra.mxu0 %v723
    %752 = vmatpush.msra.mxu0 %v719
    %753 = vmatpush.msra.mxu0 %v715
    %754 = vmatpush.msra.mxu0 %v711
    %755 = vmatpush.msra.mxu0 %v707
    %756 = vmatpush.msra.mxu0 %v703
    %757 = vmatpush.msra.mxu0 %v699
    %758 = vmatpush.msra.mxu0 %v695
    %759 = vmatpush.msra.mxu0 %v691
    %760 = vmatpush.msra.mxu0 %v687
    %761 = vmatpush.msra.mxu0 %v683
    %762 = vmatpush.msra.mxu0 %v679
    %763 = vmatpush.msra.mxu0 %v675
    %764 = vmatpush.msra.mxu0 %v671
    %765 = vmatpush.msra.mxu0 %v667
    %766 = vmatmul.f32.gmra.mxu0 %v428
    %v767 = vpop.f32.mrf.mxu0
    %v768 = vadd.f32 0.0, %v767
    %769 = vdwg.mxu0
    %770 = vmatpush.msra.mxu0 %v728
    %771 = vmatpush.msra.mxu0 %v724
    %772 = vmatpush.msra.mxu0 %v720
    %773 = vmatpush.msra.mxu0 %v716
    %774 = vmatpush.msra.mxu0 %v712
    %775 = vmatpush.msra.mxu0 %v708
    %776 = vmatpush.msra.mxu0 %v704
    %777 = vmatpush.msra.mxu0 %v700
    %778 = vmatpush.msra.mxu0 %v696
    %779 = vmatpush.msra.mxu0 %v692
    %780 = vmatpush.msra.mxu0 %v688
    %781 = vmatpush.msra.mxu0 %v684
    %782 = vmatpush.msra.mxu0 %v680
    %783 = vmatpush.msra.mxu0 %v676
    %784 = vmatpush.msra.mxu0 %v672
    %785 = vmatpush.msra.mxu0 %v668
    %786 = vmatmul.f32.gmra.mxu0 %v428
    %v787 = vpop.f32.mrf.mxu0
    %v788 = vadd.f32 0.0, %v787
    %789 = vdwg.mxu0
    %790 = vmatpush.msra.mxu0 %v729
    %791 = vmatpush.msra.mxu0 %v725
    %792 = vmatpush.msra.mxu0 %v721
    %793 = vmatpush.msra.mxu0 %v717
    %794 = vmatpush.msra.mxu0 %v713
    %795 = vmatpush.msra.mxu0 %v709
    %796 = vmatpush.msra.mxu0 %v705
    %797 = vmatpush.msra.mxu0 %v701
    %798 = vmatpush.msra.mxu0 %v697
    %799 = vmatpush.msra.mxu0 %v693
    %800 = vmatpush.msra.mxu0 %v689
    %801 = vmatpush.msra.mxu0 %v685
    %802 = vmatpush.msra.mxu0 %v681
    %803 = vmatpush.msra.mxu0 %v677
    %804 = vmatpush.msra.mxu0 %v673
    %805 = vmatpush.msra.mxu0 %v669
    %806 = vmatmul.f32.gmra.mxu0 %v428
    %v807 = vpop.f32.mrf.mxu0
    %v808 = vadd.f32 0.0, %v807
    %809 = vdwg.mxu0
    %810 = vmatpush.msra.mxu0 %v662
    %811 = vmatpush.msra.mxu0 %v658
    %812 = vmatpush.msra.mxu0 %v654
    %813 = vmatpush.msra.mxu0 %v650
    %814 = vmatpush.msra.mxu0 %v646
    %815 = vmatpush.msra.mxu0 %v642
    %816 = vmatpush.msra.mxu0 %v638
    %817 = vmatpush.msra.mxu0 %v634
    %818 = vmatpush.msra.mxu0 %v630
    %819 = vmatpush.msra.mxu0 %v626
    %820 = vmatpush.msra.mxu0 %v622
    %821 = vmatpush.msra.mxu0 %v618
    %822 = vmatpush.msra.mxu0 %v614
    %823 = vmatpush.msra.mxu0 %v610
    %824 = vmatpush.msra.mxu0 %v606
    %825 = vmatpush.msra.mxu0 %v602
    %826 = vmatmul.f32.gmra.mxu0 %v601
    %v827 = vpop.f32.mrf.mxu0
    %v828 = vadd.f32 %v748, %v827
    %829 = vdwg.mxu0
    %830 = vmatpush.msra.mxu0 %v663
    %831 = vmatpush.msra.mxu0 %v659
    %832 = vmatpush.msra.mxu0 %v655
    %833 = vmatpush.msra.mxu0 %v651
    %834 = vmatpush.msra.mxu0 %v647
    %835 = vmatpush.msra.mxu0 %v643
    %836 = vmatpush.msra.mxu0 %v639
    %837 = vmatpush.msra.mxu0 %v635
    %838 = vmatpush.msra.mxu0 %v631
    %839 = vmatpush.msra.mxu0 %v627
    %840 = vmatpush.msra.mxu0 %v623
    %841 = vmatpush.msra.mxu0 %v619
    %842 = vmatpush.msra.mxu0 %v615
    %843 = vmatpush.msra.mxu0 %v611
    %844 = vmatpush.msra.mxu0 %v607
    %845 = vmatpush.msra.mxu0 %v603
    %846 = vmatmul.f32.gmra.mxu0 %v601
    %v847 = vpop.f32.mrf.mxu0
    %v848 = vadd.f32 %v768, %v847
    %849 = vdwg.mxu0
    %850 = vmatpush.msra.mxu0 %v664
    %851 = vmatpush.msra.mxu0 %v660
    %852 = vmatpush.msra.mxu0 %v656
    %853 = vmatpush.msra.mxu0 %v652
    %854 = vmatpush.msra.mxu0 %v648
    %855 = vmatpush.msra.mxu0 %v644
    %856 = vmatpush.msra.mxu0 %v640
    %857 = vmatpush.msra.mxu0 %v636
    %858 = vmatpush.msra.mxu0 %v632
    %859 = vmatpush.msra.mxu0 %v628
    %860 = vmatpush.msra.mxu0 %v624
    %861 = vmatpush.msra.mxu0 %v620
    %862 = vmatpush.msra.mxu0 %v616
    %863 = vmatpush.msra.mxu0 %v612
    %864 = vmatpush.msra.mxu0 %v608
    %865 = vmatpush.msra.mxu0 %v604
    %866 = vmatmul.f32.gmra.mxu0 %v601
    %v867 = vpop.f32.mrf.mxu0
    %v868 = vadd.f32 %v788, %v867
    %869 = vdwg.mxu0
    %870 = vmatpush.msra.mxu0 %v665
    %871 = vmatpush.msra.mxu0 %v661
    %872 = vmatpush.msra.mxu0 %v657
    %873 = vmatpush.msra.mxu0 %v653
    %874 = vmatpush.msra.mxu0 %v649
    %875 = vmatpush.msra.mxu0 %v645
    %876 = vmatpush.msra.mxu0 %v641
    %877 = vmatpush.msra.mxu0 %v637
    %878 = vmatpush.msra.mxu0 %v633
    %879 = vmatpush.msra.mxu0 %v629
    %880 = vmatpush.msra.mxu0 %v625
    %881 = vmatpush.msra.mxu0 %v621
    %882 = vmatpush.msra.mxu0 %v617
    %883 = vmatpush.msra.mxu0 %v613
    %884 = vmatpush.msra.mxu0 %v609
    %885 = vmatpush.msra.mxu0 %v605
    %886 = vmatmul.f32.gmra.mxu0 %v601
    %v887 = vpop.f32.mrf.mxu0
    %v888 = vadd.f32 %v808, %v887
    %889 = vdwg.mxu0
    %v890 = vld [vmem:[%s6] sm:$0xf]
    %v892 = vperm.slane %v890, 0
    %v893 = vperm.slane %v890, 1
    %v894 = vperm.slane %v890, 2
    %v895 = vperm.slane %v890, 3
    %v900 = vadd.f32 %v828, %v892
    %v901 = vadd.f32 %v848, %v893
    %v902 = vadd.f32 %v868, %v894
    %v903 = vadd.f32 %v888, %v895
    %v904 = vmul.f32 %v900, 0.5
    %v905 = vmul.f32 %v901, 0.5
    %v906 = vmul.f32 %v902, 0.5
    %v907 = vtanh.pop %v904
    %v908 = vtanh.pop %v905
    %v909 = vtanh.pop %v906
    %v910 = vmul.f32 %v907, 0.5
    %v911 = vmul.f32 %v908, 0.5
    %v912 = vmul.f32 %v909, 0.5
    %v913 = vadd.f32 %v910, 0.5
    %v914 = vadd.f32 %v911, 0.5
    %v915 = vadd.f32 %v912, 0.5
    %v916 = vtanh.pop %v903
    %v917 = vmul.f32 %v914, %v431
    %v918 = vmul.f32 %v913, %v916
    %v919 = vadd.f32 %v917, %v918
    %v920 = vtanh.pop %v919
    %v921 = vmul.f32 %v915, %v920
    %s922 = scalar_lea.vmem [#allocation4], 32
    %v923 = vld [vmem:[%s922] sm:$0xff]
    %v924 = vld [vmem:[%s922 + $0x8] sm:$0xff]
    %v925 = vld [vmem:[%s922 + $0x10] sm:$0xff]
    %v926 = vld [vmem:[%s922 + $0x18] sm:$0xff]
    %927 = vmatpush.msra.mxu0 %v496
    %928 = vmatpush.msra.mxu0 %v492
    %929 = vmatpush.msra.mxu0 %v488
    %930 = vmatpush.msra.mxu0 %v484
    %931 = vmatpush.msra.mxu0 %v480
    %932 = vmatpush.msra.mxu0 %v476
    %933 = vmatpush.msra.mxu0 %v472
    %934 = vmatpush.msra.mxu0 %v468
    %935 = vmatpush.msra.mxu0 %v464
    %936 = vmatpush.msra.mxu0 %v460
    %937 = vmatpush.msra.mxu0 %v456
    %938 = vmatpush.msra.mxu0 %v452
    %939 = vmatpush.msra.mxu0 %v448
    %940 = vmatpush.msra.mxu0 %v444
    %941 = vmatpush.msra.mxu0 %v440
    %942 = vmatpush.msra.mxu0 %v436
    %943 = vmatmul.f32.gmra.mxu0 %v601
    %v944 = vpop.f32.mrf.mxu0
    %v945 = vadd.f32 0.0, %v944
    %946 = vdwg.mxu0
    %947 = vmatpush.msra.mxu0 %v497
    %948 = vmatpush.msra.mxu0 %v493
    %949 = vmatpush.msra.mxu0 %v489
    %950 = vmatpush.msra.mxu0 %v485
    %951 = vmatpush.msra.mxu0 %v481
    %952 = vmatpush.msra.mxu0 %v477
    %953 = vmatpush.msra.mxu0 %v473
    %954 = vmatpush.msra.mxu0 %v469
    %955 = vmatpush.msra.mxu0 %v465
    %956 = vmatpush.msra.mxu0 %v461
    %957 = vmatpush.msra.mxu0 %v457
    %958 = vmatpush.msra.mxu0 %v453
    %959 = vmatpush.msra.mxu0 %v449
    %960 = vmatpush.msra.mxu0 %v445
    %961 = vmatpush.msra.mxu0 %v441
    %962 = vmatpush.msra.mxu0 %v437
    %963 = vmatmul.f32.gmra.mxu0 %v601
    %v964 = vpop.f32.mrf.mxu0
    %v965 = vadd.f32 0.0, %v964
    %966 = vdwg.mxu0
    %967 = vmatpush.msra.mxu0 %v498
    %968 = vmatpush.msra.mxu0 %v494
    %969 = vmatpush.msra.mxu0 %v490
    %970 = vmatpush.msra.mxu0 %v486
    %971 = vmatpush.msra.mxu0 %v482
    %972 = vmatpush.msra.mxu0 %v478
    %973 = vmatpush.msra.mxu0 %v474
    %974 = vmatpush.msra.mxu0 %v470
    %975 = vmatpush.msra.mxu0 %v466
    %976 = vmatpush.msra.mxu0 %v462
    %977 = vmatpush.msra.mxu0 %v458
    %978 = vmatpush.msra.mxu0 %v454
    %979 = vmatpush.msra.mxu0 %v450
    %980 = vmatpush.msra.mxu0 %v446
    %981 = vmatpush.msra.mxu0 %v442
    %982 = vmatpush.msra.mxu0 %v438
    %983 = vmatmul.f32.gmra.mxu0 %v601
    %v984 = vpop.f32.mrf.mxu0
    %v985 = vadd.f32 0.0, %v984
    %986 = vdwg.mxu0
    %987 = vmatpush.msra.mxu0 %v499
    %988 = vmatpush.msra.mxu0 %v495
    %989 = vmatpush.msra.mxu0 %v491
    %990 = vmatpush.msra.mxu0 %v487
    %991 = vmatpush.msra.mxu0 %v483
    %992 = vmatpush.msra.mxu0 %v479
    %993 = vmatpush.msra.mxu0 %v475
    %994 = vmatpush.msra.mxu0 %v471
    %995 = vmatpush.msra.mxu0 %v467
    %996 = vmatpush.msra.mxu0 %v463
    %997 = vmatpush.msra.mxu0 %v459
    %998 = vmatpush.msra.mxu0 %v455
    %999 = vmatpush.msra.mxu0 %v451
    %1000 = vmatpush.msra.mxu0 %v447
    %1001 = vmatpush.msra.mxu0 %v443
    %1002 = vmatpush.msra.mxu0 %v439
    %1003 = vmatmul.f32.gmra.mxu0 %v601
    %v1004 = vpop.f32.mrf.mxu0
    %v1005 = vadd.f32 0.0, %v1004
    %1006 = vdwg.mxu0
    %v1007 = vadd.f32 %v923, %v945
    %v1008 = vadd.f32 %v924, %v965
    %v1009 = vadd.f32 %v925, %v985
    %v1010 = vadd.f32 %v926, %v1005
    %v1011 = vmul.f32 %v1007, 0.5
    %v1012 = vmul.f32 %v1008, 0.5
    %v1013 = vmul.f32 %v1009, 0.5
    %v1014 = vtanh.pop %v1011
    %v1015 = vtanh.pop %v1012
    %v1016 = vtanh.pop %v1013
    %v1017 = vmul.f32 %v1014, 0.5
    %v1018 = vmul.f32 %v1015, 0.5
    %v1019 = vmul.f32 %v1016, 0.5
    %v1020 = vadd.f32 %v1017, 0.5
    %v1021 = vadd.f32 %v1018, 0.5
    %v1022 = vadd.f32 %v1019, 0.5
    %v1023 = vtanh.pop %v1010
    %v1024 = vmul.f32 %v1021, %v599
    %v1025 = vmul.f32 %v1020, %v1023
    %v1026 = vadd.f32 %v1024, %v1025
    %v1027 = vtanh.pop %v1026
    %v1028 = vmul.f32 %v1022, %v1027
    %1029 = vmatpush.msra.mxu0 %v726
    %1030 = vmatpush.msra.mxu0 %v722
    %1031 = vmatpush.msra.mxu0 %v718
    %1032 = vmatpush.msra.mxu0 %v714
    %1033 = vmatpush.msra.mxu0 %v710
    %1034 = vmatpush.msra.mxu0 %v706
    %1035 = vmatpush.msra.mxu0 %v702
    %1036 = vmatpush.msra.mxu0 %v698
    %1037 = vmatpush.msra.mxu0 %v694
    %1038 = vmatpush.msra.mxu0 %v690
    %1039 = vmatpush.msra.mxu0 %v686
    %1040 = vmatpush.msra.mxu0 %v682
    %1041 = vmatpush.msra.mxu0 %v678
    %1042 = vmatpush.msra.mxu0 %v674
    %1043 = vmatpush.msra.mxu0 %v670
    %1044 = vmatpush.msra.mxu0 %v666
    %1045 = vmatmul.f32.gmra.mxu0 %v921
    %v1046 = vpop.f32.mrf.mxu0
    %v1047 = vadd.f32 0.0, %v1046
    %1048 = vdwg.mxu0
    %1049 = vmatpush.msra.mxu0 %v727
    %1050 = vmatpush.msra.mxu0 %v723
    %1051 = vmatpush.msra.mxu0 %v719
    %1052 = vmatpush.msra.mxu0 %v715
    %1053 = vmatpush.msra.mxu0 %v711
    %1054 = vmatpush.msra.mxu0 %v707
    %1055 = vmatpush.msra.mxu0 %v703
    %1056 = vmatpush.msra.mxu0 %v699
    %1057 = vmatpush.msra.mxu0 %v695
    %1058 = vmatpush.msra.mxu0 %v691
    %1059 = vmatpush.msra.mxu0 %v687
    %1060 = vmatpush.msra.mxu0 %v683
    %1061 = vmatpush.msra.mxu0 %v679
    %1062 = vmatpush.msra.mxu0 %v675
    %1063 = vmatpush.msra.mxu0 %v671
    %1064 = vmatpush.msra.mxu0 %v667
    %1065 = vmatmul.f32.gmra.mxu0 %v921
    %v1066 = vpop.f32.mrf.mxu0
    %v1067 = vadd.f32 0.0, %v1066
    %1068 = vdwg.mxu0
    %1069 = vmatpush.msra.mxu0 %v728
    %1070 = vmatpush.msra.mxu0 %v724
    %1071 = vmatpush.msra.mxu0 %v720
    %1072 = vmatpush.msra.mxu0 %v716
    %1073 = vmatpush.msra.mxu0 %v712
    %1074 = vmatpush.msra.mxu0 %v708
    %1075 = vmatpush.msra.mxu0 %v704
    %1076 = vmatpush.msra.mxu0 %v700
    %1077 = vmatpush.msra.mxu0 %v696
    %1078 = vmatpush.msra.mxu0 %v692
    %1079 = vmatpush.msra.mxu0 %v688
    %1080 = vmatpush.msra.mxu0 %v684
    %1081 = vmatpush.msra.mxu0 %v680
    %1082 = vmatpush.msra.mxu0 %v676
    %1083 = vmatpush.msra.mxu0 %v672
    %1084 = vmatpush.msra.mxu0 %v668
    %1085 = vmatmul.f32.gmra.mxu0 %v921
    %v1086 = vpop.f32.mrf.mxu0
    %v1087 = vadd.f32 0.0, %v1086
    %1088 = vdwg.mxu0
    %1089 = vmatpush.msra.mxu0 %v729
    %1090 = vmatpush.msra.mxu0 %v725
    %1091 = vmatpush.msra.mxu0 %v721
    %1092 = vmatpush.msra.mxu0 %v717
    %1093 = vmatpush.msra.mxu0 %v713
    %1094 = vmatpush.msra.mxu0 %v709
    %1095 = vmatpush.msra.mxu0 %v705
    %1096 = vmatpush.msra.mxu0 %v701
    %1097 = vmatpush.msra.mxu0 %v697
    %1098 = vmatpush.msra.mxu0 %v693
    %1099 = vmatpush.msra.mxu0 %v689
    %1100 = vmatpush.msra.mxu0 %v685
    %1101 = vmatpush.msra.mxu0 %v681
    %1102 = vmatpush.msra.mxu0 %v677
    %1103 = vmatpush.msra.mxu0 %v673
    %1104 = vmatpush.msra.mxu0 %v669
    %1105 = vmatmul.f32.gmra.mxu0 %v921
    %v1106 = vpop.f32.mrf.mxu0
    %v1107 = vadd.f32 0.0, %v1106
    %1108 = vdwg.mxu0
    %1109 = vmatpush.msra.mxu0 %v662
    %1110 = vmatpush.msra.mxu0 %v658
    %1111 = vmatpush.msra.mxu0 %v654
    %1112 = vmatpush.msra.mxu0 %v650
    %1113 = vmatpush.msra.mxu0 %v646
    %1114 = vmatpush.msra.mxu0 %v642
    %1115 = vmatpush.msra.mxu0 %v638
    %1116 = vmatpush.msra.mxu0 %v634
    %1117 = vmatpush.msra.mxu0 %v630
    %1118 = vmatpush.msra.mxu0 %v626
    %1119 = vmatpush.msra.mxu0 %v622
    %1120 = vmatpush.msra.mxu0 %v618
    %1121 = vmatpush.msra.mxu0 %v614
    %1122 = vmatpush.msra.mxu0 %v610
    %1123 = vmatpush.msra.mxu0 %v606
    %1124 = vmatpush.msra.mxu0 %v602
    %1125 = vmatmul.f32.gmra.mxu0 %v1028
    %v1126 = vpop.f32.mrf.mxu0
    %v1127 = vadd.f32 %v1047, %v1126
    %1128 = vdwg.mxu0
    %1129 = vmatpush.msra.mxu0 %v663
    %1130 = vmatpush.msra.mxu0 %v659
    %1131 = vmatpush.msra.mxu0 %v655
    %1132 = vmatpush.msra.mxu0 %v651
    %1133 = vmatpush.msra.mxu0 %v647
    %1134 = vmatpush.msra.mxu0 %v643
    %1135 = vmatpush.msra.mxu0 %v639
    %1136 = vmatpush.msra.mxu0 %v635
    %1137 = vmatpush.msra.mxu0 %v631
    %1138 = vmatpush.msra.mxu0 %v627
    %1139 = vmatpush.msra.mxu0 %v623
    %1140 = vmatpush.msra.mxu0 %v619
    %1141 = vmatpush.msra.mxu0 %v615
    %1142 = vmatpush.msra.mxu0 %v611
    %1143 = vmatpush.msra.mxu0 %v607
    %1144 = vmatpush.msra.mxu0 %v603
    %1145 = vmatmul.f32.gmra.mxu0 %v1028
    %v1146 = vpop.f32.mrf.mxu0
    %v1147 = vadd.f32 %v1067, %v1146
    %1148 = vdwg.mxu0
    %1149 = vmatpush.msra.mxu0 %v664
    %1150 = vmatpush.msra.mxu0 %v660
    %1151 = vmatpush.msra.mxu0 %v656
    %1152 = vmatpush.msra.mxu0 %v652
    %1153 = vmatpush.msra.mxu0 %v648
    %1154 = vmatpush.msra.mxu0 %v644
    %1155 = vmatpush.msra.mxu0 %v640
    %1156 = vmatpush.msra.mxu0 %v636
    %1157 = vmatpush.msra.mxu0 %v632
    %1158 = vmatpush.msra.mxu0 %v628
    %1159 = vmatpush.msra.mxu0 %v624
    %1160 = vmatpush.msra.mxu0 %v620
    %1161 = vmatpush.msra.mxu0 %v616
    %1162 = vmatpush.msra.mxu0 %v612
    %1163 = vmatpush.msra.mxu0 %v608
    %1164 = vmatpush.msra.mxu0 %v604
    %1165 = vmatmul.f32.gmra.mxu0 %v1028
    %v1166 = vpop.f32.mrf.mxu0
    %v1167 = vadd.f32 %v1087, %v1166
    %1168 = vdwg.mxu0
    %1169 = vmatpush.msra.mxu0 %v665
    %1170 = vmatpush.msra.mxu0 %v661
    %1171 = vmatpush.msra.mxu0 %v657
    %1172 = vmatpush.msra.mxu0 %v653
    %1173 = vmatpush.msra.mxu0 %v649
    %1174 = vmatpush.msra.mxu0 %v645
    %1175 = vmatpush.msra.mxu0 %v641
    %1176 = vmatpush.msra.mxu0 %v637
    %1177 = vmatpush.msra.mxu0 %v633
    %1178 = vmatpush.msra.mxu0 %v629
    %1179 = vmatpush.msra.mxu0 %v625
    %1180 = vmatpush.msra.mxu0 %v621
    %1181 = vmatpush.msra.mxu0 %v617
    %1182 = vmatpush.msra.mxu0 %v613
    %1183 = vmatpush.msra.mxu0 %v609
    %1184 = vmatpush.msra.mxu0 %v605
    %1185 = vmatmul.f32.gmra.mxu0 %v1028
    %v1186 = vpop.f32.mrf.mxu0
    %v1187 = vadd.f32 %v1107, %v1186
    %1188 = vdwg.mxu0
    %v1189 = vadd.f32 %v1127, %v892
    %v1190 = vadd.f32 %v1147, %v893
    %v1191 = vadd.f32 %v1167, %v894
    %v1192 = vadd.f32 %v1187, %v895
    %v1193 = vmul.f32 %v1189, 0.5
    %v1194 = vmul.f32 %v1190, 0.5
    %v1195 = vmul.f32 %v1191, 0.5
    %v1196 = vtanh.pop %v1193
    %v1197 = vtanh.pop %v1194
    %v1198 = vtanh.pop %v1195
    %v1199 = vmul.f32 %v1196, 0.5
    %v1200 = vmul.f32 %v1197, 0.5
    %v1201 = vmul.f32 %v1198, 0.5
    %v1202 = vadd.f32 %v1199, 0.5
    %v1203 = vadd.f32 %v1200, 0.5
    %v1204 = vadd.f32 %v1201, 0.5
    %v1205 = vtanh.pop %v1192
    %v1206 = vmul.f32 %v1203, %v919
    %v1207 = vmul.f32 %v1202, %v1205
    %v1208 = vadd.f32 %v1206, %v1207
    %v1209 = vtanh.pop %v1208
    %v1210 = vmul.f32 %v1204, %v1209
    %s1211 = scalar_lea.vmem [#allocation4], 64
    %v1212 = vld [vmem:[%s1211] sm:$0xff]
    %v1213 = vld [vmem:[%s1211 + $0x8] sm:$0xff]
    %v1214 = vld [vmem:[%s1211 + $0x10] sm:$0xff]
    %v1215 = vld [vmem:[%s1211 + $0x18] sm:$0xff]
    %1216 = vmatpush.msra.mxu0 %v496
    %1217 = vmatpush.msra.mxu0 %v492
    %1218 = vmatpush.msra.mxu0 %v488
    %1219 = vmatpush.msra.mxu0 %v484
    %1220 = vmatpush.msra.mxu0 %v480
    %1221 = vmatpush.msra.mxu0 %v476
    %1222 = vmatpush.msra.mxu0 %v472
    %1223 = vmatpush.msra.mxu0 %v468
    %1224 = vmatpush.msra.mxu0 %v464
    %1225 = vmatpush.msra.mxu0 %v460
    %1226 = vmatpush.msra.mxu0 %v456
    %1227 = vmatpush.msra.mxu0 %v452
    %1228 = vmatpush.msra.mxu0 %v448
    %1229 = vmatpush.msra.mxu0 %v444
    %1230 = vmatpush.msra.mxu0 %v440
    %1231 = vmatpush.msra.mxu0 %v436
    %1232 = vmatmul.f32.gmra.mxu0 %v1028
    %v1233 = vpop.f32.mrf.mxu0
    %v1234 = vadd.f32 0.0, %v1233
    %1235 = vdwg.mxu0
    %1236 = vmatpush.msra.mxu0 %v497
    %1237 = vmatpush.msra.mxu0 %v493
    %1238 = vmatpush.msra.mxu0 %v489
    %1239 = vmatpush.msra.mxu0 %v485
    %1240 = vmatpush.msra.mxu0 %v481
    %1241 = vmatpush.msra.mxu0 %v477
    %1242 = vmatpush.msra.mxu0 %v473
    %1243 = vmatpush.msra.mxu0 %v469
    %1244 = vmatpush.msra.mxu0 %v465
    %1245 = vmatpush.msra.mxu0 %v461
    %1246 = vmatpush.msra.mxu0 %v457
    %1247 = vmatpush.msra.mxu0 %v453
    %1248 = vmatpush.msra.mxu0 %v449
    %1249 = vmatpush.msra.mxu0 %v445
    %1250 = vmatpush.msra.mxu0 %v441
    %1251 = vmatpush.msra.mxu0 %v437
    %1252 = vmatmul.f32.gmra.mxu0 %v1028
    %v1253 = vpop.f32.mrf.mxu0
    %v1254 = vadd.f32 0.0, %v1253
    %1255 = vdwg.mxu0
    %1256 = vmatpush.msra.mxu0 %v498
    %1257 = vmatpush.msra.mxu0 %v494
    %1258 = vmatpush.msra.mxu0 %v490
    %1259 = vmatpush.msra.mxu0 %v486
    %1260 = vmatpush.msra.mxu0 %v482
    %1261 = vmatpush.msra.mxu0 %v478
    %1262 = vmatpush.msra.mxu0 %v474
    %1263 = vmatpush.msra.mxu0 %v470
    %1264 = vmatpush.msra.mxu0 %v466
    %1265 = vmatpush.msra.mxu0 %v462
    %1266 = vmatpush.msra.mxu0 %v458
    %1267 = vmatpush.msra.mxu0 %v454
    %1268 = vmatpush.msra.mxu0 %v450
    %1269 = vmatpush.msra.mxu0 %v446
    %1270 = vmatpush.msra.mxu0 %v442
    %1271 = vmatpush.msra.mxu0 %v438
    %1272 = vmatmul.f32.gmra.mxu0 %v1028
    %v1273 = vpop.f32.mrf.mxu0
    %v1274 = vadd.f32 0.0, %v1273
    %1275 = vdwg.mxu0
    %1276 = vmatpush.msra.mxu0 %v499
    %1277 = vmatpush.msra.mxu0 %v495
    %1278 = vmatpush.msra.mxu0 %v491
    %1279 = vmatpush.msra.mxu0 %v487
    %1280 = vmatpush.msra.mxu0 %v483
    %1281 = vmatpush.msra.mxu0 %v479
    %1282 = vmatpush.msra.mxu0 %v475
    %1283 = vmatpush.msra.mxu0 %v471
    %1284 = vmatpush.msra.mxu0 %v467
    %1285 = vmatpush.msra.mxu0 %v463
    %1286 = vmatpush.msra.mxu0 %v459
    %1287 = vmatpush.msra.mxu0 %v455
    %1288 = vmatpush.msra.mxu0 %v451
    %1289 = vmatpush.msra.mxu0 %v447
    %1290 = vmatpush.msra.mxu0 %v443
    %1291 = vmatpush.msra.mxu0 %v439
    %1292 = vmatmul.f32.gmra.mxu0 %v1028
    %v1293 = vpop.f32.mrf.mxu0
    %v1294 = vadd.f32 0.0, %v1293
    %1295 = vdwg.mxu0
    %v1296 = vadd.f32 %v1212, %v1234
    %v1297 = vadd.f32 %v1213, %v1254
    %v1298 = vadd.f32 %v1214, %v1274
    %v1299 = vadd.f32 %v1215, %v1294
    %v1300 = vmul.f32 %v1296, 0.5
    %v1301 = vmul.f32 %v1297, 0.5
    %v1302 = vmul.f32 %v1298, 0.5
    %v1303 = vtanh.pop %v1300
    %v1304 = vtanh.pop %v1301
    %v1305 = vtanh.pop %v1302
    %v1306 = vmul.f32 %v1303, 0.5
    %v1307 = vmul.f32 %v1304, 0.5
    %v1308 = vmul.f32 %v1305, 0.5
    %v1309 = vadd.f32 %v1306, 0.5
    %v1310 = vadd.f32 %v1307, 0.5
    %v1311 = vadd.f32 %v1308, 0.5
    %v1312 = vtanh.pop %v1299
    %v1313 = vmul.f32 %v1310, %v1026
    %v1314 = vmul.f32 %v1309, %v1312
    %v1315 = vadd.f32 %v1313, %v1314
    %v1316 = vtanh.pop %v1315
    %v1317 = vmul.f32 %v1311, %v1316
    %1318 = vmatpush.msra.mxu0 %v726
    %1319 = vmatpush.msra.mxu0 %v722
    %1320 = vmatpush.msra.mxu0 %v718
    %1321 = vmatpush.msra.mxu0 %v714
    %1322 = vmatpush.msra.mxu0 %v710
    %1323 = vmatpush.msra.mxu0 %v706
    %1324 = vmatpush.msra.mxu0 %v702
    %1325 = vmatpush.msra.mxu0 %v698
    %1326 = vmatpush.msra.mxu0 %v694
    %1327 = vmatpush.msra.mxu0 %v690
    %1328 = vmatpush.msra.mxu0 %v686
    %1329 = vmatpush.msra.mxu0 %v682
    %1330 = vmatpush.msra.mxu0 %v678
    %1331 = vmatpush.msra.mxu0 %v674
    %1332 = vmatpush.msra.mxu0 %v670
    %1333 = vmatpush.msra.mxu0 %v666
    %1334 = vmatmul.f32.gmra.mxu0 %v1210
    %v1335 = vpop.f32.mrf.mxu0
    %v1336 = vadd.f32 0.0, %v1335
    %1337 = vdwg.mxu0
    %1338 = vmatpush.msra.mxu0 %v727
    %1339 = vmatpush.msra.mxu0 %v723
    %1340 = vmatpush.msra.mxu0 %v719
    %1341 = vmatpush.msra.mxu0 %v715
    %1342 = vmatpush.msra.mxu0 %v711
    %1343 = vmatpush.msra.mxu0 %v707
    %1344 = vmatpush.msra.mxu0 %v703
    %1345 = vmatpush.msra.mxu0 %v699
    %1346 = vmatpush.msra.mxu0 %v695
    %1347 = vmatpush.msra.mxu0 %v691
    %1348 = vmatpush.msra.mxu0 %v687
    %1349 = vmatpush.msra.mxu0 %v683
    %1350 = vmatpush.msra.mxu0 %v679
    %1351 = vmatpush.msra.mxu0 %v675
    %1352 = vmatpush.msra.mxu0 %v671
    %1353 = vmatpush.msra.mxu0 %v667
    %1354 = vmatmul.f32.gmra.mxu0 %v1210
    %v1355 = vpop.f32.mrf.mxu0
    %v1356 = vadd.f32 0.0, %v1355
    %1357 = vdwg.mxu0
    %1358 = vmatpush.msra.mxu0 %v728
    %1359 = vmatpush.msra.mxu0 %v724
    %1360 = vmatpush.msra.mxu0 %v720
    %1361 = vmatpush.msra.mxu0 %v716
    %1362 = vmatpush.msra.mxu0 %v712
    %1363 = vmatpush.msra.mxu0 %v708
    %1364 = vmatpush.msra.mxu0 %v704
    %1365 = vmatpush.msra.mxu0 %v700
    %1366 = vmatpush.msra.mxu0 %v696
    %1367 = vmatpush.msra.mxu0 %v692
    %1368 = vmatpush.msra.mxu0 %v688
    %1369 = vmatpush.msra.mxu0 %v684
    %1370 = vmatpush.msra.mxu0 %v680
    %1371 = vmatpush.msra.mxu0 %v676
    %1372 = vmatpush.msra.mxu0 %v672
    %1373 = vmatpush.msra.mxu0 %v668
    %1374 = vmatmul.f32.gmra.mxu0 %v1210
    %v1375 = vpop.f32.mrf.mxu0
    %v1376 = vadd.f32 0.0, %v1375
    %1377 = vdwg.mxu0
    %1378 = vmatpush.msra.mxu0 %v729
    %1379 = vmatpush.msra.mxu0 %v725
    %1380 = vmatpush.msra.mxu0 %v721
    %1381 = vmatpush.msra.mxu0 %v717
    %1382 = vmatpush.msra.mxu0 %v713
    %1383 = vmatpush.msra.mxu0 %v709
    %1384 = vmatpush.msra.mxu0 %v705
    %1385 = vmatpush.msra.mxu0 %v701
    %1386 = vmatpush.msra.mxu0 %v697
    %1387 = vmatpush.msra.mxu0 %v693
    %1388 = vmatpush.msra.mxu0 %v689
    %1389 = vmatpush.msra.mxu0 %v685
    %1390 = vmatpush.msra.mxu0 %v681
    %1391 = vmatpush.msra.mxu0 %v677
    %1392 = vmatpush.msra.mxu0 %v673
    %1393 = vmatpush.msra.mxu0 %v669
    %1394 = vmatmul.f32.gmra.mxu0 %v1210
    %v1395 = vpop.f32.mrf.mxu0
    %v1396 = vadd.f32 0.0, %v1395
    %1397 = vdwg.mxu0
    %1398 = vmatpush.msra.mxu0 %v662
    %1399 = vmatpush.msra.mxu0 %v658
    %1400 = vmatpush.msra.mxu0 %v654
    %1401 = vmatpush.msra.mxu0 %v650
    %1402 = vmatpush.msra.mxu0 %v646
    %1403 = vmatpush.msra.mxu0 %v642
    %1404 = vmatpush.msra.mxu0 %v638
    %1405 = vmatpush.msra.mxu0 %v634
    %1406 = vmatpush.msra.mxu0 %v630
    %1407 = vmatpush.msra.mxu0 %v626
    %1408 = vmatpush.msra.mxu0 %v622
    %1409 = vmatpush.msra.mxu0 %v618
    %1410 = vmatpush.msra.mxu0 %v614
    %1411 = vmatpush.msra.mxu0 %v610
    %1412 = vmatpush.msra.mxu0 %v606
    %1413 = vmatpush.msra.mxu0 %v602
    %1414 = vmatmul.f32.gmra.mxu0 %v1317
    %v1415 = vpop.f32.mrf.mxu0
    %v1416 = vadd.f32 %v1336, %v1415
    %1417 = vdwg.mxu0
    %1418 = vmatpush.msra.mxu0 %v663
    %1419 = vmatpush.msra.mxu0 %v659
    %1420 = vmatpush.msra.mxu0 %v655
    %1421 = vmatpush.msra.mxu0 %v651
    %1422 = vmatpush.msra.mxu0 %v647
    %1423 = vmatpush.msra.mxu0 %v643
    %1424 = vmatpush.msra.mxu0 %v639
    %1425 = vmatpush.msra.mxu0 %v635
    %1426 = vmatpush.msra.mxu0 %v631
    %1427 = vmatpush.msra.mxu0 %v627
    %1428 = vmatpush.msra.mxu0 %v623
    %1429 = vmatpush.msra.mxu0 %v619
    %1430 = vmatpush.msra.mxu0 %v615
    %1431 = vmatpush.msra.mxu0 %v611
    %1432 = vmatpush.msra.mxu0 %v607
    %1433 = vmatpush.msra.mxu0 %v603
    %1434 = vmatmul.f32.gmra.mxu0 %v1317
    %v1435 = vpop.f32.mrf.mxu0
    %v1436 = vadd.f32 %v1356, %v1435
    %1437 = vdwg.mxu0
    %1438 = vmatpush.msra.mxu0 %v664
    %1439 = vmatpush.msra.mxu0 %v660
    %1440 = vmatpush.msra.mxu0 %v656
    %1441 = vmatpush.msra.mxu0 %v652
    %1442 = vmatpush.msra.mxu0 %v648
    %1443 = vmatpush.msra.mxu0 %v644
    %1444 = vmatpush.msra.mxu0 %v640
    %1445 = vmatpush.msra.mxu0 %v636
    %1446 = vmatpush.msra.mxu0 %v632
    %1447 = vmatpush.msra.mxu0 %v628
    %1448 = vmatpush.msra.mxu0 %v624
    %1449 = vmatpush.msra.mxu0 %v620
    %1450 = vmatpush.msra.mxu0 %v616
    %1451 = vmatpush.msra.mxu0 %v612
    %1452 = vmatpush.msra.mxu0 %v608
    %1453 = vmatpush.msra.mxu0 %v604
    %1454 = vmatmul.f32.gmra.mxu0 %v1317
    %v1455 = vpop.f32.mrf.mxu0
    %v1456 = vadd.f32 %v1376, %v1455
    %1457 = vdwg.mxu0
    %1458 = vmatpush.msra.mxu0 %v665
    %1459 = vmatpush.msra.mxu0 %v661
    %1460 = vmatpush.msra.mxu0 %v657
    %1461 = vmatpush.msra.mxu0 %v653
    %1462 = vmatpush.msra.mxu0 %v649
    %1463 = vmatpush.msra.mxu0 %v645
    %1464 = vmatpush.msra.mxu0 %v641
    %1465 = vmatpush.msra.mxu0 %v637
    %1466 = vmatpush.msra.mxu0 %v633
    %1467 = vmatpush.msra.mxu0 %v629
    %1468 = vmatpush.msra.mxu0 %v625
    %1469 = vmatpush.msra.mxu0 %v621
    %1470 = vmatpush.msra.mxu0 %v617
    %1471 = vmatpush.msra.mxu0 %v613
    %1472 = vmatpush.msra.mxu0 %v609
    %1473 = vmatpush.msra.mxu0 %v605
    %1474 = vmatmul.f32.gmra.mxu0 %v1317
    %v1475 = vpop.f32.mrf.mxu0
    %v1476 = vadd.f32 %v1396, %v1475
    %1477 = vdwg.mxu0
    %v1478 = vadd.f32 %v1416, %v892
    %v1479 = vadd.f32 %v1436, %v893
    %v1480 = vadd.f32 %v1456, %v894
    %v1481 = vadd.f32 %v1476, %v895
    %v1482 = vmul.f32 %v1478, 0.5
    %v1483 = vmul.f32 %v1479, 0.5
    %v1484 = vmul.f32 %v1480, 0.5
    %v1485 = vtanh.pop %v1482
    %v1486 = vtanh.pop %v1483
    %v1487 = vtanh.pop %v1484
    %v1488 = vmul.f32 %v1485, 0.5
    %v1489 = vmul.f32 %v1486, 0.5
    %v1490 = vmul.f32 %v1487, 0.5
    %v1491 = vadd.f32 %v1488, 0.5
    %v1492 = vadd.f32 %v1489, 0.5
    %v1493 = vadd.f32 %v1490, 0.5
    %v1494 = vtanh.pop %v1481
    %v1495 = vmul.f32 %v1492, %v1208
    %v1496 = vmul.f32 %v1491, %v1494
    %v1497 = vadd.f32 %v1495, %v1496
    %v1498 = vtanh.pop %v1497
    %v1499 = vmul.f32 %v1493, %v1498
    %s1500 = scalar_lea.vmem [#allocation4], 96
    %v1501 = vld [vmem:[%s1500] sm:$0xff]
    %v1502 = vld [vmem:[%s1500 + $0x8] sm:$0xff]
    %v1503 = vld [vmem:[%s1500 + $0x10] sm:$0xff]
    %v1504 = vld [vmem:[%s1500 + $0x18] sm:$0xff]
    %1505 = vmatpush.msra.mxu0 %v496
    %1506 = vmatpush.msra.mxu0 %v492
    %1507 = vmatpush.msra.mxu0 %v488
    %1508 = vmatpush.msra.mxu0 %v484
    %1509 = vmatpush.msra.mxu0 %v480
    %1510 = vmatpush.msra.mxu0 %v476
    %1511 = vmatpush.msra.mxu0 %v472
    %1512 = vmatpush.msra.mxu0 %v468
    %1513 = vmatpush.msra.mxu0 %v464
    %1514 = vmatpush.msra.mxu0 %v460
    %1515 = vmatpush.msra.mxu0 %v456
    %1516 = vmatpush.msra.mxu0 %v452
    %1517 = vmatpush.msra.mxu0 %v448
    %1518 = vmatpush.msra.mxu0 %v444
    %1519 = vmatpush.msra.mxu0 %v440
    %1520 = vmatpush.msra.mxu0 %v436
    %1521 = vmatmul.f32.gmra.mxu0 %v1317
    %v1522 = vpop.f32.mrf.mxu0
    %v1523 = vadd.f32 0.0, %v1522
    %1524 = vdwg.mxu0
    %1525 = vmatpush.msra.mxu0 %v497
    %1526 = vmatpush.msra.mxu0 %v493
    %1527 = vmatpush.msra.mxu0 %v489
    %1528 = vmatpush.msra.mxu0 %v485
    %1529 = vmatpush.msra.mxu0 %v481
    %1530 = vmatpush.msra.mxu0 %v477
    %1531 = vmatpush.msra.mxu0 %v473
    %1532 = vmatpush.msra.mxu0 %v469
    %1533 = vmatpush.msra.mxu0 %v465
    %1534 = vmatpush.msra.mxu0 %v461
    %1535 = vmatpush.msra.mxu0 %v457
    %1536 = vmatpush.msra.mxu0 %v453
    %1537 = vmatpush.msra.mxu0 %v449
    %1538 = vmatpush.msra.mxu0 %v445
    %1539 = vmatpush.msra.mxu0 %v441
    %1540 = vmatpush.msra.mxu0 %v437
    %1541 = vmatmul.f32.gmra.mxu0 %v1317
    %v1542 = vpop.f32.mrf.mxu0
    %v1543 = vadd.f32 0.0, %v1542
    %1544 = vdwg.mxu0
    %1545 = vmatpush.msra.mxu0 %v498
    %1546 = vmatpush.msra.mxu0 %v494
    %1547 = vmatpush.msra.mxu0 %v490
    %1548 = vmatpush.msra.mxu0 %v486
    %1549 = vmatpush.msra.mxu0 %v482
    %1550 = vmatpush.msra.mxu0 %v478
    %1551 = vmatpush.msra.mxu0 %v474
    %1552 = vmatpush.msra.mxu0 %v470
    %1553 = vmatpush.msra.mxu0 %v466
    %1554 = vmatpush.msra.mxu0 %v462
    %1555 = vmatpush.msra.mxu0 %v458
    %1556 = vmatpush.msra.mxu0 %v454
    %1557 = vmatpush.msra.mxu0 %v450
    %1558 = vmatpush.msra.mxu0 %v446
    %1559 = vmatpush.msra.mxu0 %v442
    %1560 = vmatpush.msra.mxu0 %v438
    %1561 = vmatmul.f32.gmra.mxu0 %v1317
    %v1562 = vpop.f32.mrf.mxu0
    %v1563 = vadd.f32 0.0, %v1562
    %1564 = vdwg.mxu0
    %1565 = vmatpush.msra.mxu0 %v499
    %1566 = vmatpush.msra.mxu0 %v495
    %1567 = vmatpush.msra.mxu0 %v491
    %1568 = vmatpush.msra.mxu0 %v487
    %1569 = vmatpush.msra.mxu0 %v483
    %1570 = vmatpush.msra.mxu0 %v479
    %1571 = vmatpush.msra.mxu0 %v475
    %1572 = vmatpush.msra.mxu0 %v471
    %1573 = vmatpush.msra.mxu0 %v467
    %1574 = vmatpush.msra.mxu0 %v463
    %1575 = vmatpush.msra.mxu0 %v459
    %1576 = vmatpush.msra.mxu0 %v455
    %1577 = vmatpush.msra.mxu0 %v451
    %1578 = vmatpush.msra.mxu0 %v447
    %1579 = vmatpush.msra.mxu0 %v443
    %1580 = vmatpush.msra.mxu0 %v439
    %1581 = vmatmul.f32.gmra.mxu0 %v1317
    %v1582 = vpop.f32.mrf.mxu0
    %v1583 = vadd.f32 0.0, %v1582
    %1584 = vdwg.mxu0
    %v1585 = vadd.f32 %v1501, %v1523
    %v1586 = vadd.f32 %v1502, %v1543
    %v1587 = vadd.f32 %v1503, %v1563
    %v1588 = vadd.f32 %v1504, %v1583
    %v1589 = vmul.f32 %v1585, 0.5
    %v1590 = vmul.f32 %v1586, 0.5
    %v1591 = vmul.f32 %v1587, 0.5
    %v1592 = vtanh.pop %v1589
    %v1593 = vtanh.pop %v1590
    %v1594 = vtanh.pop %v1591
    %v1595 = vmul.f32 %v1592, 0.5
    %v1596 = vmul.f32 %v1593, 0.5
    %v1597 = vmul.f32 %v1594, 0.5
    %v1598 = vadd.f32 %v1595, 0.5
    %v1599 = vadd.f32 %v1596, 0.5
    %v1600 = vadd.f32 %v1597, 0.5
    %v1601 = vtanh.pop %v1588
    %v1602 = vmul.f32 %v1599, %v1315
    %v1603 = vmul.f32 %v1598, %v1601
    %v1604 = vadd.f32 %v1602, %v1603
    %v1605 = vtanh.pop %v1604
    %v1606 = vmul.f32 %v1600, %v1605
    %1607 = vmatpush.msra.mxu0 %v726
    %1608 = vmatpush.msra.mxu0 %v722
    %1609 = vmatpush.msra.mxu0 %v718
    %1610 = vmatpush.msra.mxu0 %v714
    %1611 = vmatpush.msra.mxu0 %v710
    %1612 = vmatpush.msra.mxu0 %v706
    %1613 = vmatpush.msra.mxu0 %v702
    %1614 = vmatpush.msra.mxu0 %v698
    %1615 = vmatpush.msra.mxu0 %v694
    %1616 = vmatpush.msra.mxu0 %v690
    %1617 = vmatpush.msra.mxu0 %v686
    %1618 = vmatpush.msra.mxu0 %v682
    %1619 = vmatpush.msra.mxu0 %v678
    %1620 = vmatpush.msra.mxu0 %v674
    %1621 = vmatpush.msra.mxu0 %v670
    %1622 = vmatpush.msra.mxu0 %v666
    %1623 = vmatmul.f32.gmra.mxu0 %v1499
    %v1624 = vpop.f32.mrf.mxu0
    %v1625 = vadd.f32 0.0, %v1624
    %1626 = vdwg.mxu0
    %1627 = vmatpush.msra.mxu0 %v727
    %1628 = vmatpush.msra.mxu0 %v723
    %1629 = vmatpush.msra.mxu0 %v719
    %1630 = vmatpush.msra.mxu0 %v715
    %1631 = vmatpush.msra.mxu0 %v711
    %1632 = vmatpush.msra.mxu0 %v707
    %1633 = vmatpush.msra.mxu0 %v703
    %1634 = vmatpush.msra.mxu0 %v699
    %1635 = vmatpush.msra.mxu0 %v695
    %1636 = vmatpush.msra.mxu0 %v691
    %1637 = vmatpush.msra.mxu0 %v687
    %1638 = vmatpush.msra.mxu0 %v683
    %1639 = vmatpush.msra.mxu0 %v679
    %1640 = vmatpush.msra.mxu0 %v675
    %1641 = vmatpush.msra.mxu0 %v671
    %1642 = vmatpush.msra.mxu0 %v667
    %1643 = vmatmul.f32.gmra.mxu0 %v1499
    %v1644 = vpop.f32.mrf.mxu0
    %v1645 = vadd.f32 0.0, %v1644
    %1646 = vdwg.mxu0
    %1647 = vmatpush.msra.mxu0 %v728
    %1648 = vmatpush.msra.mxu0 %v724
    %1649 = vmatpush.msra.mxu0 %v720
    %1650 = vmatpush.msra.mxu0 %v716
    %1651 = vmatpush.msra.mxu0 %v712
    %1652 = vmatpush.msra.mxu0 %v708
    %1653 = vmatpush.msra.mxu0 %v704
    %1654 = vmatpush.msra.mxu0 %v700
    %1655 = vmatpush.msra.mxu0 %v696
    %1656 = vmatpush.msra.mxu0 %v692
    %1657 = vmatpush.msra.mxu0 %v688
    %1658 = vmatpush.msra.mxu0 %v684
    %1659 = vmatpush.msra.mxu0 %v680
    %1660 = vmatpush.msra.mxu0 %v676
    %1661 = vmatpush.msra.mxu0 %v672
    %1662 = vmatpush.msra.mxu0 %v668
    %1663 = vmatmul.f32.gmra.mxu0 %v1499
    %v1664 = vpop.f32.mrf.mxu0
    %v1665 = vadd.f32 0.0, %v1664
    %1666 = vdwg.mxu0
    %1667 = vmatpush.msra.mxu0 %v729
    %1668 = vmatpush.msra.mxu0 %v725
    %1669 = vmatpush.msra.mxu0 %v721
    %1670 = vmatpush.msra.mxu0 %v717
    %1671 = vmatpush.msra.mxu0 %v713
    %1672 = vmatpush.msra.mxu0 %v709
    %1673 = vmatpush.msra.mxu0 %v705
    %1674 = vmatpush.msra.mxu0 %v701
    %1675 = vmatpush.msra.mxu0 %v697
    %1676 = vmatpush.msra.mxu0 %v693
    %1677 = vmatpush.msra.mxu0 %v689
    %1678 = vmatpush.msra.mxu0 %v685
    %1679 = vmatpush.msra.mxu0 %v681
    %1680 = vmatpush.msra.mxu0 %v677
    %1681 = vmatpush.msra.mxu0 %v673
    %1682 = vmatpush.msra.mxu0 %v669
    %1683 = vmatmul.f32.gmra.mxu0 %v1499
    %v1684 = vpop.f32.mrf.mxu0
    %v1685 = vadd.f32 0.0, %v1684
    %1686 = vdwg.mxu0
    %1687 = vmatpush.msra.mxu0 %v662
    %1688 = vmatpush.msra.mxu0 %v658
    %1689 = vmatpush.msra.mxu0 %v654
    %1690 = vmatpush.msra.mxu0 %v650
    %1691 = vmatpush.msra.mxu0 %v646
    %1692 = vmatpush.msra.mxu0 %v642
    %1693 = vmatpush.msra.mxu0 %v638
    %1694 = vmatpush.msra.mxu0 %v634
    %1695 = vmatpush.msra.mxu0 %v630
    %1696 = vmatpush.msra.mxu0 %v626
    %1697 = vmatpush.msra.mxu0 %v622
    %1698 = vmatpush.msra.mxu0 %v618
    %1699 = vmatpush.msra.mxu0 %v614
    %1700 = vmatpush.msra.mxu0 %v610
    %1701 = vmatpush.msra.mxu0 %v606
    %1702 = vmatpush.msra.mxu0 %v602
    %1703 = vmatmul.f32.gmra.mxu0 %v1606
    %v1704 = vpop.f32.mrf.mxu0
    %v1705 = vadd.f32 %v1625, %v1704
    %1706 = vdwg.mxu0
    %1707 = vmatpush.msra.mxu0 %v663
    %1708 = vmatpush.msra.mxu0 %v659
    %1709 = vmatpush.msra.mxu0 %v655
    %1710 = vmatpush.msra.mxu0 %v651
    %1711 = vmatpush.msra.mxu0 %v647
    %1712 = vmatpush.msra.mxu0 %v643
    %1713 = vmatpush.msra.mxu0 %v639
    %1714 = vmatpush.msra.mxu0 %v635
    %1715 = vmatpush.msra.mxu0 %v631
    %1716 = vmatpush.msra.mxu0 %v627
    %1717 = vmatpush.msra.mxu0 %v623
    %1718 = vmatpush.msra.mxu0 %v619
    %1719 = vmatpush.msra.mxu0 %v615
    %1720 = vmatpush.msra.mxu0 %v611
    %1721 = vmatpush.msra.mxu0 %v607
    %1722 = vmatpush.msra.mxu0 %v603
    %1723 = vmatmul.f32.gmra.mxu0 %v1606
    %v1724 = vpop.f32.mrf.mxu0
    %v1725 = vadd.f32 %v1645, %v1724
    %1726 = vdwg.mxu0
    %1727 = vmatpush.msra.mxu0 %v664
    %1728 = vmatpush.msra.mxu0 %v660
    %1729 = vmatpush.msra.mxu0 %v656
    %1730 = vmatpush.msra.mxu0 %v652
    %1731 = vmatpush.msra.mxu0 %v648
    %1732 = vmatpush.msra.mxu0 %v644
    %1733 = vmatpush.msra.mxu0 %v640
    %1734 = vmatpush.msra.mxu0 %v636
    %1735 = vmatpush.msra.mxu0 %v632
    %1736 = vmatpush.msra.mxu0 %v628
    %1737 = vmatpush.msra.mxu0 %v624
    %1738 = vmatpush.msra.mxu0 %v620
    %1739 = vmatpush.msra.mxu0 %v616
    %1740 = vmatpush.msra.mxu0 %v612
    %1741 = vmatpush.msra.mxu0 %v608
    %1742 = vmatpush.msra.mxu0 %v604
    %1743 = vmatmul.f32.gmra.mxu0 %v1606
    %v1744 = vpop.f32.mrf.mxu0
    %v1745 = vadd.f32 %v1665, %v1744
    %1746 = vdwg.mxu0
    %1747 = vmatpush.msra.mxu0 %v665
    %1748 = vmatpush.msra.mxu0 %v661
    %1749 = vmatpush.msra.mxu0 %v657
    %1750 = vmatpush.msra.mxu0 %v653
    %1751 = vmatpush.msra.mxu0 %v649
    %1752 = vmatpush.msra.mxu0 %v645
    %1753 = vmatpush.msra.mxu0 %v641
    %1754 = vmatpush.msra.mxu0 %v637
    %1755 = vmatpush.msra.mxu0 %v633
    %1756 = vmatpush.msra.mxu0 %v629
    %1757 = vmatpush.msra.mxu0 %v625
    %1758 = vmatpush.msra.mxu0 %v621
    %1759 = vmatpush.msra.mxu0 %v617
    %1760 = vmatpush.msra.mxu0 %v613
    %1761 = vmatpush.msra.mxu0 %v609
    %1762 = vmatpush.msra.mxu0 %v605
    %1763 = vmatmul.f32.gmra.mxu0 %v1606
    %v1764 = vpop.f32.mrf.mxu0
    %v1765 = vadd.f32 %v1685, %v1764
    %1766 = vdwg.mxu0
    %v1767 = vadd.f32 %v1705, %v892
    %v1768 = vadd.f32 %v1725, %v893
    %v1769 = vadd.f32 %v1745, %v894
    %v1770 = vadd.f32 %v1765, %v895
    %v1771 = vmul.f32 %v1767, 0.5
    %v1772 = vmul.f32 %v1768, 0.5
    %v1773 = vmul.f32 %v1769, 0.5
    %v1774 = vtanh.pop %v1771
    %v1775 = vtanh.pop %v1772
    %v1776 = vtanh.pop %v1773
    %v1777 = vmul.f32 %v1774, 0.5
    %v1778 = vmul.f32 %v1775, 0.5
    %v1779 = vmul.f32 %v1776, 0.5
    %v1780 = vadd.f32 %v1777, 0.5
    %v1781 = vadd.f32 %v1778, 0.5
    %v1782 = vadd.f32 %v1779, 0.5
    %v1783 = vtanh.pop %v1770
    %v1784 = vmul.f32 %v1781, %v1497
    %v1785 = vmul.f32 %v1780, %v1783
    %v1786 = vadd.f32 %v1784, %v1785
    %v1787 = vtanh.pop %v1786
    %v1788 = vmul.f32 %v1782, %v1787
    %s1789 = scalar_lea.vmem [#allocation4], 128
    %v1790 = vld [vmem:[%s1789] sm:$0xff]
    %v1791 = vld [vmem:[%s1789 + $0x8] sm:$0xff]
    %v1792 = vld [vmem:[%s1789 + $0x10] sm:$0xff]
    %v1793 = vld [vmem:[%s1789 + $0x18] sm:$0xff]
    %1794 = vmatpush.msra.mxu0 %v496
    %1795 = vmatpush.msra.mxu0 %v492
    %1796 = vmatpush.msra.mxu0 %v488
    %1797 = vmatpush.msra.mxu0 %v484
    %1798 = vmatpush.msra.mxu0 %v480
    %1799 = vmatpush.msra.mxu0 %v476
    %1800 = vmatpush.msra.mxu0 %v472
    %1801 = vmatpush.msra.mxu0 %v468
    %1802 = vmatpush.msra.mxu0 %v464
    %1803 = vmatpush.msra.mxu0 %v460
    %1804 = vmatpush.msra.mxu0 %v456
    %1805 = vmatpush.msra.mxu0 %v452
    %1806 = vmatpush.msra.mxu0 %v448
    %1807 = vmatpush.msra.mxu0 %v444
    %1808 = vmatpush.msra.mxu0 %v440
    %1809 = vmatpush.msra.mxu0 %v436
    %1810 = vmatmul.f32.gmra.mxu0 %v1606
    %v1811 = vpop.f32.mrf.mxu0
    %v1812 = vadd.f32 0.0, %v1811
    %1813 = vdwg.mxu0
    %1814 = vmatpush.msra.mxu0 %v497
    %1815 = vmatpush.msra.mxu0 %v493
    %1816 = vmatpush.msra.mxu0 %v489
    %1817 = vmatpush.msra.mxu0 %v485
    %1818 = vmatpush.msra.mxu0 %v481
    %1819 = vmatpush.msra.mxu0 %v477
    %1820 = vmatpush.msra.mxu0 %v473
    %1821 = vmatpush.msra.mxu0 %v469
    %1822 = vmatpush.msra.mxu0 %v465
    %1823 = vmatpush.msra.mxu0 %v461
    %1824 = vmatpush.msra.mxu0 %v457
    %1825 = vmatpush.msra.mxu0 %v453
    %1826 = vmatpush.msra.mxu0 %v449
    %1827 = vmatpush.msra.mxu0 %v445
    %1828 = vmatpush.msra.mxu0 %v441
    %1829 = vmatpush.msra.mxu0 %v437
    %1830 = vmatmul.f32.gmra.mxu0 %v1606
    %v1831 = vpop.f32.mrf.mxu0
    %v1832 = vadd.f32 0.0, %v1831
    %1833 = vdwg.mxu0
    %1834 = vmatpush.msra.mxu0 %v498
    %1835 = vmatpush.msra.mxu0 %v494
    %1836 = vmatpush.msra.mxu0 %v490
    %1837 = vmatpush.msra.mxu0 %v486
    %1838 = vmatpush.msra.mxu0 %v482
    %1839 = vmatpush.msra.mxu0 %v478
    %1840 = vmatpush.msra.mxu0 %v474
    %1841 = vmatpush.msra.mxu0 %v470
    %1842 = vmatpush.msra.mxu0 %v466
    %1843 = vmatpush.msra.mxu0 %v462
    %1844 = vmatpush.msra.mxu0 %v458
    %1845 = vmatpush.msra.mxu0 %v454
    %1846 = vmatpush.msra.mxu0 %v450
    %1847 = vmatpush.msra.mxu0 %v446
    %1848 = vmatpush.msra.mxu0 %v442
    %1849 = vmatpush.msra.mxu0 %v438
    %1850 = vmatmul.f32.gmra.mxu0 %v1606
    %v1851 = vpop.f32.mrf.mxu0
    %v1852 = vadd.f32 0.0, %v1851
    %1853 = vdwg.mxu0
    %1854 = vmatpush.msra.mxu0 %v499
    %1855 = vmatpush.msra.mxu0 %v495
    %1856 = vmatpush.msra.mxu0 %v491
    %1857 = vmatpush.msra.mxu0 %v487
    %1858 = vmatpush.msra.mxu0 %v483
    %1859 = vmatpush.msra.mxu0 %v479
    %1860 = vmatpush.msra.mxu0 %v475
    %1861 = vmatpush.msra.mxu0 %v471
    %1862 = vmatpush.msra.mxu0 %v467
    %1863 = vmatpush.msra.mxu0 %v463
    %1864 = vmatpush.msra.mxu0 %v459
    %1865 = vmatpush.msra.mxu0 %v455
    %1866 = vmatpush.msra.mxu0 %v451
    %1867 = vmatpush.msra.mxu0 %v447
    %1868 = vmatpush.msra.mxu0 %v443
    %1869 = vmatpush.msra.mxu0 %v439
    %1870 = vmatmul.f32.gmra.mxu0 %v1606
    %v1871 = vpop.f32.mrf.mxu0
    %v1872 = vadd.f32 0.0, %v1871
    %1873 = vdwg.mxu0
    %v1874 = vadd.f32 %v1790, %v1812
    %v1875 = vadd.f32 %v1791, %v1832
    %v1876 = vadd.f32 %v1792, %v1852
    %v1877 = vadd.f32 %v1793, %v1872
    %v1878 = vmul.f32 %v1874, 0.5
    %v1879 = vmul.f32 %v1875, 0.5
    %v1880 = vmul.f32 %v1876, 0.5
    %v1881 = vtanh.pop %v1878
    %v1882 = vtanh.pop %v1879
    %v1883 = vtanh.pop %v1880
    %v1884 = vmul.f32 %v1881, 0.5
    %v1885 = vmul.f32 %v1882, 0.5
    %v1886 = vmul.f32 %v1883, 0.5
    %v1887 = vadd.f32 %v1884, 0.5
    %v1888 = vadd.f32 %v1885, 0.5
    %v1889 = vadd.f32 %v1886, 0.5
    %v1890 = vtanh.pop %v1877
    %v1891 = vmul.f32 %v1888, %v1604
    %v1892 = vmul.f32 %v1887, %v1890
    %v1893 = vadd.f32 %v1891, %v1892
    %v1894 = vtanh.pop %v1893
    %v1895 = vmul.f32 %v1889, %v1894
    %1896 = vmatpush.msra.mxu0 %v726
    %1897 = vmatpush.msra.mxu0 %v722
    %1898 = vmatpush.msra.mxu0 %v718
    %1899 = vmatpush.msra.mxu0 %v714
    %1900 = vmatpush.msra.mxu0 %v710
    %1901 = vmatpush.msra.mxu0 %v706
    %1902 = vmatpush.msra.mxu0 %v702
    %1903 = vmatpush.msra.mxu0 %v698
    %1904 = vmatpush.msra.mxu0 %v694
    %1905 = vmatpush.msra.mxu0 %v690
    %1906 = vmatpush.msra.mxu0 %v686
    %1907 = vmatpush.msra.mxu0 %v682
    %1908 = vmatpush.msra.mxu0 %v678
    %1909 = vmatpush.msra.mxu0 %v674
    %1910 = vmatpush.msra.mxu0 %v670
    %1911 = vmatpush.msra.mxu0 %v666
    %1912 = vmatmul.f32.gmra.mxu0 %v1788
    %v1913 = vpop.f32.mrf.mxu0
    %v1914 = vadd.f32 0.0, %v1913
    %1915 = vdwg.mxu0
    %1916 = vmatpush.msra.mxu0 %v727
    %1917 = vmatpush.msra.mxu0 %v723
    %1918 = vmatpush.msra.mxu0 %v719
    %1919 = vmatpush.msra.mxu0 %v715
    %1920 = vmatpush.msra.mxu0 %v711
    %1921 = vmatpush.msra.mxu0 %v707
    %1922 = vmatpush.msra.mxu0 %v703
    %1923 = vmatpush.msra.mxu0 %v699
    %1924 = vmatpush.msra.mxu0 %v695
    %1925 = vmatpush.msra.mxu0 %v691
    %1926 = vmatpush.msra.mxu0 %v687
    %1927 = vmatpush.msra.mxu0 %v683
    %1928 = vmatpush.msra.mxu0 %v679
    %1929 = vmatpush.msra.mxu0 %v675
    %1930 = vmatpush.msra.mxu0 %v671
    %1931 = vmatpush.msra.mxu0 %v667
    %1932 = vmatmul.f32.gmra.mxu0 %v1788
    %v1933 = vpop.f32.mrf.mxu0
    %v1934 = vadd.f32 0.0, %v1933
    %1935 = vdwg.mxu0
    %1936 = vmatpush.msra.mxu0 %v728
    %1937 = vmatpush.msra.mxu0 %v724
    %1938 = vmatpush.msra.mxu0 %v720
    %1939 = vmatpush.msra.mxu0 %v716
    %1940 = vmatpush.msra.mxu0 %v712
    %1941 = vmatpush.msra.mxu0 %v708
    %1942 = vmatpush.msra.mxu0 %v704
    %1943 = vmatpush.msra.mxu0 %v700
    %1944 = vmatpush.msra.mxu0 %v696
    %1945 = vmatpush.msra.mxu0 %v692
    %1946 = vmatpush.msra.mxu0 %v688
    %1947 = vmatpush.msra.mxu0 %v684
    %1948 = vmatpush.msra.mxu0 %v680
    %1949 = vmatpush.msra.mxu0 %v676
    %1950 = vmatpush.msra.mxu0 %v672
    %1951 = vmatpush.msra.mxu0 %v668
    %1952 = vmatmul.f32.gmra.mxu0 %v1788
    %v1953 = vpop.f32.mrf.mxu0
    %v1954 = vadd.f32 0.0, %v1953
    %1955 = vdwg.mxu0
    %1956 = vmatpush.msra.mxu0 %v729
    %1957 = vmatpush.msra.mxu0 %v725
    %1958 = vmatpush.msra.mxu0 %v721
    %1959 = vmatpush.msra.mxu0 %v717
    %1960 = vmatpush.msra.mxu0 %v713
    %1961 = vmatpush.msra.mxu0 %v709
    %1962 = vmatpush.msra.mxu0 %v705
    %1963 = vmatpush.msra.mxu0 %v701
    %1964 = vmatpush.msra.mxu0 %v697
    %1965 = vmatpush.msra.mxu0 %v693
    %1966 = vmatpush.msra.mxu0 %v689
    %1967 = vmatpush.msra.mxu0 %v685
    %1968 = vmatpush.msra.mxu0 %v681
    %1969 = vmatpush.msra.mxu0 %v677
    %1970 = vmatpush.msra.mxu0 %v673
    %1971 = vmatpush.msra.mxu0 %v669
    %1972 = vmatmul.f32.gmra.mxu0 %v1788
    %v1973 = vpop.f32.mrf.mxu0
    %v1974 = vadd.f32 0.0, %v1973
    %1975 = vdwg.mxu0
    %1976 = vmatpush.msra.mxu0 %v662
    %1977 = vmatpush.msra.mxu0 %v658
    %1978 = vmatpush.msra.mxu0 %v654
    %1979 = vmatpush.msra.mxu0 %v650
    %1980 = vmatpush.msra.mxu0 %v646
    %1981 = vmatpush.msra.mxu0 %v642
    %1982 = vmatpush.msra.mxu0 %v638
    %1983 = vmatpush.msra.mxu0 %v634
    %1984 = vmatpush.msra.mxu0 %v630
    %1985 = vmatpush.msra.mxu0 %v626
    %1986 = vmatpush.msra.mxu0 %v622
    %1987 = vmatpush.msra.mxu0 %v618
    %1988 = vmatpush.msra.mxu0 %v614
    %1989 = vmatpush.msra.mxu0 %v610
    %1990 = vmatpush.msra.mxu0 %v606
    %1991 = vmatpush.msra.mxu0 %v602
    %1992 = vmatmul.f32.gmra.mxu0 %v1895
    %v1993 = vpop.f32.mrf.mxu0
    %v1994 = vadd.f32 %v1914, %v1993
    %1995 = vdwg.mxu0
    %1996 = vmatpush.msra.mxu0 %v663
    %1997 = vmatpush.msra.mxu0 %v659
    %1998 = vmatpush.msra.mxu0 %v655
    %1999 = vmatpush.msra.mxu0 %v651
    %2000 = vmatpush.msra.mxu0 %v647
    %2001 = vmatpush.msra.mxu0 %v643
    %2002 = vmatpush.msra.mxu0 %v639
    %2003 = vmatpush.msra.mxu0 %v635
    %2004 = vmatpush.msra.mxu0 %v631
    %2005 = vmatpush.msra.mxu0 %v627
    %2006 = vmatpush.msra.mxu0 %v623
    %2007 = vmatpush.msra.mxu0 %v619
    %2008 = vmatpush.msra.mxu0 %v615
    %2009 = vmatpush.msra.mxu0 %v611
    %2010 = vmatpush.msra.mxu0 %v607
    %2011 = vmatpush.msra.mxu0 %v603
    %2012 = vmatmul.f32.gmra.mxu0 %v1895
    %v2013 = vpop.f32.mrf.mxu0
    %v2014 = vadd.f32 %v1934, %v2013
    %2015 = vdwg.mxu0
    %2016 = vmatpush.msra.mxu0 %v664
    %2017 = vmatpush.msra.mxu0 %v660
    %2018 = vmatpush.msra.mxu0 %v656
    %2019 = vmatpush.msra.mxu0 %v652
    %2020 = vmatpush.msra.mxu0 %v648
    %2021 = vmatpush.msra.mxu0 %v644
    %2022 = vmatpush.msra.mxu0 %v640
    %2023 = vmatpush.msra.mxu0 %v636
    %2024 = vmatpush.msra.mxu0 %v632
    %2025 = vmatpush.msra.mxu0 %v628
    %2026 = vmatpush.msra.mxu0 %v624
    %2027 = vmatpush.msra.mxu0 %v620
    %2028 = vmatpush.msra.mxu0 %v616
    %2029 = vmatpush.msra.mxu0 %v612
    %2030 = vmatpush.msra.mxu0 %v608
    %2031 = vmatpush.msra.mxu0 %v604
    %2032 = vmatmul.f32.gmra.mxu0 %v1895
    %v2033 = vpop.f32.mrf.mxu0
    %v2034 = vadd.f32 %v1954, %v2033
    %2035 = vdwg.mxu0
    %2036 = vmatpush.msra.mxu0 %v665
    %2037 = vmatpush.msra.mxu0 %v661
    %2038 = vmatpush.msra.mxu0 %v657
    %2039 = vmatpush.msra.mxu0 %v653
    %2040 = vmatpush.msra.mxu0 %v649
    %2041 = vmatpush.msra.mxu0 %v645
    %2042 = vmatpush.msra.mxu0 %v641
    %2043 = vmatpush.msra.mxu0 %v637
    %2044 = vmatpush.msra.mxu0 %v633
    %2045 = vmatpush.msra.mxu0 %v629
    %2046 = vmatpush.msra.mxu0 %v625
    %2047 = vmatpush.msra.mxu0 %v621
    %2048 = vmatpush.msra.mxu0 %v617
    %2049 = vmatpush.msra.mxu0 %v613
    %2050 = vmatpush.msra.mxu0 %v609
    %2051 = vmatpush.msra.mxu0 %v605
    %2052 = vmatmul.f32.gmra.mxu0 %v1895
    %v2053 = vpop.f32.mrf.mxu0
    %v2054 = vadd.f32 %v1974, %v2053
    %2055 = vdwg.mxu0
    %v2056 = vadd.f32 %v1994, %v892
    %v2057 = vadd.f32 %v2014, %v893
    %v2058 = vadd.f32 %v2034, %v894
    %v2059 = vadd.f32 %v2054, %v895
    %v2060 = vmul.f32 %v2056, 0.5
    %v2061 = vmul.f32 %v2057, 0.5
    %v2062 = vmul.f32 %v2058, 0.5
    %v2063 = vtanh.pop %v2060
    %v2064 = vtanh.pop %v2061
    %v2065 = vtanh.pop %v2062
    %v2066 = vmul.f32 %v2063, 0.5
    %v2067 = vmul.f32 %v2064, 0.5
    %v2068 = vmul.f32 %v2065, 0.5
    %v2069 = vadd.f32 %v2066, 0.5
    %v2070 = vadd.f32 %v2067, 0.5
    %v2071 = vadd.f32 %v2068, 0.5
    %v2072 = vtanh.pop %v2059
    %v2073 = vmul.f32 %v2070, %v1786
    %v2074 = vmul.f32 %v2069, %v2072
    %v2075 = vadd.f32 %v2073, %v2074
    %v2076 = vtanh.pop %v2075
    %v2077 = vmul.f32 %v2071, %v2076
    %s2078 = scalar_lea.vmem [#allocation4], 160
    %v2079 = vld [vmem:[%s2078] sm:$0xff]
    %v2080 = vld [vmem:[%s2078 + $0x8] sm:$0xff]
    %v2081 = vld [vmem:[%s2078 + $0x10] sm:$0xff]
    %v2082 = vld [vmem:[%s2078 + $0x18] sm:$0xff]
    %2083 = vmatpush.msra.mxu0 %v496
    %2084 = vmatpush.msra.mxu0 %v492
    %2085 = vmatpush.msra.mxu0 %v488
    %2086 = vmatpush.msra.mxu0 %v484
    %2087 = vmatpush.msra.mxu0 %v480
    %2088 = vmatpush.msra.mxu0 %v476
    %2089 = vmatpush.msra.mxu0 %v472
    %2090 = vmatpush.msra.mxu0 %v468
    %2091 = vmatpush.msra.mxu0 %v464
    %2092 = vmatpush.msra.mxu0 %v460
    %2093 = vmatpush.msra.mxu0 %v456
    %2094 = vmatpush.msra.mxu0 %v452
    %2095 = vmatpush.msra.mxu0 %v448
    %2096 = vmatpush.msra.mxu0 %v444
    %2097 = vmatpush.msra.mxu0 %v440
    %2098 = vmatpush.msra.mxu0 %v436
    %2099 = vmatmul.f32.gmra.mxu0 %v1895
    %v2100 = vpop.f32.mrf.mxu0
    %v2101 = vadd.f32 0.0, %v2100
    %2102 = vdwg.mxu0
    %2103 = vmatpush.msra.mxu0 %v497
    %2104 = vmatpush.msra.mxu0 %v493
    %2105 = vmatpush.msra.mxu0 %v489
    %2106 = vmatpush.msra.mxu0 %v485
    %2107 = vmatpush.msra.mxu0 %v481
    %2108 = vmatpush.msra.mxu0 %v477
    %2109 = vmatpush.msra.mxu0 %v473
    %2110 = vmatpush.msra.mxu0 %v469
    %2111 = vmatpush.msra.mxu0 %v465
    %2112 = vmatpush.msra.mxu0 %v461
    %2113 = vmatpush.msra.mxu0 %v457
    %2114 = vmatpush.msra.mxu0 %v453
    %2115 = vmatpush.msra.mxu0 %v449
    %2116 = vmatpush.msra.mxu0 %v445
    %2117 = vmatpush.msra.mxu0 %v441
    %2118 = vmatpush.msra.mxu0 %v437
    %2119 = vmatmul.f32.gmra.mxu0 %v1895
    %v2120 = vpop.f32.mrf.mxu0
    %v2121 = vadd.f32 0.0, %v2120
    %2122 = vdwg.mxu0
    %2123 = vmatpush.msra.mxu0 %v498
    %2124 = vmatpush.msra.mxu0 %v494
    %2125 = vmatpush.msra.mxu0 %v490
    %2126 = vmatpush.msra.mxu0 %v486
    %2127 = vmatpush.msra.mxu0 %v482
    %2128 = vmatpush.msra.mxu0 %v478
    %2129 = vmatpush.msra.mxu0 %v474
    %2130 = vmatpush.msra.mxu0 %v470
    %2131 = vmatpush.msra.mxu0 %v466
    %2132 = vmatpush.msra.mxu0 %v462
    %2133 = vmatpush.msra.mxu0 %v458
    %2134 = vmatpush.msra.mxu0 %v454
    %2135 = vmatpush.msra.mxu0 %v450
    %2136 = vmatpush.msra.mxu0 %v446
    %2137 = vmatpush.msra.mxu0 %v442
    %2138 = vmatpush.msra.mxu0 %v438
    %2139 = vmatmul.f32.gmra.mxu0 %v1895
    %v2140 = vpop.f32.mrf.mxu0
    %v2141 = vadd.f32 0.0, %v2140
    %2142 = vdwg.mxu0
    %2143 = vmatpush.msra.mxu0 %v499
    %2144 = vmatpush.msra.mxu0 %v495
    %2145 = vmatpush.msra.mxu0 %v491
    %2146 = vmatpush.msra.mxu0 %v487
    %2147 = vmatpush.msra.mxu0 %v483
    %2148 = vmatpush.msra.mxu0 %v479
    %2149 = vmatpush.msra.mxu0 %v475
    %2150 = vmatpush.msra.mxu0 %v471
    %2151 = vmatpush.msra.mxu0 %v467
    %2152 = vmatpush.msra.mxu0 %v463
    %2153 = vmatpush.msra.mxu0 %v459
    %2154 = vmatpush.msra.mxu0 %v455
    %2155 = vmatpush.msra.mxu0 %v451
    %2156 = vmatpush.msra.mxu0 %v447
    %2157 = vmatpush.msra.mxu0 %v443
    %2158 = vmatpush.msra.mxu0 %v439
    %2159 = vmatmul.f32.gmra.mxu0 %v1895
    %v2160 = vpop.f32.mrf.mxu0
    %v2161 = vadd.f32 0.0, %v2160
    %2162 = vdwg.mxu0
    %v2163 = vadd.f32 %v2079, %v2101
    %v2164 = vadd.f32 %v2080, %v2121
    %v2165 = vadd.f32 %v2081, %v2141
    %v2166 = vadd.f32 %v2082, %v2161
    %v2167 = vmul.f32 %v2163, 0.5
    %v2168 = vmul.f32 %v2164, 0.5
    %v2169 = vmul.f32 %v2165, 0.5
    %v2170 = vtanh.pop %v2167
    %v2171 = vtanh.pop %v2168
    %v2172 = vtanh.pop %v2169
    %v2173 = vmul.f32 %v2170, 0.5
    %v2174 = vmul.f32 %v2171, 0.5
    %v2175 = vmul.f32 %v2172, 0.5
    %v2176 = vadd.f32 %v2173, 0.5
    %v2177 = vadd.f32 %v2174, 0.5
    %v2178 = vadd.f32 %v2175, 0.5
    %v2179 = vtanh.pop %v2166
    %v2180 = vmul.f32 %v2177, %v1893
    %v2181 = vmul.f32 %v2176, %v2179
    %v2182 = vadd.f32 %v2180, %v2181
    %v2183 = vtanh.pop %v2182
    %v2184 = vmul.f32 %v2178, %v2183
    %2185 = vmatpush.msra.mxu0 %v726
    %2186 = vmatpush.msra.mxu0 %v722
    %2187 = vmatpush.msra.mxu0 %v718
    %2188 = vmatpush.msra.mxu0 %v714
    %2189 = vmatpush.msra.mxu0 %v710
    %2190 = vmatpush.msra.mxu0 %v706
    %2191 = vmatpush.msra.mxu0 %v702
    %2192 = vmatpush.msra.mxu0 %v698
    %2193 = vmatpush.msra.mxu0 %v694
    %2194 = vmatpush.msra.mxu0 %v690
    %2195 = vmatpush.msra.mxu0 %v686
    %2196 = vmatpush.msra.mxu0 %v682
    %2197 = vmatpush.msra.mxu0 %v678
    %2198 = vmatpush.msra.mxu0 %v674
    %2199 = vmatpush.msra.mxu0 %v670
    %2200 = vmatpush.msra.mxu0 %v666
    %2201 = vmatmul.f32.gmra.mxu0 %v2077
    %v2202 = vpop.f32.mrf.mxu0
    %v2203 = vadd.f32 0.0, %v2202
    %2204 = vdwg.mxu0
    %2205 = vmatpush.msra.mxu0 %v727
    %2206 = vmatpush.msra.mxu0 %v723
    %2207 = vmatpush.msra.mxu0 %v719
    %2208 = vmatpush.msra.mxu0 %v715
    %2209 = vmatpush.msra.mxu0 %v711
    %2210 = vmatpush.msra.mxu0 %v707
    %2211 = vmatpush.msra.mxu0 %v703
    %2212 = vmatpush.msra.mxu0 %v699
    %2213 = vmatpush.msra.mxu0 %v695
    %2214 = vmatpush.msra.mxu0 %v691
    %2215 = vmatpush.msra.mxu0 %v687
    %2216 = vmatpush.msra.mxu0 %v683
    %2217 = vmatpush.msra.mxu0 %v679
    %2218 = vmatpush.msra.mxu0 %v675
    %2219 = vmatpush.msra.mxu0 %v671
    %2220 = vmatpush.msra.mxu0 %v667
    %2221 = vmatmul.f32.gmra.mxu0 %v2077
    %v2222 = vpop.f32.mrf.mxu0
    %v2223 = vadd.f32 0.0, %v2222
    %2224 = vdwg.mxu0
    %2225 = vmatpush.msra.mxu0 %v728
    %2226 = vmatpush.msra.mxu0 %v724
    %2227 = vmatpush.msra.mxu0 %v720
    %2228 = vmatpush.msra.mxu0 %v716
    %2229 = vmatpush.msra.mxu0 %v712
    %2230 = vmatpush.msra.mxu0 %v708
    %2231 = vmatpush.msra.mxu0 %v704
    %2232 = vmatpush.msra.mxu0 %v700
    %2233 = vmatpush.msra.mxu0 %v696
    %2234 = vmatpush.msra.mxu0 %v692
    %2235 = vmatpush.msra.mxu0 %v688
    %2236 = vmatpush.msra.mxu0 %v684
    %2237 = vmatpush.msra.mxu0 %v680
    %2238 = vmatpush.msra.mxu0 %v676
    %2239 = vmatpush.msra.mxu0 %v672
    %2240 = vmatpush.msra.mxu0 %v668
    %2241 = vmatmul.f32.gmra.mxu0 %v2077
    %v2242 = vpop.f32.mrf.mxu0
    %v2243 = vadd.f32 0.0, %v2242
    %2244 = vdwg.mxu0
    %2245 = vmatpush.msra.mxu0 %v729
    %2246 = vmatpush.msra.mxu0 %v725
    %2247 = vmatpush.msra.mxu0 %v721
    %2248 = vmatpush.msra.mxu0 %v717
    %2249 = vmatpush.msra.mxu0 %v713
    %2250 = vmatpush.msra.mxu0 %v709
    %2251 = vmatpush.msra.mxu0 %v705
    %2252 = vmatpush.msra.mxu0 %v701
    %2253 = vmatpush.msra.mxu0 %v697
    %2254 = vmatpush.msra.mxu0 %v693
    %2255 = vmatpush.msra.mxu0 %v689
    %2256 = vmatpush.msra.mxu0 %v685
    %2257 = vmatpush.msra.mxu0 %v681
    %2258 = vmatpush.msra.mxu0 %v677
    %2259 = vmatpush.msra.mxu0 %v673
    %2260 = vmatpush.msra.mxu0 %v669
    %2261 = vmatmul.f32.gmra.mxu0 %v2077
    %v2262 = vpop.f32.mrf.mxu0
    %v2263 = vadd.f32 0.0, %v2262
    %2264 = vdwg.mxu0
    %2265 = vmatpush.msra.mxu0 %v662
    %2266 = vmatpush.msra.mxu0 %v658
    %2267 = vmatpush.msra.mxu0 %v654
    %2268 = vmatpush.msra.mxu0 %v650
    %2269 = vmatpush.msra.mxu0 %v646
    %2270 = vmatpush.msra.mxu0 %v642
    %2271 = vmatpush.msra.mxu0 %v638
    %2272 = vmatpush.msra.mxu0 %v634
    %2273 = vmatpush.msra.mxu0 %v630
    %2274 = vmatpush.msra.mxu0 %v626
    %2275 = vmatpush.msra.mxu0 %v622
    %2276 = vmatpush.msra.mxu0 %v618
    %2277 = vmatpush.msra.mxu0 %v614
    %2278 = vmatpush.msra.mxu0 %v610
    %2279 = vmatpush.msra.mxu0 %v606
    %2280 = vmatpush.msra.mxu0 %v602
    %2281 = vmatmul.f32.gmra.mxu0 %v2184
    %v2282 = vpop.f32.mrf.mxu0
    %v2283 = vadd.f32 %v2203, %v2282
    %2284 = vdwg.mxu0
    %2285 = vmatpush.msra.mxu0 %v663
    %2286 = vmatpush.msra.mxu0 %v659
    %2287 = vmatpush.msra.mxu0 %v655
    %2288 = vmatpush.msra.mxu0 %v651
    %2289 = vmatpush.msra.mxu0 %v647
    %2290 = vmatpush.msra.mxu0 %v643
    %2291 = vmatpush.msra.mxu0 %v639
    %2292 = vmatpush.msra.mxu0 %v635
    %2293 = vmatpush.msra.mxu0 %v631
    %2294 = vmatpush.msra.mxu0 %v627
    %2295 = vmatpush.msra.mxu0 %v623
    %2296 = vmatpush.msra.mxu0 %v619
    %2297 = vmatpush.msra.mxu0 %v615
    %2298 = vmatpush.msra.mxu0 %v611
    %2299 = vmatpush.msra.mxu0 %v607
    %2300 = vmatpush.msra.mxu0 %v603
    %2301 = vmatmul.f32.gmra.mxu0 %v2184
    %v2302 = vpop.f32.mrf.mxu0
    %v2303 = vadd.f32 %v2223, %v2302
    %2304 = vdwg.mxu0
    %2305 = vmatpush.msra.mxu0 %v664
    %2306 = vmatpush.msra.mxu0 %v660
    %2307 = vmatpush.msra.mxu0 %v656
    %2308 = vmatpush.msra.mxu0 %v652
    %2309 = vmatpush.msra.mxu0 %v648
    %2310 = vmatpush.msra.mxu0 %v644
    %2311 = vmatpush.msra.mxu0 %v640
    %2312 = vmatpush.msra.mxu0 %v636
    %2313 = vmatpush.msra.mxu0 %v632
    %2314 = vmatpush.msra.mxu0 %v628
    %2315 = vmatpush.msra.mxu0 %v624
    %2316 = vmatpush.msra.mxu0 %v620
    %2317 = vmatpush.msra.mxu0 %v616
    %2318 = vmatpush.msra.mxu0 %v612
    %2319 = vmatpush.msra.mxu0 %v608
    %2320 = vmatpush.msra.mxu0 %v604
    %2321 = vmatmul.f32.gmra.mxu0 %v2184
    %v2322 = vpop.f32.mrf.mxu0
    %v2323 = vadd.f32 %v2243, %v2322
    %2324 = vdwg.mxu0
    %2325 = vmatpush.msra.mxu0 %v665
    %2326 = vmatpush.msra.mxu0 %v661
    %2327 = vmatpush.msra.mxu0 %v657
    %2328 = vmatpush.msra.mxu0 %v653
    %2329 = vmatpush.msra.mxu0 %v649
    %2330 = vmatpush.msra.mxu0 %v645
    %2331 = vmatpush.msra.mxu0 %v641
    %2332 = vmatpush.msra.mxu0 %v637
    %2333 = vmatpush.msra.mxu0 %v633
    %2334 = vmatpush.msra.mxu0 %v629
    %2335 = vmatpush.msra.mxu0 %v625
    %2336 = vmatpush.msra.mxu0 %v621
    %2337 = vmatpush.msra.mxu0 %v617
    %2338 = vmatpush.msra.mxu0 %v613
    %2339 = vmatpush.msra.mxu0 %v609
    %2340 = vmatpush.msra.mxu0 %v605
    %2341 = vmatmul.f32.gmra.mxu0 %v2184
    %v2342 = vpop.f32.mrf.mxu0
    %v2343 = vadd.f32 %v2263, %v2342
    %2344 = vdwg.mxu0
    %v2345 = vadd.f32 %v2283, %v892
    %v2346 = vadd.f32 %v2303, %v893
    %v2347 = vadd.f32 %v2323, %v894
    %v2348 = vadd.f32 %v2343, %v895
    %v2349 = vmul.f32 %v2345, 0.5
    %v2350 = vmul.f32 %v2346, 0.5
    %v2351 = vmul.f32 %v2347, 0.5
    %v2352 = vtanh.pop %v2349
    %v2353 = vtanh.pop %v2350
    %v2354 = vtanh.pop %v2351
    %v2355 = vmul.f32 %v2352, 0.5
    %v2356 = vmul.f32 %v2353, 0.5
    %v2357 = vmul.f32 %v2354, 0.5
    %v2358 = vadd.f32 %v2355, 0.5
    %v2359 = vadd.f32 %v2356, 0.5
    %v2360 = vadd.f32 %v2357, 0.5
    %v2361 = vtanh.pop %v2348
    %v2362 = vmul.f32 %v2359, %v2075
    %v2363 = vmul.f32 %v2358, %v2361
    %v2364 = vadd.f32 %v2362, %v2363
    %v2365 = vtanh.pop %v2364
    %v2366 = vmul.f32 %v2360, %v2365
    %s2367 = scalar_lea.vmem [#allocation4], 192
    %v2368 = vld [vmem:[%s2367] sm:$0xff]
    %v2369 = vld [vmem:[%s2367 + $0x8] sm:$0xff]
    %v2370 = vld [vmem:[%s2367 + $0x10] sm:$0xff]
    %v2371 = vld [vmem:[%s2367 + $0x18] sm:$0xff]
    %2372 = vmatpush.msra.mxu0 %v496
    %2373 = vmatpush.msra.mxu0 %v492
    %2374 = vmatpush.msra.mxu0 %v488
    %2375 = vmatpush.msra.mxu0 %v484
    %2376 = vmatpush.msra.mxu0 %v480
    %2377 = vmatpush.msra.mxu0 %v476
    %2378 = vmatpush.msra.mxu0 %v472
    %2379 = vmatpush.msra.mxu0 %v468
    %2380 = vmatpush.msra.mxu0 %v464
    %2381 = vmatpush.msra.mxu0 %v460
    %2382 = vmatpush.msra.mxu0 %v456
    %2383 = vmatpush.msra.mxu0 %v452
    %2384 = vmatpush.msra.mxu0 %v448
    %2385 = vmatpush.msra.mxu0 %v444
    %2386 = vmatpush.msra.mxu0 %v440
    %2387 = vmatpush.msra.mxu0 %v436
    %2388 = vmatmul.f32.gmra.mxu0 %v2184
    %v2389 = vpop.f32.mrf.mxu0
    %v2390 = vadd.f32 0.0, %v2389
    %2391 = vdwg.mxu0
    %2392 = vmatpush.msra.mxu0 %v497
    %2393 = vmatpush.msra.mxu0 %v493
    %2394 = vmatpush.msra.mxu0 %v489
    %2395 = vmatpush.msra.mxu0 %v485
    %2396 = vmatpush.msra.mxu0 %v481
    %2397 = vmatpush.msra.mxu0 %v477
    %2398 = vmatpush.msra.mxu0 %v473
    %2399 = vmatpush.msra.mxu0 %v469
    %2400 = vmatpush.msra.mxu0 %v465
    %2401 = vmatpush.msra.mxu0 %v461
    %2402 = vmatpush.msra.mxu0 %v457
    %2403 = vmatpush.msra.mxu0 %v453
    %2404 = vmatpush.msra.mxu0 %v449
    %2405 = vmatpush.msra.mxu0 %v445
    %2406 = vmatpush.msra.mxu0 %v441
    %2407 = vmatpush.msra.mxu0 %v437
    %2408 = vmatmul.f32.gmra.mxu0 %v2184
    %v2409 = vpop.f32.mrf.mxu0
    %v2410 = vadd.f32 0.0, %v2409
    %2411 = vdwg.mxu0
    %2412 = vmatpush.msra.mxu0 %v498
    %2413 = vmatpush.msra.mxu0 %v494
    %2414 = vmatpush.msra.mxu0 %v490
    %2415 = vmatpush.msra.mxu0 %v486
    %2416 = vmatpush.msra.mxu0 %v482
    %2417 = vmatpush.msra.mxu0 %v478
    %2418 = vmatpush.msra.mxu0 %v474
    %2419 = vmatpush.msra.mxu0 %v470
    %2420 = vmatpush.msra.mxu0 %v466
    %2421 = vmatpush.msra.mxu0 %v462
    %2422 = vmatpush.msra.mxu0 %v458
    %2423 = vmatpush.msra.mxu0 %v454
    %2424 = vmatpush.msra.mxu0 %v450
    %2425 = vmatpush.msra.mxu0 %v446
    %2426 = vmatpush.msra.mxu0 %v442
    %2427 = vmatpush.msra.mxu0 %v438
    %2428 = vmatmul.f32.gmra.mxu0 %v2184
    %v2429 = vpop.f32.mrf.mxu0
    %v2430 = vadd.f32 0.0, %v2429
    %2431 = vdwg.mxu0
    %2432 = vmatpush.msra.mxu0 %v499
    %2433 = vmatpush.msra.mxu0 %v495
    %2434 = vmatpush.msra.mxu0 %v491
    %2435 = vmatpush.msra.mxu0 %v487
    %2436 = vmatpush.msra.mxu0 %v483
    %2437 = vmatpush.msra.mxu0 %v479
    %2438 = vmatpush.msra.mxu0 %v475
    %2439 = vmatpush.msra.mxu0 %v471
    %2440 = vmatpush.msra.mxu0 %v467
    %2441 = vmatpush.msra.mxu0 %v463
    %2442 = vmatpush.msra.mxu0 %v459
    %2443 = vmatpush.msra.mxu0 %v455
    %2444 = vmatpush.msra.mxu0 %v451
    %2445 = vmatpush.msra.mxu0 %v447
    %2446 = vmatpush.msra.mxu0 %v443
    %2447 = vmatpush.msra.mxu0 %v439
    %2448 = vmatmul.f32.gmra.mxu0 %v2184
    %v2449 = vpop.f32.mrf.mxu0
    %v2450 = vadd.f32 0.0, %v2449
    %2451 = vdwg.mxu0
    %v2452 = vadd.f32 %v2368, %v2390
    %v2453 = vadd.f32 %v2369, %v2410
    %v2454 = vadd.f32 %v2370, %v2430
    %v2455 = vadd.f32 %v2371, %v2450
    %v2456 = vmul.f32 %v2452, 0.5
    %v2457 = vmul.f32 %v2453, 0.5
    %v2458 = vmul.f32 %v2454, 0.5
    %v2459 = vtanh.pop %v2456
    %v2460 = vtanh.pop %v2457
    %v2461 = vtanh.pop %v2458
    %v2462 = vmul.f32 %v2459, 0.5
    %v2463 = vmul.f32 %v2460, 0.5
    %v2464 = vmul.f32 %v2461, 0.5
    %v2465 = vadd.f32 %v2462, 0.5
    %v2466 = vadd.f32 %v2463, 0.5
    %v2467 = vadd.f32 %v2464, 0.5
    %v2468 = vtanh.pop %v2455
    %v2469 = vmul.f32 %v2466, %v2182
    %v2470 = vmul.f32 %v2465, %v2468
    %v2471 = vadd.f32 %v2469, %v2470
    %v2472 = vtanh.pop %v2471
    %v2473 = vmul.f32 %v2467, %v2472
    %2474 = vmatpush.msra.mxu0 %v726
    %2475 = vmatpush.msra.mxu0 %v722
    %2476 = vmatpush.msra.mxu0 %v718
    %2477 = vmatpush.msra.mxu0 %v714
    %2478 = vmatpush.msra.mxu0 %v710
    %2479 = vmatpush.msra.mxu0 %v706
    %2480 = vmatpush.msra.mxu0 %v702
    %2481 = vmatpush.msra.mxu0 %v698
    %2482 = vmatpush.msra.mxu0 %v694
    %2483 = vmatpush.msra.mxu0 %v690
    %2484 = vmatpush.msra.mxu0 %v686
    %2485 = vmatpush.msra.mxu0 %v682
    %2486 = vmatpush.msra.mxu0 %v678
    %2487 = vmatpush.msra.mxu0 %v674
    %2488 = vmatpush.msra.mxu0 %v670
    %2489 = vmatpush.msra.mxu0 %v666
    %2490 = vmatmul.f32.gmra.mxu0 %v2366
    %v2491 = vpop.f32.mrf.mxu0
    %v2492 = vadd.f32 0.0, %v2491
    %2493 = vdwg.mxu0
    %2494 = vmatpush.msra.mxu0 %v727
    %2495 = vmatpush.msra.mxu0 %v723
    %2496 = vmatpush.msra.mxu0 %v719
    %2497 = vmatpush.msra.mxu0 %v715
    %2498 = vmatpush.msra.mxu0 %v711
    %2499 = vmatpush.msra.mxu0 %v707
    %2500 = vmatpush.msra.mxu0 %v703
    %2501 = vmatpush.msra.mxu0 %v699
    %2502 = vmatpush.msra.mxu0 %v695
    %2503 = vmatpush.msra.mxu0 %v691
    %2504 = vmatpush.msra.mxu0 %v687
    %2505 = vmatpush.msra.mxu0 %v683
    %2506 = vmatpush.msra.mxu0 %v679
    %2507 = vmatpush.msra.mxu0 %v675
    %2508 = vmatpush.msra.mxu0 %v671
    %2509 = vmatpush.msra.mxu0 %v667
    %2510 = vmatmul.f32.gmra.mxu0 %v2366
    %v2511 = vpop.f32.mrf.mxu0
    %v2512 = vadd.f32 0.0, %v2511
    %2513 = vdwg.mxu0
    %2514 = vmatpush.msra.mxu0 %v728
    %2515 = vmatpush.msra.mxu0 %v724
    %2516 = vmatpush.msra.mxu0 %v720
    %2517 = vmatpush.msra.mxu0 %v716
    %2518 = vmatpush.msra.mxu0 %v712
    %2519 = vmatpush.msra.mxu0 %v708
    %2520 = vmatpush.msra.mxu0 %v704
    %2521 = vmatpush.msra.mxu0 %v700
    %2522 = vmatpush.msra.mxu0 %v696
    %2523 = vmatpush.msra.mxu0 %v692
    %2524 = vmatpush.msra.mxu0 %v688
    %2525 = vmatpush.msra.mxu0 %v684
    %2526 = vmatpush.msra.mxu0 %v680
    %2527 = vmatpush.msra.mxu0 %v676
    %2528 = vmatpush.msra.mxu0 %v672
    %2529 = vmatpush.msra.mxu0 %v668
    %2530 = vmatmul.f32.gmra.mxu0 %v2366
    %v2531 = vpop.f32.mrf.mxu0
    %v2532 = vadd.f32 0.0, %v2531
    %2533 = vdwg.mxu0
    %2534 = vmatpush.msra.mxu0 %v729
    %2535 = vmatpush.msra.mxu0 %v725
    %2536 = vmatpush.msra.mxu0 %v721
    %2537 = vmatpush.msra.mxu0 %v717
    %2538 = vmatpush.msra.mxu0 %v713
    %2539 = vmatpush.msra.mxu0 %v709
    %2540 = vmatpush.msra.mxu0 %v705
    %2541 = vmatpush.msra.mxu0 %v701
    %2542 = vmatpush.msra.mxu0 %v697
    %2543 = vmatpush.msra.mxu0 %v693
    %2544 = vmatpush.msra.mxu0 %v689
    %2545 = vmatpush.msra.mxu0 %v685
    %2546 = vmatpush.msra.mxu0 %v681
    %2547 = vmatpush.msra.mxu0 %v677
    %2548 = vmatpush.msra.mxu0 %v673
    %2549 = vmatpush.msra.mxu0 %v669
    %2550 = vmatmul.f32.gmra.mxu0 %v2366
    %v2551 = vpop.f32.mrf.mxu0
    %v2552 = vadd.f32 0.0, %v2551
    %2553 = vdwg.mxu0
    %2554 = vmatpush.msra.mxu0 %v662
    %2555 = vmatpush.msra.mxu0 %v658
    %2556 = vmatpush.msra.mxu0 %v654
    %2557 = vmatpush.msra.mxu0 %v650
    %2558 = vmatpush.msra.mxu0 %v646
    %2559 = vmatpush.msra.mxu0 %v642
    %2560 = vmatpush.msra.mxu0 %v638
    %2561 = vmatpush.msra.mxu0 %v634
    %2562 = vmatpush.msra.mxu0 %v630
    %2563 = vmatpush.msra.mxu0 %v626
    %2564 = vmatpush.msra.mxu0 %v622
    %2565 = vmatpush.msra.mxu0 %v618
    %2566 = vmatpush.msra.mxu0 %v614
    %2567 = vmatpush.msra.mxu0 %v610
    %2568 = vmatpush.msra.mxu0 %v606
    %2569 = vmatpush.msra.mxu0 %v602
    %2570 = vmatmul.f32.gmra.mxu0 %v2473
    %v2571 = vpop.f32.mrf.mxu0
    %v2572 = vadd.f32 %v2492, %v2571
    %2573 = vdwg.mxu0
    %2574 = vmatpush.msra.mxu0 %v663
    %2575 = vmatpush.msra.mxu0 %v659
    %2576 = vmatpush.msra.mxu0 %v655
    %2577 = vmatpush.msra.mxu0 %v651
    %2578 = vmatpush.msra.mxu0 %v647
    %2579 = vmatpush.msra.mxu0 %v643
    %2580 = vmatpush.msra.mxu0 %v639
    %2581 = vmatpush.msra.mxu0 %v635
    %2582 = vmatpush.msra.mxu0 %v631
    %2583 = vmatpush.msra.mxu0 %v627
    %2584 = vmatpush.msra.mxu0 %v623
    %2585 = vmatpush.msra.mxu0 %v619
    %2586 = vmatpush.msra.mxu0 %v615
    %2587 = vmatpush.msra.mxu0 %v611
    %2588 = vmatpush.msra.mxu0 %v607
    %2589 = vmatpush.msra.mxu0 %v603
    %2590 = vmatmul.f32.gmra.mxu0 %v2473
    %v2591 = vpop.f32.mrf.mxu0
    %v2592 = vadd.f32 %v2512, %v2591
    %2593 = vdwg.mxu0
    %2594 = vmatpush.msra.mxu0 %v664
    %2595 = vmatpush.msra.mxu0 %v660
    %2596 = vmatpush.msra.mxu0 %v656
    %2597 = vmatpush.msra.mxu0 %v652
    %2598 = vmatpush.msra.mxu0 %v648
    %2599 = vmatpush.msra.mxu0 %v644
    %2600 = vmatpush.msra.mxu0 %v640
    %2601 = vmatpush.msra.mxu0 %v636
    %2602 = vmatpush.msra.mxu0 %v632
    %2603 = vmatpush.msra.mxu0 %v628
    %2604 = vmatpush.msra.mxu0 %v624
    %2605 = vmatpush.msra.mxu0 %v620
    %2606 = vmatpush.msra.mxu0 %v616
    %2607 = vmatpush.msra.mxu0 %v612
    %2608 = vmatpush.msra.mxu0 %v608
    %2609 = vmatpush.msra.mxu0 %v604
    %2610 = vmatmul.f32.gmra.mxu0 %v2473
    %v2611 = vpop.f32.mrf.mxu0
    %v2612 = vadd.f32 %v2532, %v2611
    %2613 = vdwg.mxu0
    %2614 = vmatpush.msra.mxu0 %v665
    %2615 = vmatpush.msra.mxu0 %v661
    %2616 = vmatpush.msra.mxu0 %v657
    %2617 = vmatpush.msra.mxu0 %v653
    %2618 = vmatpush.msra.mxu0 %v649
    %2619 = vmatpush.msra.mxu0 %v645
    %2620 = vmatpush.msra.mxu0 %v641
    %2621 = vmatpush.msra.mxu0 %v637
    %2622 = vmatpush.msra.mxu0 %v633
    %2623 = vmatpush.msra.mxu0 %v629
    %2624 = vmatpush.msra.mxu0 %v625
    %2625 = vmatpush.msra.mxu0 %v621
    %2626 = vmatpush.msra.mxu0 %v617
    %2627 = vmatpush.msra.mxu0 %v613
    %2628 = vmatpush.msra.mxu0 %v609
    %2629 = vmatpush.msra.mxu0 %v605
    %2630 = vmatmul.f32.gmra.mxu0 %v2473
    %v2631 = vpop.f32.mrf.mxu0
    %v2632 = vadd.f32 %v2552, %v2631
    %2633 = vdwg.mxu0
    %v2634 = vadd.f32 %v2572, %v892
    %v2635 = vadd.f32 %v2592, %v893
    %v2636 = vadd.f32 %v2612, %v894
    %v2637 = vadd.f32 %v2632, %v895
    %v2638 = vmul.f32 %v2634, 0.5
    %v2639 = vmul.f32 %v2635, 0.5
    %v2640 = vmul.f32 %v2636, 0.5
    %v2641 = vtanh.pop %v2638
    %v2642 = vtanh.pop %v2639
    %v2643 = vtanh.pop %v2640
    %v2644 = vmul.f32 %v2641, 0.5
    %v2645 = vmul.f32 %v2642, 0.5
    %v2646 = vmul.f32 %v2643, 0.5
    %v2647 = vadd.f32 %v2644, 0.5
    %v2648 = vadd.f32 %v2645, 0.5
    %v2649 = vadd.f32 %v2646, 0.5
    %v2650 = vtanh.pop %v2637
    %v2651 = vmul.f32 %v2648, %v2364
    %v2652 = vmul.f32 %v2647, %v2650
    %v2653 = vadd.f32 %v2651, %v2652
    %v2654 = vtanh.pop %v2653
    %v2655 = vmul.f32 %v2649, %v2654
    %s2656 = scalar_lea.vmem [#allocation4], 224
    %v2657 = vld [vmem:[%s2656] sm:$0xff]
    %v2658 = vld [vmem:[%s2656 + $0x8] sm:$0xff]
    %v2659 = vld [vmem:[%s2656 + $0x10] sm:$0xff]
    %v2660 = vld [vmem:[%s2656 + $0x18] sm:$0xff]
    %2661 = vmatpush.msra.mxu0 %v496
    %2662 = vmatpush.msra.mxu0 %v492
    %2663 = vmatpush.msra.mxu0 %v488
    %2664 = vmatpush.msra.mxu0 %v484
    %2665 = vmatpush.msra.mxu0 %v480
    %2666 = vmatpush.msra.mxu0 %v476
    %2667 = vmatpush.msra.mxu0 %v472
    %2668 = vmatpush.msra.mxu0 %v468
    %2669 = vmatpush.msra.mxu0 %v464
    %2670 = vmatpush.msra.mxu0 %v460
    %2671 = vmatpush.msra.mxu0 %v456
    %2672 = vmatpush.msra.mxu0 %v452
    %2673 = vmatpush.msra.mxu0 %v448
    %2674 = vmatpush.msra.mxu0 %v444
    %2675 = vmatpush.msra.mxu0 %v440
    %2676 = vmatpush.msra.mxu0 %v436
    %2677 = vmatmul.f32.gmra.mxu0 %v2473
    %v2678 = vpop.f32.mrf.mxu0
    %v2679 = vadd.f32 0.0, %v2678
    %2680 = vdwg.mxu0
    %2681 = vmatpush.msra.mxu0 %v497
    %2682 = vmatpush.msra.mxu0 %v493
    %2683 = vmatpush.msra.mxu0 %v489
    %2684 = vmatpush.msra.mxu0 %v485
    %2685 = vmatpush.msra.mxu0 %v481
    %2686 = vmatpush.msra.mxu0 %v477
    %2687 = vmatpush.msra.mxu0 %v473
    %2688 = vmatpush.msra.mxu0 %v469
    %2689 = vmatpush.msra.mxu0 %v465
    %2690 = vmatpush.msra.mxu0 %v461
    %2691 = vmatpush.msra.mxu0 %v457
    %2692 = vmatpush.msra.mxu0 %v453
    %2693 = vmatpush.msra.mxu0 %v449
    %2694 = vmatpush.msra.mxu0 %v445
    %2695 = vmatpush.msra.mxu0 %v441
    %2696 = vmatpush.msra.mxu0 %v437
    %2697 = vmatmul.f32.gmra.mxu0 %v2473
    %v2698 = vpop.f32.mrf.mxu0
    %v2699 = vadd.f32 0.0, %v2698
    %2700 = vdwg.mxu0
    %2701 = vmatpush.msra.mxu0 %v498
    %2702 = vmatpush.msra.mxu0 %v494
    %2703 = vmatpush.msra.mxu0 %v490
    %2704 = vmatpush.msra.mxu0 %v486
    %2705 = vmatpush.msra.mxu0 %v482
    %2706 = vmatpush.msra.mxu0 %v478
    %2707 = vmatpush.msra.mxu0 %v474
    %2708 = vmatpush.msra.mxu0 %v470
    %2709 = vmatpush.msra.mxu0 %v466
    %2710 = vmatpush.msra.mxu0 %v462
    %2711 = vmatpush.msra.mxu0 %v458
    %2712 = vmatpush.msra.mxu0 %v454
    %2713 = vmatpush.msra.mxu0 %v450
    %2714 = vmatpush.msra.mxu0 %v446
    %2715 = vmatpush.msra.mxu0 %v442
    %2716 = vmatpush.msra.mxu0 %v438
    %2717 = vmatmul.f32.gmra.mxu0 %v2473
    %v2718 = vpop.f32.mrf.mxu0
    %v2719 = vadd.f32 0.0, %v2718
    %2720 = vdwg.mxu0
    %2721 = vmatpush.msra.mxu0 %v499
    %2722 = vmatpush.msra.mxu0 %v495
    %2723 = vmatpush.msra.mxu0 %v491
    %2724 = vmatpush.msra.mxu0 %v487
    %2725 = vmatpush.msra.mxu0 %v483
    %2726 = vmatpush.msra.mxu0 %v479
    %2727 = vmatpush.msra.mxu0 %v475
    %2728 = vmatpush.msra.mxu0 %v471
    %2729 = vmatpush.msra.mxu0 %v467
    %2730 = vmatpush.msra.mxu0 %v463
    %2731 = vmatpush.msra.mxu0 %v459
    %2732 = vmatpush.msra.mxu0 %v455
    %2733 = vmatpush.msra.mxu0 %v451
    %2734 = vmatpush.msra.mxu0 %v447
    %2735 = vmatpush.msra.mxu0 %v443
    %2736 = vmatpush.msra.mxu0 %v439
    %2737 = vmatmul.f32.gmra.mxu0 %v2473
    %v2738 = vpop.f32.mrf.mxu0
    %v2739 = vadd.f32 0.0, %v2738
    %2740 = vdwg.mxu0
    %v2741 = vadd.f32 %v2657, %v2679
    %v2742 = vadd.f32 %v2658, %v2699
    %v2743 = vadd.f32 %v2659, %v2719
    %v2744 = vadd.f32 %v2660, %v2739
    %v2745 = vmul.f32 %v2741, 0.5
    %v2746 = vmul.f32 %v2742, 0.5
    %v2747 = vmul.f32 %v2743, 0.5
    %v2748 = vtanh.pop %v2745
    %v2749 = vtanh.pop %v2746
    %v2750 = vtanh.pop %v2747
    %v2751 = vmul.f32 %v2748, 0.5
    %v2752 = vmul.f32 %v2749, 0.5
    %v2753 = vmul.f32 %v2750, 0.5
    %v2754 = vadd.f32 %v2751, 0.5
    %v2755 = vadd.f32 %v2752, 0.5
    %v2756 = vadd.f32 %v2753, 0.5
    %v2757 = vtanh.pop %v2744
    %v2758 = vmul.f32 %v2755, %v2471
    %v2759 = vmul.f32 %v2754, %v2757
    %v2760 = vadd.f32 %v2758, %v2759
    %v2761 = vtanh.pop %v2760
    %v2762 = vmul.f32 %v2756, %v2761
    %2763 = vmatpush.msra.mxu0 %v726
    %2764 = vmatpush.msra.mxu0 %v722
    %2765 = vmatpush.msra.mxu0 %v718
    %2766 = vmatpush.msra.mxu0 %v714
    %2767 = vmatpush.msra.mxu0 %v710
    %2768 = vmatpush.msra.mxu0 %v706
    %2769 = vmatpush.msra.mxu0 %v702
    %2770 = vmatpush.msra.mxu0 %v698
    %2771 = vmatpush.msra.mxu0 %v694
    %2772 = vmatpush.msra.mxu0 %v690
    %2773 = vmatpush.msra.mxu0 %v686
    %2774 = vmatpush.msra.mxu0 %v682
    %2775 = vmatpush.msra.mxu0 %v678
    %2776 = vmatpush.msra.mxu0 %v674
    %2777 = vmatpush.msra.mxu0 %v670
    %2778 = vmatpush.msra.mxu0 %v666
    %2779 = vmatmul.f32.gmra.mxu0 %v2655
    %v2780 = vpop.f32.mrf.mxu0
    %v2781 = vadd.f32 0.0, %v2780
    %2782 = vdwg.mxu0
    %2783 = vmatpush.msra.mxu0 %v727
    %2784 = vmatpush.msra.mxu0 %v723
    %2785 = vmatpush.msra.mxu0 %v719
    %2786 = vmatpush.msra.mxu0 %v715
    %2787 = vmatpush.msra.mxu0 %v711
    %2788 = vmatpush.msra.mxu0 %v707
    %2789 = vmatpush.msra.mxu0 %v703
    %2790 = vmatpush.msra.mxu0 %v699
    %2791 = vmatpush.msra.mxu0 %v695
    %2792 = vmatpush.msra.mxu0 %v691
    %2793 = vmatpush.msra.mxu0 %v687
    %2794 = vmatpush.msra.mxu0 %v683
    %2795 = vmatpush.msra.mxu0 %v679
    %2796 = vmatpush.msra.mxu0 %v675
    %2797 = vmatpush.msra.mxu0 %v671
    %2798 = vmatpush.msra.mxu0 %v667
    %2799 = vmatmul.f32.gmra.mxu0 %v2655
    %v2800 = vpop.f32.mrf.mxu0
    %v2801 = vadd.f32 0.0, %v2800
    %2802 = vdwg.mxu0
    %2803 = vmatpush.msra.mxu0 %v728
    %2804 = vmatpush.msra.mxu0 %v724
    %2805 = vmatpush.msra.mxu0 %v720
    %2806 = vmatpush.msra.mxu0 %v716
    %2807 = vmatpush.msra.mxu0 %v712
    %2808 = vmatpush.msra.mxu0 %v708
    %2809 = vmatpush.msra.mxu0 %v704
    %2810 = vmatpush.msra.mxu0 %v700
    %2811 = vmatpush.msra.mxu0 %v696
    %2812 = vmatpush.msra.mxu0 %v692
    %2813 = vmatpush.msra.mxu0 %v688
    %2814 = vmatpush.msra.mxu0 %v684
    %2815 = vmatpush.msra.mxu0 %v680
    %2816 = vmatpush.msra.mxu0 %v676
    %2817 = vmatpush.msra.mxu0 %v672
    %2818 = vmatpush.msra.mxu0 %v668
    %2819 = vmatmul.f32.gmra.mxu0 %v2655
    %v2820 = vpop.f32.mrf.mxu0
    %v2821 = vadd.f32 0.0, %v2820
    %2822 = vdwg.mxu0
    %2823 = vmatpush.msra.mxu0 %v729
    %2824 = vmatpush.msra.mxu0 %v725
    %2825 = vmatpush.msra.mxu0 %v721
    %2826 = vmatpush.msra.mxu0 %v717
    %2827 = vmatpush.msra.mxu0 %v713
    %2828 = vmatpush.msra.mxu0 %v709
    %2829 = vmatpush.msra.mxu0 %v705
    %2830 = vmatpush.msra.mxu0 %v701
    %2831 = vmatpush.msra.mxu0 %v697
    %2832 = vmatpush.msra.mxu0 %v693
    %2833 = vmatpush.msra.mxu0 %v689
    %2834 = vmatpush.msra.mxu0 %v685
    %2835 = vmatpush.msra.mxu0 %v681
    %2836 = vmatpush.msra.mxu0 %v677
    %2837 = vmatpush.msra.mxu0 %v673
    %2838 = vmatpush.msra.mxu0 %v669
    %2839 = vmatmul.f32.gmra.mxu0 %v2655
    %v2840 = vpop.f32.mrf.mxu0
    %v2841 = vadd.f32 0.0, %v2840
    %2842 = vdwg.mxu0
    %2843 = vmatpush.msra.mxu0 %v662
    %2844 = vmatpush.msra.mxu0 %v658
    %2845 = vmatpush.msra.mxu0 %v654
    %2846 = vmatpush.msra.mxu0 %v650
    %2847 = vmatpush.msra.mxu0 %v646
    %2848 = vmatpush.msra.mxu0 %v642
    %2849 = vmatpush.msra.mxu0 %v638
    %2850 = vmatpush.msra.mxu0 %v634
    %2851 = vmatpush.msra.mxu0 %v630
    %2852 = vmatpush.msra.mxu0 %v626
    %2853 = vmatpush.msra.mxu0 %v622
    %2854 = vmatpush.msra.mxu0 %v618
    %2855 = vmatpush.msra.mxu0 %v614
    %2856 = vmatpush.msra.mxu0 %v610
    %2857 = vmatpush.msra.mxu0 %v606
    %2858 = vmatpush.msra.mxu0 %v602
    %2859 = vmatmul.f32.gmra.mxu0 %v2762
    %v2860 = vpop.f32.mrf.mxu0
    %v2861 = vadd.f32 %v2781, %v2860
    %2862 = vdwg.mxu0
    %2863 = vmatpush.msra.mxu0 %v663
    %2864 = vmatpush.msra.mxu0 %v659
    %2865 = vmatpush.msra.mxu0 %v655
    %2866 = vmatpush.msra.mxu0 %v651
    %2867 = vmatpush.msra.mxu0 %v647
    %2868 = vmatpush.msra.mxu0 %v643
    %2869 = vmatpush.msra.mxu0 %v639
    %2870 = vmatpush.msra.mxu0 %v635
    %2871 = vmatpush.msra.mxu0 %v631
    %2872 = vmatpush.msra.mxu0 %v627
    %2873 = vmatpush.msra.mxu0 %v623
    %2874 = vmatpush.msra.mxu0 %v619
    %2875 = vmatpush.msra.mxu0 %v615
    %2876 = vmatpush.msra.mxu0 %v611
    %2877 = vmatpush.msra.mxu0 %v607
    %2878 = vmatpush.msra.mxu0 %v603
    %2879 = vmatmul.f32.gmra.mxu0 %v2762
    %v2880 = vpop.f32.mrf.mxu0
    %v2881 = vadd.f32 %v2801, %v2880
    %2882 = vdwg.mxu0
    %2883 = vmatpush.msra.mxu0 %v664
    %2884 = vmatpush.msra.mxu0 %v660
    %2885 = vmatpush.msra.mxu0 %v656
    %2886 = vmatpush.msra.mxu0 %v652
    %2887 = vmatpush.msra.mxu0 %v648
    %2888 = vmatpush.msra.mxu0 %v644
    %2889 = vmatpush.msra.mxu0 %v640
    %2890 = vmatpush.msra.mxu0 %v636
    %2891 = vmatpush.msra.mxu0 %v632
    %2892 = vmatpush.msra.mxu0 %v628
    %2893 = vmatpush.msra.mxu0 %v624
    %2894 = vmatpush.msra.mxu0 %v620
    %2895 = vmatpush.msra.mxu0 %v616
    %2896 = vmatpush.msra.mxu0 %v612
    %2897 = vmatpush.msra.mxu0 %v608
    %2898 = vmatpush.msra.mxu0 %v604
    %2899 = vmatmul.f32.gmra.mxu0 %v2762
    %v2900 = vpop.f32.mrf.mxu0
    %v2901 = vadd.f32 %v2821, %v2900
    %2902 = vdwg.mxu0
    %2903 = vmatpush.msra.mxu0 %v665
    %2904 = vmatpush.msra.mxu0 %v661
    %2905 = vmatpush.msra.mxu0 %v657
    %2906 = vmatpush.msra.mxu0 %v653
    %2907 = vmatpush.msra.mxu0 %v649
    %2908 = vmatpush.msra.mxu0 %v645
    %2909 = vmatpush.msra.mxu0 %v641
    %2910 = vmatpush.msra.mxu0 %v637
    %2911 = vmatpush.msra.mxu0 %v633
    %2912 = vmatpush.msra.mxu0 %v629
    %2913 = vmatpush.msra.mxu0 %v625
    %2914 = vmatpush.msra.mxu0 %v621
    %2915 = vmatpush.msra.mxu0 %v617
    %2916 = vmatpush.msra.mxu0 %v613
    %2917 = vmatpush.msra.mxu0 %v609
    %2918 = vmatpush.msra.mxu0 %v605
    %2919 = vmatmul.f32.gmra.mxu0 %v2762
    %v2920 = vpop.f32.mrf.mxu0
    %v2921 = vadd.f32 %v2841, %v2920
    %2922 = vdwg.mxu0
    %v2923 = vadd.f32 %v2861, %v892
    %v2924 = vadd.f32 %v2881, %v893
    %v2925 = vadd.f32 %v2901, %v894
    %v2926 = vadd.f32 %v2921, %v895
    %v2927 = vmul.f32 %v2923, 0.5
    %v2928 = vmul.f32 %v2924, 0.5
    %v2929 = vmul.f32 %v2925, 0.5
    %v2930 = vtanh.pop %v2927
    %v2931 = vtanh.pop %v2928
    %v2932 = vtanh.pop %v2929
    %v2933 = vmul.f32 %v2930, 0.5
    %v2934 = vmul.f32 %v2931, 0.5
    %v2935 = vmul.f32 %v2932, 0.5
    %v2936 = vadd.f32 %v2933, 0.5
    %v2937 = vadd.f32 %v2934, 0.5
    %v2938 = vadd.f32 %v2935, 0.5
    %v2939 = vtanh.pop %v2926
    %v2940 = vmul.f32 %v2937, %v2653
    %v2941 = vmul.f32 %v2936, %v2939
    %v2942 = vadd.f32 %v2940, %v2941
    %v2943 = vtanh.pop %v2942
    %v2944 = vmul.f32 %v2938, %v2943
    %2945 = vst [vmem:[#allocation2] sm:$0xff] %v2762
    %2946 = vst [vmem:[#allocation3] sm:$0xff] %v2760
    %2947 = vst [vmem:[%s427] sm:$0xff] %v2944
    %2948 = vst [vmem:[%s430] sm:$0xff] %v2942
    // Predicated region
    $region70: #{tpu_custom_call.1} parent=1 // pred_check
      %p2949 = pneg %p140
    $region71: #{tpu_custom_call.1} parent=1 // pred_check_branch
      %2951 = sbr.rel (%p2949) target = $region73
    $region72: #{tpu_custom_call.1} parent=1 // pred_region
      %v2952 = vld [vmem:[#allocation16] sm:$0xff]
      %v2953 = vld [vmem:[#allocation16 + $0x8] sm:$0xff]
      %v2954 = vld [vmem:[#allocation16 + $0x10] sm:$0xff]
      %v2955 = vld [vmem:[#allocation16 + $0x18] sm:$0xff]
      %v2956 = vld [vmem:[#allocation16 + $0x20] sm:$0xff]
      %v2957 = vld [vmem:[#allocation16 + $0x28] sm:$0xff]
      %v2958 = vld [vmem:[#allocation16 + $0x30] sm:$0xff]
      %v2959 = vld [vmem:[#allocation16 + $0x38] sm:$0xff]
      %v2960 = vld [vmem:[#allocation16 + $0x40] sm:$0xff]
      %v2961 = vld [vmem:[#allocation16 + $0x48] sm:$0xff]
      %v2962 = vld [vmem:[#allocation16 + $0x50] sm:$0xff]
      %v2963 = vld [vmem:[#allocation16 + $0x58] sm:$0xff]
      %v2964 = vld [vmem:[#allocation16 + $0x60] sm:$0xff]
      %v2965 = vld [vmem:[#allocation16 + $0x68] sm:$0xff]
      %v2966 = vld [vmem:[#allocation16 + $0x70] sm:$0xff]
      %v2967 = vld [vmem:[#allocation16 + $0x78] sm:$0xff]
      %v2968 = vld [vmem:[%s8] sm:$0x1]
      %v2970 = vperm.slane %v2968, 0
      %2972 = vmatpush.msra.mxu0 %v2967
      %2973 = vmatpush.msra.mxu0 %v2966
      %2974 = vmatpush.msra.mxu0 %v2965
      %2975 = vmatpush.msra.mxu0 %v2964
      %2976 = vmatpush.msra.mxu0 %v2963
      %2977 = vmatpush.msra.mxu0 %v2962
      %2978 = vmatpush.msra.mxu0 %v2961
      %2979 = vmatpush.msra.mxu0 %v2960
      %2980 = vmatpush.msra.mxu0 %v2959
      %2981 = vmatpush.msra.mxu0 %v2958
      %2982 = vmatpush.msra.mxu0 %v2957
      %2983 = vmatpush.msra.mxu0 %v2956
      %2984 = vmatpush.msra.mxu0 %v2955
      %2985 = vmatpush.msra.mxu0 %v2954
      %2986 = vmatpush.msra.mxu0 %v2953
      %2987 = vmatpush.msra.mxu0 %v2952
      %2988 = vmatmul.f32.gmra.mxu0 %v2944
      %v2989 = vpop.f32.mrf.mxu0
      %v2990 = vadd.f32 %v2970, %v2989
      %2991 = vdwg.mxu0
      %2992 = vst [vmem:[#allocation17] sm:$0xff] %v2990
    $region73: #{tpu_custom_call.1} parent=1 // pred_fallthru
      _
    // Predicated region
    $region74: #{tpu_custom_call.1} parent=1 // pred_check
      _
    $region75: #{tpu_custom_call.1} parent=1 // pred_check_branch
      %2994 = sbr.rel (0) target = $region77
    $region76: #{tpu_custom_call.1} parent=1 // pred_region
      %2996 = vsyncadd [#allocation7], 0
      %s2998 = sshll.u32 [#allocation17], 4
      %s2999 = int_to_ptr.vmem [resolvable:$true] %s2998
      %s3000 = sshll.u32 %s9, 4
      %s3001 = int_to_ptr.hbm [resolvable:$true] %s3000
      %3003 = dma.vmem_to_hbm [thread:$0]  %s2999, 128, %s3001, [#allocation7]
    $region77: #{tpu_custom_call.1} parent=1 // pred_fallthru
      _
    // Predicated region
    $region78: #{tpu_custom_call.1} parent=1 // pred_check
      _
    $region79: #{tpu_custom_call.1} parent=1 // pred_check_branch
      %3005 = sbr.rel (0) target = $region81
    $region80: #{tpu_custom_call.1} parent=1 // pred_region
      %3007 = dma.done [#allocation7], 128
    $region81: #{tpu_custom_call.1} parent=1 // pred_fallthru
      _
    %3008 = vsyncpa [#allocation6], 1
    %3009 = vsyncpa [#allocation9], 1
    %3010 = vsyncpa [#allocation12], 1
    %3011 = vsyncpa [#allocation15], 1
    %3012 = vsyncpa [#allocation7], 1

</llo_original>
